<compile_context>
chip_gen: v7x
topology: tpu7x:2x2x1
jax: 0.10.0
libtpu: 0.0.40
codegen_flags: <defaults>
</compile_context>

<pallas_src>
import numpy as np

import jax
import jax.numpy as jnp
from jax.experimental import pallas as pl
from jax.experimental.pallas import tpu as pltpu


def _make_crnn_kernel(T, B, D):
    """Builds the fused 4xGRU + combine + BatchNorm1d + PReLU kernel for static T,B,D."""
    G = 4 * D          # width of one gate group across the 4 GRUs (128 lanes for D=32)

    def kernel(x_ref, w_in_ref, b_in_ref, w_hi_ref, w_lo_ref, b_hn_ref,
               params_ref, out_ref, hist_ref):
        # ---- prologue: batched input projection for all steps (off the h chain) ----
        # b_in already contains b_ih (all gates) + b_hh (r/z gates) folded together.
        gx_all = (jnp.dot(x_ref[...], w_in_ref[...],
                          precision=jax.lax.Precision.HIGHEST,
                          preferred_element_type=jnp.float32)
                  + b_in_ref[...])                                   # (T*B, 12D)

        w_hi = w_hi_ref[...]                                         # (4D, 12D) bf16
        w_lo = w_lo_ref[...]                                         # (4D, 12D) bf16
        # Pre-broadcast the n-gate hidden bias once (no per-step broadcast_in_dim).
        b_hn = jnp.broadcast_to(b_hn_ref[...], (B, G))               # (B, 4D)

        # ---- serial recurrence: only h@W_hh + gate math on the critical path ----
        h = jnp.zeros((B, G), jnp.float32)        # [h_rr | h_ri | h_ir | h_ii]
        for t in range(T):                        # T is static -> unrolled
            # bf16_3x split matmul: single-pass MXU pushes, ~f32 accuracy.
            h_hi = h.astype(jnp.bfloat16)
            h_lo = (h - h_hi.astype(jnp.float32)).astype(jnp.bfloat16)
            gh = (jnp.dot(h_hi, w_hi, preferred_element_type=jnp.float32)
                  + jnp.dot(h_hi, w_lo, preferred_element_type=jnp.float32)
                  + jnp.dot(h_lo, w_hi, preferred_element_type=jnp.float32))

            gx = gx_all[t * B:(t + 1) * B]                           # (B, 12D) static
            rz = jax.nn.sigmoid(gx[:, :2 * G] + gh[:, :2 * G])       # r and z together
            r = rz[:, :G]
            z = rz[:, G:]
            # PyTorch GRU: b_hn stays inside the r*(.) term.
            n = jnp.tanh(gx[:, 2 * G:] + r * (gh[:, 2 * G:] + b_hn))
            h = (1.0 - z) * n + z * h

            # lane-dense (B, 128) row store of the full hidden state
            hist_ref[t * B:(t + 1) * B, :] = h

        # ---- epilogue: combine + BatchNorm1d (batch stats) + PReLU on the slab ----
        hist = hist_ref[...]                                         # (T*B, 4D)
        p = params_ref[...]                                          # (3, 2D)
        inv_n = jnp.float32(1.0 / (T * B))

        def bn_prelu(y, col):
            gamma = p[0:1, col:col + D]
            beta = p[1:2, col:col + D]
            alpha = p[2:3, col:col + D]
            mean = jnp.sum(y, axis=0, keepdims=True) * inv_n
            var = jnp.sum(y * y, axis=0, keepdims=True) * inv_n - mean * mean
            scale = gamma * jax.lax.rsqrt(var + 1e-5)
            shift = beta - mean * scale
            yn = y * scale + shift                                   # folded affine
            return jnp.where(yn >= 0.0, yn, alpha * yn)              # PReLU

        re = hist[:, 0:D] - hist[:, 3 * D:4 * D]                     # h_rr - h_ii
        im = hist[:, D:2 * D] + hist[:, 2 * D:3 * D]                 # h_ri + h_ir
        out_ref[:, 0:D] = bn_prelu(re, 0)
        out_ref[:, D:2 * D] = bn_prelu(im, D)

    return kernel


def _pack_gru_weights(gru_params, D):
    """Pack the 4 GRUs into gate-grouped, lane-dense weight blocks.

    Column layout (width 12*D): [r_rr r_ri r_ir r_ii | z_... | n_...], each D wide.
    w_in rows [0:D] carry the real-input weights (GRUs rr, ri); rows [D:2D] the
    imag-input weights (ir, ii).  w_hh is block-diagonal in the packed hidden state.
    Returns:
      w_in (2D,12D) f32, b_in (1,12D) f32 (= b_ih all gates + b_hh r/z gates folded),
      w_hh_hi / w_hh_lo (4D,12D) bf16 hi/lo split, b_hn (1,4D) f32 (n-gate hidden bias).
    """
    w_in = np.zeros((2 * D, 12 * D), np.float32)
    w_hh = np.zeros((4 * D, 12 * D), np.float32)
    b_in = np.zeros((12 * D,), np.float32)
    b_hh = np.zeros((12 * D,), np.float32)
    in_row = (0, 0, 1, 1)                       # rr, ri read real; ir, ii read imag
    for g, name in enumerate(("rr", "ri", "ir", "ii")):
        wih, whh, bih, bhh = (np.asarray(a, np.float32) for a in gru_params[name])
        for gate in range(3):                   # PyTorch row order: r, z, n
            col = (4 * gate + g) * D
            w_in[in_row[g] * D:(in_row[g] + 1) * D, col:col + D] = \
                wih[gate * D:(gate + 1) * D, :].T
            w_hh[g * D:(g + 1) * D, col:col + D] = whh[gate * D:(gate + 1) * D, :].T
            b_in[col:col + D] = bih[gate * D:(gate + 1) * D]
            b_hh[col:col + D] = bhh[gate * D:(gate + 1) * D]

    # Fold r/z hidden biases into the precomputed input projection bias; only the
    # n-gate hidden bias must stay inside the r*(.) term (PyTorch GRU semantics).
    b_in_fold = b_in.copy()
    b_in_fold[:8 * D] += b_hh[:8 * D]
    b_hn = b_hh[8 * D:]

    w_hh_j = jnp.asarray(w_hh)
    w_hh_hi = w_hh_j.astype(jnp.bfloat16)
    w_hh_lo = (w_hh_j - w_hh_hi.astype(jnp.float32)).astype(jnp.bfloat16)

    return (jnp.asarray(w_in), jnp.asarray(b_in_fold).reshape(1, -1),
            w_hh_hi, w_hh_lo, jnp.asarray(b_hn).reshape(1, -1))


@jax.jit
def crnn_forward(x, w_in, b_in, w_hh_hi, w_hh_lo, b_hn, params):
    B, C, F, T, _ = x.shape
    D = C * F

    # torch: permute(4,0,3,1,2) + reshape -> (2, B, T, C*F); kernel wants time-major
    # rows (t-major, b-minor) with real/imag concatenated along lanes: (T*B, 2D).
    xp = jnp.transpose(x, (4, 0, 3, 1, 2)).reshape(2, B, T, D).astype(jnp.float32)
    x_cat = jnp.concatenate(
        [jnp.transpose(xp[0], (1, 0, 2)), jnp.transpose(xp[1], (1, 0, 2))],
        axis=-1).reshape(T * B, 2 * D)

    flops = (2 * (T * B) * (2 * D) * (12 * D)              # batched input projection
             + T * 3 * 2 * B * (4 * D) * (12 * D))         # 3-term split recurrence
    bytes_acc = (4 * (x_cat.size + w_in.size + b_in.size + b_hn.size + params.size
                      + T * B * 2 * D)
                 + 2 * (w_hh_hi.size + w_hh_lo.size))

    out = pl.pallas_call(
        _make_crnn_kernel(T, B, D),
        out_shape=jax.ShapeDtypeStruct((T * B, 2 * D), jnp.float32),
        grid=(1,),
        in_specs=[
            pl.BlockSpec((T * B, 2 * D), lambda i: (0, 0)),      # x (time-major)
            pl.BlockSpec((2 * D, 12 * D), lambda i: (0, 0)),     # w_in
            pl.BlockSpec((1, 12 * D), lambda i: (0, 0)),         # b_in (folded)
            pl.BlockSpec((4 * D, 12 * D), lambda i: (0, 0)),     # w_hh hi (bf16)
            pl.BlockSpec((4 * D, 12 * D), lambda i: (0, 0)),     # w_hh lo (bf16)
            pl.BlockSpec((1, 4 * D), lambda i: (0, 0)),          # b_hn
            pl.BlockSpec((3, 2 * D), lambda i: (0, 0)),          # gamma/beta/alpha
        ],
        out_specs=pl.BlockSpec((T * B, 2 * D), lambda i: (0, 0)),
        scratch_shapes=[pltpu.VMEM((T * B, 4 * D), jnp.float32)],  # h history
        compiler_params=pltpu.CompilerParams(
            dimension_semantics=("arbitrary",)),
        cost_estimate=pl.CostEstimate(
            flops=flops, transcendentals=T * B * 12 * D, bytes_accessed=bytes_acc),
    )(x_cat, w_in, b_in, w_hh_hi, w_hh_lo, b_hn, params)

    # (T*B, 2D) -> torch layout (B, D, T) per re/im -> stack/permute/reshape as module.
    out = out.reshape(T, B, 2 * D)
    re = jnp.transpose(out[:, :, :D], (1, 2, 0))                 # (B, D, T)
    im = jnp.transpose(out[:, :, D:], (1, 2, 0))
    st = jnp.stack([re, im], axis=-1)                            # (B, D, T, 2)
    return jnp.transpose(st, (1, 3, 2, 0)).reshape(B, C, F, T, 2)


# ---------------- plain-JAX reference (mirrors the PyTorch module) ----------------

def _gru_sequence(x, w_ih, w_hh, b_ih, b_hh):
    """nn.GRU(dim, dim, batch_first=True), h0=0, returning all hidden states."""
    hp = jax.lax.Precision.HIGHEST

    def step(h, x_t):
        gi = jnp.dot(x_t, w_ih.T, precision=hp) + b_ih
        gh = jnp.dot(h, w_hh.T, precision=hp) + b_hh
        i_r, i_z, i_n = jnp.split(gi, 3, axis=-1)
        h_r, h_z, h_n = jnp.split(gh, 3, axis=-1)
        r = jax.nn.sigmoid(i_r + h_r)
        z = jax.nn.sigmoid(i_z + h_z)
        n = jnp.tanh(i_n + r * h_n)
        h_new = (1.0 - z) * n + z * h
        return h_new, h_new

    h0 = jnp.zeros((x.shape[0], w_hh.shape[1]), jnp.float32)
    _, ys = jax.lax.scan(step, h0, jnp.swapaxes(x, 0, 1))
    return jnp.swapaxes(ys, 0, 1)                                    # (B, T, D)


def _reference_forward(x, gru_params, bn_params):
    gamma_re, beta_re, a_re, gamma_im, beta_im, a_im = bn_params
    B, C, F, T, _ = x.shape
    D = C * F
    xp = jnp.transpose(x, (4, 0, 3, 1, 2)).reshape(2, B, T, D).astype(jnp.float32)
    rr = _gru_sequence(xp[0], *gru_params["rr"])
    ri = _gru_sequence(xp[0], *gru_params["ri"])
    ir = _gru_sequence(xp[1], *gru_params["ir"])
    ii = _gru_sequence(xp[1], *gru_params["ii"])
    re = rr - ii
    im = ri + ir

    def bn_prelu(y, gamma, beta, alpha):
        yc = jnp.transpose(y, (0, 2, 1))                             # (B, D, T)
        mean = yc.mean(axis=(0, 2), keepdims=True)
        var = ((yc - mean) ** 2).mean(axis=(0, 2), keepdims=True)
        z = gamma[None, :, None] * (yc - mean) / jnp.sqrt(var + 1e-5) \
            + beta[None, :, None]
        return jnp.where(z >= 0, z, alpha * z)

    re_n = bn_prelu(re, gamma_re, beta_re, a_re)
    im_n = bn_prelu(im, gamma_im, beta_im, a_im)
    st = jnp.stack([re_n, im_n], axis=-1)                            # (B, D, T, 2)
    return jnp.transpose(st, (1, 3, 2, 0)).reshape(B, C, F, T, 2)


if __name__ == "__main__":
    # cRNN(dim=C*F, style='GRU') at small shapes: B=2, C=4, F=8, T=8 -> dim=32.
    B, C, F, T = 2, 4, 8, 8
    D = C * F

    key = jax.random.PRNGKey(0)
    keys = jax.random.split(key, 16)
    x = jax.random.normal(keys[0], (B, C, F, T, 2), dtype=jnp.float32)

    scale = 1.0 / np.sqrt(D)                    # PyTorch default GRU init range
    gru_params = {}
    for i, name in enumerate(("rr", "ri", "ir", "ii")):
        k = jax.random.split(keys[1 + i], 4)
        gru_params[name] = (
            jax.random.uniform(k[0], (3 * D, D), jnp.float32, -scale, scale),  # W_ih
            jax.random.uniform(k[1], (3 * D, D), jnp.float32, -scale, scale),  # W_hh
            jax.random.uniform(k[2], (3 * D,), jnp.float32, -scale, scale),    # b_ih
            jax.random.uniform(k[3], (3 * D,), jnp.float32, -scale, scale),    # b_hh
        )

    gamma_re = 1.0 + 0.1 * jax.random.normal(keys[10], (D,), jnp.float32)
    beta_re = 0.1 * jax.random.normal(keys[11], (D,), jnp.float32)
    gamma_im = 1.0 + 0.1 * jax.random.normal(keys[12], (D,), jnp.float32)
    beta_im = 0.1 * jax.random.normal(keys[13], (D,), jnp.float32)
    a_re = a_im = 0.25                          # nn.PReLU() default single weight

    # Packed per-channel BN/PReLU params for the kernel: rows = gamma, beta, alpha;
    # columns = [re-channels | im-channels]  -> (3, 2D).
    params = jnp.stack([
        jnp.concatenate([gamma_re, gamma_im]),
        jnp.concatenate([beta_re, beta_im]),
        jnp.concatenate([jnp.full((D,), a_re, jnp.float32),
                         jnp.full((D,), a_im, jnp.float32)]),
    ], axis=0)

    w_in, b_in, w_hh_hi, w_hh_lo, b_hn = _pack_gru_weights(gru_params, D)

    out = crnn_forward(x, w_in, b_in, w_hh_hi, w_hh_lo, b_hn, params)
    out = jax.block_until_ready(out)

    ref = _reference_forward(x, gru_params,
                             (gamma_re, beta_re, a_re, gamma_im, beta_im, a_im))
    assert out.shape == (B, C, F, T, 2), out.shape
    max_err = float(jnp.max(jnp.abs(out - ref)))
    assert jnp.allclose(out, ref, atol=2e-3, rtol=2e-3), max_err

    print("KERNEL_OK")
</pallas_src>

<mosaic_0001>
module attributes {stable_mosaic.version = 11 : i64} {
  func.func @kernel(%arg0: i32, %arg1: memref<16x64xf32, #tpu.memory_space<vmem>>, %arg2: memref<64x384xf32, #tpu.memory_space<vmem>>, %arg3: memref<1x384xf32, #tpu.memory_space<vmem>>, %arg4: memref<128x384xbf16, #tpu.memory_space<vmem>>, %arg5: memref<128x384xbf16, #tpu.memory_space<vmem>>, %arg6: memref<1x128xf32, #tpu.memory_space<vmem>>, %arg7: memref<3x64xf32, #tpu.memory_space<vmem>>, %arg8: memref<16x64xf32, #tpu.memory_space<vmem>>, %arg9: memref<16x128xf32, #tpu.memory_space<vmem>>) attributes {dimension_semantics = [#tpu.dimension_semantics<arbitrary>], iteration_bounds = array<i64: 1>, scalar_prefetch = 0 : i64, scratch_operands = 1 : i64, tpu.core_type = #tpu.core_type<tc>, window_params = [{pipeline_mode = #tpu.pipeline_mode<synchronous>, transform_indices = @transform_0, window_bounds = array<i64: 16, 64>}, {pipeline_mode = #tpu.pipeline_mode<synchronous>, transform_indices = @transform_1, window_bounds = array<i64: 64, 384>}, {pipeline_mode = #tpu.pipeline_mode<synchronous>, transform_indices = @transform_2, window_bounds = array<i64: 1, 384>}, {pipeline_mode = #tpu.pipeline_mode<synchronous>, transform_indices = @transform_3, window_bounds = array<i64: 128, 384>}, {pipeline_mode = #tpu.pipeline_mode<synchronous>, transform_indices = @transform_4, window_bounds = array<i64: 128, 384>}, {pipeline_mode = #tpu.pipeline_mode<synchronous>, transform_indices = @transform_5, window_bounds = array<i64: 1, 128>}, {pipeline_mode = #tpu.pipeline_mode<synchronous>, transform_indices = @transform_6, window_bounds = array<i64: 3, 64>}, {pipeline_mode = #tpu.pipeline_mode<synchronous>, transform_indices = @transform_7, window_bounds = array<i64: 16, 64>}]} {
    %c0 = arith.constant 0 : index
    %c0_0 = arith.constant 0 : index
    %0 = vector.load %arg1[%c0, %c0_0] : memref<16x64xf32, #tpu.memory_space<vmem>>, vector<16x64xf32>
    %c0_1 = arith.constant 0 : index
    %c0_2 = arith.constant 0 : index
    %1 = vector.load %arg2[%c0_1, %c0_2] : memref<64x384xf32, #tpu.memory_space<vmem>>, vector<64x384xf32>
    %cst = arith.constant dense<0.000000e+00> : vector<16x384xf32>
    %2 = tpu.matmul %0, %1, %cst {dimension_numbers = #tpu.dot_dimension_numbers<[1], [0], [0], [1], [0, 0, 1, 1], [], []>, precision = #tpu.contract_precision<fp32>} : vector<16x64xf32>, vector<64x384xf32>, vector<16x384xf32> -> vector<16x384xf32>
    %c0_3 = arith.constant 0 : index
    %c0_4 = arith.constant 0 : index
    %3 = vector.load %arg3[%c0_3, %c0_4] : memref<1x384xf32, #tpu.memory_space<vmem>>, vector<1x384xf32>
    %4 = vector.broadcast %3 : vector<1x384xf32> to vector<16x384xf32>
    %5 = arith.addf %2, %4 : vector<16x384xf32>
    %c0_5 = arith.constant 0 : index
    %c0_6 = arith.constant 0 : index
    %6 = vector.load %arg4[%c0_5, %c0_6] : memref<128x384xbf16, #tpu.memory_space<vmem>>, vector<128x384xbf16>
    %c0_7 = arith.constant 0 : index
    %c0_8 = arith.constant 0 : index
    %7 = vector.load %arg5[%c0_7, %c0_8] : memref<128x384xbf16, #tpu.memory_space<vmem>>, vector<128x384xbf16>
    %c0_9 = arith.constant 0 : index
    %c0_10 = arith.constant 0 : index
    %8 = vector.load %arg6[%c0_9, %c0_10] : memref<1x128xf32, #tpu.memory_space<vmem>>, vector<1x128xf32>
    %9 = vector.shape_cast %8 : vector<1x128xf32> to vector<1x128xf32>
    %10 = vector.broadcast %9 : vector<1x128xf32> to vector<2x128xf32>
    %cst_11 = arith.constant 0.000000e+00 : f32
    %11 = vector.broadcast %cst_11 : f32 to vector<2x128xf32>
    %12 = arith.truncf %11 : vector<2x128xf32> to vector<2x128xbf16>
    %13 = arith.extf %12 : vector<2x128xbf16> to vector<2x128xf32>
    %14 = arith.subf %11, %13 : vector<2x128xf32>
    %15 = arith.truncf %14 : vector<2x128xf32> to vector<2x128xbf16>
    %cst_12 = arith.constant dense<0.000000e+00> : vector<2x384xf32>
    %16 = tpu.matmul %12, %6, %cst_12 {dimension_numbers = #tpu.dot_dimension_numbers<[1], [0], [0], [1], [0, 0, 1, 1], [], []>} : vector<2x128xbf16>, vector<128x384xbf16>, vector<2x384xf32> -> vector<2x384xf32>
    %cst_13 = arith.constant dense<0.000000e+00> : vector<2x384xf32>
    %17 = tpu.matmul %12, %7, %cst_13 {dimension_numbers = #tpu.dot_dimension_numbers<[1], [0], [0], [1], [0, 0, 1, 1], [], []>} : vector<2x128xbf16>, vector<128x384xbf16>, vector<2x384xf32> -> vector<2x384xf32>
    %18 = arith.addf %16, %17 : vector<2x384xf32>
    %cst_14 = arith.constant dense<0.000000e+00> : vector<2x384xf32>
    %19 = tpu.matmul %15, %6, %cst_14 {dimension_numbers = #tpu.dot_dimension_numbers<[1], [0], [0], [1], [0, 0, 1, 1], [], []>} : vector<2x128xbf16>, vector<128x384xbf16>, vector<2x384xf32> -> vector<2x384xf32>
    %20 = arith.addf %18, %19 : vector<2x384xf32>
    %21 = vector.extract_strided_slice %5 {offsets = [0, 0], sizes = [2, 384], strides = [1, 1]} : vector<16x384xf32> to vector<2x384xf32>
    %22 = vector.extract_strided_slice %21 {offsets = [0, 0], sizes = [2, 256], strides = [1, 1]} : vector<2x384xf32> to vector<2x256xf32>
    %23 = vector.extract_strided_slice %20 {offsets = [0, 0], sizes = [2, 256], strides = [1, 1]} : vector<2x384xf32> to vector<2x256xf32>
    %24 = arith.addf %22, %23 : vector<2x256xf32>
    %25 = arith.negf %24 : vector<2x256xf32>
    %26 = math.exp %25 : vector<2x256xf32>
    %cst_15 = arith.constant 1.000000e+00 : f32
    %27 = vector.broadcast %cst_15 : f32 to vector<2x256xf32>
    %28 = arith.addf %27, %26 : vector<2x256xf32>
    %29 = arith.divf %27, %28 : vector<2x256xf32>
    %30 = vector.extract_strided_slice %29 {offsets = [0, 0], sizes = [2, 128], strides = [1, 1]} : vector<2x256xf32> to vector<2x128xf32>
    %31 = vector.extract_strided_slice %29 {offsets = [0, 128], sizes = [2, 128], strides = [1, 1]} : vector<2x256xf32> to vector<2x128xf32>
    %32 = vector.extract_strided_slice %21 {offsets = [0, 256], sizes = [2, 128], strides = [1, 1]} : vector<2x384xf32> to vector<2x128xf32>
    %33 = vector.extract_strided_slice %20 {offsets = [0, 256], sizes = [2, 128], strides = [1, 1]} : vector<2x384xf32> to vector<2x128xf32>
    %34 = arith.addf %33, %10 : vector<2x128xf32>
    %35 = arith.mulf %30, %34 : vector<2x128xf32>
    %36 = arith.addf %32, %35 : vector<2x128xf32>
    %37 = math.tanh %36 : vector<2x128xf32>
    %cst_16 = arith.constant 1.000000e+00 : f32
    %38 = vector.broadcast %cst_16 : f32 to vector<2x128xf32>
    %39 = arith.subf %38, %31 : vector<2x128xf32>
    %40 = arith.mulf %39, %37 : vector<2x128xf32>
    %41 = arith.mulf %31, %11 : vector<2x128xf32>
    %42 = arith.addf %40, %41 : vector<2x128xf32>
    %c0_17 = arith.constant 0 : index
    %c0_18 = arith.constant 0 : index
    %43 = vector.load %arg9[%c0_17, %c0_18] : memref<16x128xf32, #tpu.memory_space<vmem>>, vector<2x128xf32>
    tpu.vector_store %arg9[%c0_17, %c0_18], %42 {strides = array<i32>} : memref<16x128xf32, #tpu.memory_space<vmem>>, vector<2x128xf32>,
    %44 = arith.truncf %42 : vector<2x128xf32> to vector<2x128xbf16>
    %45 = arith.extf %44 : vector<2x128xbf16> to vector<2x128xf32>
    %46 = arith.subf %42, %45 : vector<2x128xf32>
    %47 = arith.truncf %46 : vector<2x128xf32> to vector<2x128xbf16>
    %cst_19 = arith.constant dense<0.000000e+00> : vector<2x384xf32>
    %48 = tpu.matmul %44, %6, %cst_19 {dimension_numbers = #tpu.dot_dimension_numbers<[1], [0], [0], [1], [0, 0, 1, 1], [], []>} : vector<2x128xbf16>, vector<128x384xbf16>, vector<2x384xf32> -> vector<2x384xf32>
    %cst_20 = arith.constant dense<0.000000e+00> : vector<2x384xf32>
    %49 = tpu.matmul %44, %7, %cst_20 {dimension_numbers = #tpu.dot_dimension_numbers<[1], [0], [0], [1], [0, 0, 1, 1], [], []>} : vector<2x128xbf16>, vector<128x384xbf16>, vector<2x384xf32> -> vector<2x384xf32>
    %50 = arith.addf %48, %49 : vector<2x384xf32>
    %cst_21 = arith.constant dense<0.000000e+00> : vector<2x384xf32>
    %51 = tpu.matmul %47, %6, %cst_21 {dimension_numbers = #tpu.dot_dimension_numbers<[1], [0], [0], [1], [0, 0, 1, 1], [], []>} : vector<2x128xbf16>, vector<128x384xbf16>, vector<2x384xf32> -> vector<2x384xf32>
    %52 = arith.addf %50, %51 : vector<2x384xf32>
    %53 = vector.extract_strided_slice %5 {offsets = [2, 0], sizes = [2, 384], strides = [1, 1]} : vector<16x384xf32> to vector<2x384xf32>
    %54 = vector.extract_strided_slice %53 {offsets = [0, 0], sizes = [2, 256], strides = [1, 1]} : vector<2x384xf32> to vector<2x256xf32>
    %55 = vector.extract_strided_slice %52 {offsets = [0, 0], sizes = [2, 256], strides = [1, 1]} : vector<2x384xf32> to vector<2x256xf32>
    %56 = arith.addf %54, %55 : vector<2x256xf32>
    %57 = arith.negf %56 : vector<2x256xf32>
    %58 = math.exp %57 : vector<2x256xf32>
    %cst_22 = arith.constant 1.000000e+00 : f32
    %59 = vector.broadcast %cst_22 : f32 to vector<2x256xf32>
    %60 = arith.addf %59, %58 : vector<2x256xf32>
    %61 = arith.divf %59, %60 : vector<2x256xf32>
    %62 = vector.extract_strided_slice %61 {offsets = [0, 0], sizes = [2, 128], strides = [1, 1]} : vector<2x256xf32> to vector<2x128xf32>
    %63 = vector.extract_strided_slice %61 {offsets = [0, 128], sizes = [2, 128], strides = [1, 1]} : vector<2x256xf32> to vector<2x128xf32>
    %64 = vector.extract_strided_slice %53 {offsets = [0, 256], sizes = [2, 128], strides = [1, 1]} : vector<2x384xf32> to vector<2x128xf32>
    %65 = vector.extract_strided_slice %52 {offsets = [0, 256], sizes = [2, 128], strides = [1, 1]} : vector<2x384xf32> to vector<2x128xf32>
    %66 = arith.addf %65, %10 : vector<2x128xf32>
    %67 = arith.mulf %62, %66 : vector<2x128xf32>
    %68 = arith.addf %64, %67 : vector<2x128xf32>
    %69 = math.tanh %68 : vector<2x128xf32>
    %cst_23 = arith.constant 1.000000e+00 : f32
    %70 = vector.broadcast %cst_23 : f32 to vector<2x128xf32>
    %71 = arith.subf %70, %63 : vector<2x128xf32>
    %72 = arith.mulf %71, %69 : vector<2x128xf32>
    %73 = arith.mulf %63, %42 : vector<2x128xf32>
    %74 = arith.addf %72, %73 : vector<2x128xf32>
    %c2 = arith.constant 2 : index
    %c0_24 = arith.constant 0 : index
    %75 = vector.load %arg9[%c2, %c0_24] : memref<16x128xf32, #tpu.memory_space<vmem>>, vector<2x128xf32>
    tpu.vector_store %arg9[%c2, %c0_24], %74 {strides = array<i32>} : memref<16x128xf32, #tpu.memory_space<vmem>>, vector<2x128xf32>,
    %76 = arith.truncf %74 : vector<2x128xf32> to vector<2x128xbf16>
    %77 = arith.extf %76 : vector<2x128xbf16> to vector<2x128xf32>
    %78 = arith.subf %74, %77 : vector<2x128xf32>
    %79 = arith.truncf %78 : vector<2x128xf32> to vector<2x128xbf16>
    %cst_25 = arith.constant dense<0.000000e+00> : vector<2x384xf32>
    %80 = tpu.matmul %76, %6, %cst_25 {dimension_numbers = #tpu.dot_dimension_numbers<[1], [0], [0], [1], [0, 0, 1, 1], [], []>} : vector<2x128xbf16>, vector<128x384xbf16>, vector<2x384xf32> -> vector<2x384xf32>
    %cst_26 = arith.constant dense<0.000000e+00> : vector<2x384xf32>
    %81 = tpu.matmul %76, %7, %cst_26 {dimension_numbers = #tpu.dot_dimension_numbers<[1], [0], [0], [1], [0, 0, 1, 1], [], []>} : vector<2x128xbf16>, vector<128x384xbf16>, vector<2x384xf32> -> vector<2x384xf32>
    %82 = arith.addf %80, %81 : vector<2x384xf32>
    %cst_27 = arith.constant dense<0.000000e+00> : vector<2x384xf32>
    %83 = tpu.matmul %79, %6, %cst_27 {dimension_numbers = #tpu.dot_dimension_numbers<[1], [0], [0], [1], [0, 0, 1, 1], [], []>} : vector<2x128xbf16>, vector<128x384xbf16>, vector<2x384xf32> -> vector<2x384xf32>
    %84 = arith.addf %82, %83 : vector<2x384xf32>
    %85 = vector.extract_strided_slice %5 {offsets = [4, 0], sizes = [2, 384], strides = [1, 1]} : vector<16x384xf32> to vector<2x384xf32>
    %86 = vector.extract_strided_slice %85 {offsets = [0, 0], sizes = [2, 256], strides = [1, 1]} : vector<2x384xf32> to vector<2x256xf32>
    %87 = vector.extract_strided_slice %84 {offsets = [0, 0], sizes = [2, 256], strides = [1, 1]} : vector<2x384xf32> to vector<2x256xf32>
    %88 = arith.addf %86, %87 : vector<2x256xf32>
    %89 = arith.negf %88 : vector<2x256xf32>
    %90 = math.exp %89 : vector<2x256xf32>
    %cst_28 = arith.constant 1.000000e+00 : f32
    %91 = vector.broadcast %cst_28 : f32 to vector<2x256xf32>
    %92 = arith.addf %91, %90 : vector<2x256xf32>
    %93 = arith.divf %91, %92 : vector<2x256xf32>
    %94 = vector.extract_strided_slice %93 {offsets = [0, 0], sizes = [2, 128], strides = [1, 1]} : vector<2x256xf32> to vector<2x128xf32>
    %95 = vector.extract_strided_slice %93 {offsets = [0, 128], sizes = [2, 128], strides = [1, 1]} : vector<2x256xf32> to vector<2x128xf32>
    %96 = vector.extract_strided_slice %85 {offsets = [0, 256], sizes = [2, 128], strides = [1, 1]} : vector<2x384xf32> to vector<2x128xf32>
    %97 = vector.extract_strided_slice %84 {offsets = [0, 256], sizes = [2, 128], strides = [1, 1]} : vector<2x384xf32> to vector<2x128xf32>
    %98 = arith.addf %97, %10 : vector<2x128xf32>
    %99 = arith.mulf %94, %98 : vector<2x128xf32>
    %100 = arith.addf %96, %99 : vector<2x128xf32>
    %101 = math.tanh %100 : vector<2x128xf32>
    %cst_29 = arith.constant 1.000000e+00 : f32
    %102 = vector.broadcast %cst_29 : f32 to vector<2x128xf32>
    %103 = arith.subf %102, %95 : vector<2x128xf32>
    %104 = arith.mulf %103, %101 : vector<2x128xf32>
    %105 = arith.mulf %95, %74 : vector<2x128xf32>
    %106 = arith.addf %104, %105 : vector<2x128xf32>
    %c4 = arith.constant 4 : index
    %c0_30 = arith.constant 0 : index
    %107 = vector.load %arg9[%c4, %c0_30] : memref<16x128xf32, #tpu.memory_space<vmem>>, vector<2x128xf32>
    tpu.vector_store %arg9[%c4, %c0_30], %106 {strides = array<i32>} : memref<16x128xf32, #tpu.memory_space<vmem>>, vector<2x128xf32>,
    %108 = arith.truncf %106 : vector<2x128xf32> to vector<2x128xbf16>
    %109 = arith.extf %108 : vector<2x128xbf16> to vector<2x128xf32>
    %110 = arith.subf %106, %109 : vector<2x128xf32>
    %111 = arith.truncf %110 : vector<2x128xf32> to vector<2x128xbf16>
    %cst_31 = arith.constant dense<0.000000e+00> : vector<2x384xf32>
    %112 = tpu.matmul %108, %6, %cst_31 {dimension_numbers = #tpu.dot_dimension_numbers<[1], [0], [0], [1], [0, 0, 1, 1], [], []>} : vector<2x128xbf16>, vector<128x384xbf16>, vector<2x384xf32> -> vector<2x384xf32>
    %cst_32 = arith.constant dense<0.000000e+00> : vector<2x384xf32>
    %113 = tpu.matmul %108, %7, %cst_32 {dimension_numbers = #tpu.dot_dimension_numbers<[1], [0], [0], [1], [0, 0, 1, 1], [], []>} : vector<2x128xbf16>, vector<128x384xbf16>, vector<2x384xf32> -> vector<2x384xf32>
    %114 = arith.addf %112, %113 : vector<2x384xf32>
    %cst_33 = arith.constant dense<0.000000e+00> : vector<2x384xf32>
    %115 = tpu.matmul %111, %6, %cst_33 {dimension_numbers = #tpu.dot_dimension_numbers<[1], [0], [0], [1], [0, 0, 1, 1], [], []>} : vector<2x128xbf16>, vector<128x384xbf16>, vector<2x384xf32> -> vector<2x384xf32>
    %116 = arith.addf %114, %115 : vector<2x384xf32>
    %117 = vector.extract_strided_slice %5 {offsets = [6, 0], sizes = [2, 384], strides = [1, 1]} : vector<16x384xf32> to vector<2x384xf32>
    %118 = vector.extract_strided_slice %117 {offsets = [0, 0], sizes = [2, 256], strides = [1, 1]} : vector<2x384xf32> to vector<2x256xf32>
    %119 = vector.extract_strided_slice %116 {offsets = [0, 0], sizes = [2, 256], strides = [1, 1]} : vector<2x384xf32> to vector<2x256xf32>
    %120 = arith.addf %118, %119 : vector<2x256xf32>
    %121 = arith.negf %120 : vector<2x256xf32>
    %122 = math.exp %121 : vector<2x256xf32>
    %cst_34 = arith.constant 1.000000e+00 : f32
    %123 = vector.broadcast %cst_34 : f32 to vector<2x256xf32>
    %124 = arith.addf %123, %122 : vector<2x256xf32>
    %125 = arith.divf %123, %124 : vector<2x256xf32>
    %126 = vector.extract_strided_slice %125 {offsets = [0, 0], sizes = [2, 128], strides = [1, 1]} : vector<2x256xf32> to vector<2x128xf32>
    %127 = vector.extract_strided_slice %125 {offsets = [0, 128], sizes = [2, 128], strides = [1, 1]} : vector<2x256xf32> to vector<2x128xf32>
    %128 = vector.extract_strided_slice %117 {offsets = [0, 256], sizes = [2, 128], strides = [1, 1]} : vector<2x384xf32> to vector<2x128xf32>
    %129 = vector.extract_strided_slice %116 {offsets = [0, 256], sizes = [2, 128], strides = [1, 1]} : vector<2x384xf32> to vector<2x128xf32>
    %130 = arith.addf %129, %10 : vector<2x128xf32>
    %131 = arith.mulf %126, %130 : vector<2x128xf32>
    %132 = arith.addf %128, %131 : vector<2x128xf32>
    %133 = math.tanh %132 : vector<2x128xf32>
    %cst_35 = arith.constant 1.000000e+00 : f32
    %134 = vector.broadcast %cst_35 : f32 to vector<2x128xf32>
    %135 = arith.subf %134, %127 : vector<2x128xf32>
    %136 = arith.mulf %135, %133 : vector<2x128xf32>
    %137 = arith.mulf %127, %106 : vector<2x128xf32>
    %138 = arith.addf %136, %137 : vector<2x128xf32>
    %c6 = arith.constant 6 : index
    %c0_36 = arith.constant 0 : index
    %139 = vector.load %arg9[%c6, %c0_36] : memref<16x128xf32, #tpu.memory_space<vmem>>, vector<2x128xf32>
    tpu.vector_store %arg9[%c6, %c0_36], %138 {strides = array<i32>} : memref<16x128xf32, #tpu.memory_space<vmem>>, vector<2x128xf32>,
    %140 = arith.truncf %138 : vector<2x128xf32> to vector<2x128xbf16>
    %141 = arith.extf %140 : vector<2x128xbf16> to vector<2x128xf32>
    %142 = arith.subf %138, %141 : vector<2x128xf32>
    %143 = arith.truncf %142 : vector<2x128xf32> to vector<2x128xbf16>
    %cst_37 = arith.constant dense<0.000000e+00> : vector<2x384xf32>
    %144 = tpu.matmul %140, %6, %cst_37 {dimension_numbers = #tpu.dot_dimension_numbers<[1], [0], [0], [1], [0, 0, 1, 1], [], []>} : vector<2x128xbf16>, vector<128x384xbf16>, vector<2x384xf32> -> vector<2x384xf32>
    %cst_38 = arith.constant dense<0.000000e+00> : vector<2x384xf32>
    %145 = tpu.matmul %140, %7, %cst_38 {dimension_numbers = #tpu.dot_dimension_numbers<[1], [0], [0], [1], [0, 0, 1, 1], [], []>} : vector<2x128xbf16>, vector<128x384xbf16>, vector<2x384xf32> -> vector<2x384xf32>
    %146 = arith.addf %144, %145 : vector<2x384xf32>
    %cst_39 = arith.constant dense<0.000000e+00> : vector<2x384xf32>
    %147 = tpu.matmul %143, %6, %cst_39 {dimension_numbers = #tpu.dot_dimension_numbers<[1], [0], [0], [1], [0, 0, 1, 1], [], []>} : vector<2x128xbf16>, vector<128x384xbf16>, vector<2x384xf32> -> vector<2x384xf32>
    %148 = arith.addf %146, %147 : vector<2x384xf32>
    %149 = vector.extract_strided_slice %5 {offsets = [8, 0], sizes = [2, 384], strides = [1, 1]} : vector<16x384xf32> to vector<2x384xf32>
    %150 = vector.extract_strided_slice %149 {offsets = [0, 0], sizes = [2, 256], strides = [1, 1]} : vector<2x384xf32> to vector<2x256xf32>
    %151 = vector.extract_strided_slice %148 {offsets = [0, 0], sizes = [2, 256], strides = [1, 1]} : vector<2x384xf32> to vector<2x256xf32>
    %152 = arith.addf %150, %151 : vector<2x256xf32>
    %153 = arith.negf %152 : vector<2x256xf32>
    %154 = math.exp %153 : vector<2x256xf32>
    %cst_40 = arith.constant 1.000000e+00 : f32
    %155 = vector.broadcast %cst_40 : f32 to vector<2x256xf32>
    %156 = arith.addf %155, %154 : vector<2x256xf32>
    %157 = arith.divf %155, %156 : vector<2x256xf32>
    %158 = vector.extract_strided_slice %157 {offsets = [0, 0], sizes = [2, 128], strides = [1, 1]} : vector<2x256xf32> to vector<2x128xf32>
    %159 = vector.extract_strided_slice %157 {offsets = [0, 128], sizes = [2, 128], strides = [1, 1]} : vector<2x256xf32> to vector<2x128xf32>
    %160 = vector.extract_strided_slice %149 {offsets = [0, 256], sizes = [2, 128], strides = [1, 1]} : vector<2x384xf32> to vector<2x128xf32>
    %161 = vector.extract_strided_slice %148 {offsets = [0, 256], sizes = [2, 128], strides = [1, 1]} : vector<2x384xf32> to vector<2x128xf32>
    %162 = arith.addf %161, %10 : vector<2x128xf32>
    %163 = arith.mulf %158, %162 : vector<2x128xf32>
    %164 = arith.addf %160, %163 : vector<2x128xf32>
    %165 = math.tanh %164 : vector<2x128xf32>
    %cst_41 = arith.constant 1.000000e+00 : f32
    %166 = vector.broadcast %cst_41 : f32 to vector<2x128xf32>
    %167 = arith.subf %166, %159 : vector<2x128xf32>
    %168 = arith.mulf %167, %165 : vector<2x128xf32>
    %169 = arith.mulf %159, %138 : vector<2x128xf32>
    %170 = arith.addf %168, %169 : vector<2x128xf32>
    %c8 = arith.constant 8 : index
    %c0_42 = arith.constant 0 : index
    %171 = vector.load %arg9[%c8, %c0_42] : memref<16x128xf32, #tpu.memory_space<vmem>>, vector<2x128xf32>
    tpu.vector_store %arg9[%c8, %c0_42], %170 {strides = array<i32>} : memref<16x128xf32, #tpu.memory_space<vmem>>, vector<2x128xf32>,
    %172 = arith.truncf %170 : vector<2x128xf32> to vector<2x128xbf16>
    %173 = arith.extf %172 : vector<2x128xbf16> to vector<2x128xf32>
    %174 = arith.subf %170, %173 : vector<2x128xf32>
    %175 = arith.truncf %174 : vector<2x128xf32> to vector<2x128xbf16>
    %cst_43 = arith.constant dense<0.000000e+00> : vector<2x384xf32>
    %176 = tpu.matmul %172, %6, %cst_43 {dimension_numbers = #tpu.dot_dimension_numbers<[1], [0], [0], [1], [0, 0, 1, 1], [], []>} : vector<2x128xbf16>, vector<128x384xbf16>, vector<2x384xf32> -> vector<2x384xf32>
    %cst_44 = arith.constant dense<0.000000e+00> : vector<2x384xf32>
    %177 = tpu.matmul %172, %7, %cst_44 {dimension_numbers = #tpu.dot_dimension_numbers<[1], [0], [0], [1], [0, 0, 1, 1], [], []>} : vector<2x128xbf16>, vector<128x384xbf16>, vector<2x384xf32> -> vector<2x384xf32>
    %178 = arith.addf %176, %177 : vector<2x384xf32>
    %cst_45 = arith.constant dense<0.000000e+00> : vector<2x384xf32>
    %179 = tpu.matmul %175, %6, %cst_45 {dimension_numbers = #tpu.dot_dimension_numbers<[1], [0], [0], [1], [0, 0, 1, 1], [], []>} : vector<2x128xbf16>, vector<128x384xbf16>, vector<2x384xf32> -> vector<2x384xf32>
    %180 = arith.addf %178, %179 : vector<2x384xf32>
    %181 = vector.extract_strided_slice %5 {offsets = [10, 0], sizes = [2, 384], strides = [1, 1]} : vector<16x384xf32> to vector<2x384xf32>
    %182 = vector.extract_strided_slice %181 {offsets = [0, 0], sizes = [2, 256], strides = [1, 1]} : vector<2x384xf32> to vector<2x256xf32>
    %183 = vector.extract_strided_slice %180 {offsets = [0, 0], sizes = [2, 256], strides = [1, 1]} : vector<2x384xf32> to vector<2x256xf32>
    %184 = arith.addf %182, %183 : vector<2x256xf32>
    %185 = arith.negf %184 : vector<2x256xf32>
    %186 = math.exp %185 : vector<2x256xf32>
    %cst_46 = arith.constant 1.000000e+00 : f32
    %187 = vector.broadcast %cst_46 : f32 to vector<2x256xf32>
    %188 = arith.addf %187, %186 : vector<2x256xf32>
    %189 = arith.divf %187, %188 : vector<2x256xf32>
    %190 = vector.extract_strided_slice %189 {offsets = [0, 0], sizes = [2, 128], strides = [1, 1]} : vector<2x256xf32> to vector<2x128xf32>
    %191 = vector.extract_strided_slice %189 {offsets = [0, 128], sizes = [2, 128], strides = [1, 1]} : vector<2x256xf32> to vector<2x128xf32>
    %192 = vector.extract_strided_slice %181 {offsets = [0, 256], sizes = [2, 128], strides = [1, 1]} : vector<2x384xf32> to vector<2x128xf32>
    %193 = vector.extract_strided_slice %180 {offsets = [0, 256], sizes = [2, 128], strides = [1, 1]} : vector<2x384xf32> to vector<2x128xf32>
    %194 = arith.addf %193, %10 : vector<2x128xf32>
    %195 = arith.mulf %190, %194 : vector<2x128xf32>
    %196 = arith.addf %192, %195 : vector<2x128xf32>
    %197 = math.tanh %196 : vector<2x128xf32>
    %cst_47 = arith.constant 1.000000e+00 : f32
    %198 = vector.broadcast %cst_47 : f32 to vector<2x128xf32>
    %199 = arith.subf %198, %191 : vector<2x128xf32>
    %200 = arith.mulf %199, %197 : vector<2x128xf32>
    %201 = arith.mulf %191, %170 : vector<2x128xf32>
    %202 = arith.addf %200, %201 : vector<2x128xf32>
    %c10 = arith.constant 10 : index
    %c0_48 = arith.constant 0 : index
    %203 = vector.load %arg9[%c10, %c0_48] : memref<16x128xf32, #tpu.memory_space<vmem>>, vector<2x128xf32>
    tpu.vector_store %arg9[%c10, %c0_48], %202 {strides = array<i32>} : memref<16x128xf32, #tpu.memory_space<vmem>>, vector<2x128xf32>,
    %204 = arith.truncf %202 : vector<2x128xf32> to vector<2x128xbf16>
    %205 = arith.extf %204 : vector<2x128xbf16> to vector<2x128xf32>
    %206 = arith.subf %202, %205 : vector<2x128xf32>
    %207 = arith.truncf %206 : vector<2x128xf32> to vector<2x128xbf16>
    %cst_49 = arith.constant dense<0.000000e+00> : vector<2x384xf32>
    %208 = tpu.matmul %204, %6, %cst_49 {dimension_numbers = #tpu.dot_dimension_numbers<[1], [0], [0], [1], [0, 0, 1, 1], [], []>} : vector<2x128xbf16>, vector<128x384xbf16>, vector<2x384xf32> -> vector<2x384xf32>
    %cst_50 = arith.constant dense<0.000000e+00> : vector<2x384xf32>
    %209 = tpu.matmul %204, %7, %cst_50 {dimension_numbers = #tpu.dot_dimension_numbers<[1], [0], [0], [1], [0, 0, 1, 1], [], []>} : vector<2x128xbf16>, vector<128x384xbf16>, vector<2x384xf32> -> vector<2x384xf32>
    %210 = arith.addf %208, %209 : vector<2x384xf32>
    %cst_51 = arith.constant dense<0.000000e+00> : vector<2x384xf32>
    %211 = tpu.matmul %207, %6, %cst_51 {dimension_numbers = #tpu.dot_dimension_numbers<[1], [0], [0], [1], [0, 0, 1, 1], [], []>} : vector<2x128xbf16>, vector<128x384xbf16>, vector<2x384xf32> -> vector<2x384xf32>
    %212 = arith.addf %210, %211 : vector<2x384xf32>
    %213 = vector.extract_strided_slice %5 {offsets = [12, 0], sizes = [2, 384], strides = [1, 1]} : vector<16x384xf32> to vector<2x384xf32>
    %214 = vector.extract_strided_slice %213 {offsets = [0, 0], sizes = [2, 256], strides = [1, 1]} : vector<2x384xf32> to vector<2x256xf32>
    %215 = vector.extract_strided_slice %212 {offsets = [0, 0], sizes = [2, 256], strides = [1, 1]} : vector<2x384xf32> to vector<2x256xf32>
    %216 = arith.addf %214, %215 : vector<2x256xf32>
    %217 = arith.negf %216 : vector<2x256xf32>
    %218 = math.exp %217 : vector<2x256xf32>
    %cst_52 = arith.constant 1.000000e+00 : f32
    %219 = vector.broadcast %cst_52 : f32 to vector<2x256xf32>
    %220 = arith.addf %219, %218 : vector<2x256xf32>
    %221 = arith.divf %219, %220 : vector<2x256xf32>
    %222 = vector.extract_strided_slice %221 {offsets = [0, 0], sizes = [2, 128], strides = [1, 1]} : vector<2x256xf32> to vector<2x128xf32>
    %223 = vector.extract_strided_slice %221 {offsets = [0, 128], sizes = [2, 128], strides = [1, 1]} : vector<2x256xf32> to vector<2x128xf32>
    %224 = vector.extract_strided_slice %213 {offsets = [0, 256], sizes = [2, 128], strides = [1, 1]} : vector<2x384xf32> to vector<2x128xf32>
    %225 = vector.extract_strided_slice %212 {offsets = [0, 256], sizes = [2, 128], strides = [1, 1]} : vector<2x384xf32> to vector<2x128xf32>
    %226 = arith.addf %225, %10 : vector<2x128xf32>
    %227 = arith.mulf %222, %226 : vector<2x128xf32>
    %228 = arith.addf %224, %227 : vector<2x128xf32>
    %229 = math.tanh %228 : vector<2x128xf32>
    %cst_53 = arith.constant 1.000000e+00 : f32
    %230 = vector.broadcast %cst_53 : f32 to vector<2x128xf32>
    %231 = arith.subf %230, %223 : vector<2x128xf32>
    %232 = arith.mulf %231, %229 : vector<2x128xf32>
    %233 = arith.mulf %223, %202 : vector<2x128xf32>
    %234 = arith.addf %232, %233 : vector<2x128xf32>
    %c12 = arith.constant 12 : index
    %c0_54 = arith.constant 0 : index
    %235 = vector.load %arg9[%c12, %c0_54] : memref<16x128xf32, #tpu.memory_space<vmem>>, vector<2x128xf32>
    tpu.vector_store %arg9[%c12, %c0_54], %234 {strides = array<i32>} : memref<16x128xf32, #tpu.memory_space<vmem>>, vector<2x128xf32>,
    %236 = arith.truncf %234 : vector<2x128xf32> to vector<2x128xbf16>
    %237 = arith.extf %236 : vector<2x128xbf16> to vector<2x128xf32>
    %238 = arith.subf %234, %237 : vector<2x128xf32>
    %239 = arith.truncf %238 : vector<2x128xf32> to vector<2x128xbf16>
    %cst_55 = arith.constant dense<0.000000e+00> : vector<2x384xf32>
    %240 = tpu.matmul %236, %6, %cst_55 {dimension_numbers = #tpu.dot_dimension_numbers<[1], [0], [0], [1], [0, 0, 1, 1], [], []>} : vector<2x128xbf16>, vector<128x384xbf16>, vector<2x384xf32> -> vector<2x384xf32>
    %cst_56 = arith.constant dense<0.000000e+00> : vector<2x384xf32>
    %241 = tpu.matmul %236, %7, %cst_56 {dimension_numbers = #tpu.dot_dimension_numbers<[1], [0], [0], [1], [0, 0, 1, 1], [], []>} : vector<2x128xbf16>, vector<128x384xbf16>, vector<2x384xf32> -> vector<2x384xf32>
    %242 = arith.addf %240, %241 : vector<2x384xf32>
    %cst_57 = arith.constant dense<0.000000e+00> : vector<2x384xf32>
    %243 = tpu.matmul %239, %6, %cst_57 {dimension_numbers = #tpu.dot_dimension_numbers<[1], [0], [0], [1], [0, 0, 1, 1], [], []>} : vector<2x128xbf16>, vector<128x384xbf16>, vector<2x384xf32> -> vector<2x384xf32>
    %244 = arith.addf %242, %243 : vector<2x384xf32>
    %245 = vector.extract_strided_slice %5 {offsets = [14, 0], sizes = [2, 384], strides = [1, 1]} : vector<16x384xf32> to vector<2x384xf32>
    %246 = vector.extract_strided_slice %245 {offsets = [0, 0], sizes = [2, 256], strides = [1, 1]} : vector<2x384xf32> to vector<2x256xf32>
    %247 = vector.extract_strided_slice %244 {offsets = [0, 0], sizes = [2, 256], strides = [1, 1]} : vector<2x384xf32> to vector<2x256xf32>
    %248 = arith.addf %246, %247 : vector<2x256xf32>
    %249 = arith.negf %248 : vector<2x256xf32>
    %250 = math.exp %249 : vector<2x256xf32>
    %cst_58 = arith.constant 1.000000e+00 : f32
    %251 = vector.broadcast %cst_58 : f32 to vector<2x256xf32>
    %252 = arith.addf %251, %250 : vector<2x256xf32>
    %253 = arith.divf %251, %252 : vector<2x256xf32>
    %254 = vector.extract_strided_slice %253 {offsets = [0, 0], sizes = [2, 128], strides = [1, 1]} : vector<2x256xf32> to vector<2x128xf32>
    %255 = vector.extract_strided_slice %253 {offsets = [0, 128], sizes = [2, 128], strides = [1, 1]} : vector<2x256xf32> to vector<2x128xf32>
    %256 = vector.extract_strided_slice %245 {offsets = [0, 256], sizes = [2, 128], strides = [1, 1]} : vector<2x384xf32> to vector<2x128xf32>
    %257 = vector.extract_strided_slice %244 {offsets = [0, 256], sizes = [2, 128], strides = [1, 1]} : vector<2x384xf32> to vector<2x128xf32>
    %258 = arith.addf %257, %10 : vector<2x128xf32>
    %259 = arith.mulf %254, %258 : vector<2x128xf32>
    %260 = arith.addf %256, %259 : vector<2x128xf32>
    %261 = math.tanh %260 : vector<2x128xf32>
    %cst_59 = arith.constant 1.000000e+00 : f32
    %262 = vector.broadcast %cst_59 : f32 to vector<2x128xf32>
    %263 = arith.subf %262, %255 : vector<2x128xf32>
    %264 = arith.mulf %263, %261 : vector<2x128xf32>
    %265 = arith.mulf %255, %234 : vector<2x128xf32>
    %266 = arith.addf %264, %265 : vector<2x128xf32>
    %c14 = arith.constant 14 : index
    %c0_60 = arith.constant 0 : index
    %267 = vector.load %arg9[%c14, %c0_60] : memref<16x128xf32, #tpu.memory_space<vmem>>, vector<2x128xf32>
    tpu.vector_store %arg9[%c14, %c0_60], %266 {strides = array<i32>} : memref<16x128xf32, #tpu.memory_space<vmem>>, vector<2x128xf32>,
    %c0_61 = arith.constant 0 : index
    %c0_62 = arith.constant 0 : index
    %268 = vector.load %arg9[%c0_61, %c0_62] : memref<16x128xf32, #tpu.memory_space<vmem>>, vector<16x128xf32>
    %c0_63 = arith.constant 0 : index
    %c0_64 = arith.constant 0 : index
    %269 = vector.load %arg7[%c0_63, %c0_64] : memref<3x64xf32, #tpu.memory_space<vmem>>, vector<3x64xf32>
    %270 = vector.extract_strided_slice %268 {offsets = [0, 0], sizes = [16, 32], strides = [1, 1]} : vector<16x128xf32> to vector<16x32xf32>
    %271 = vector.extract_strided_slice %268 {offsets = [0, 96], sizes = [16, 32], strides = [1, 1]} : vector<16x128xf32> to vector<16x32xf32>
    %272 = arith.subf %270, %271 : vector<16x32xf32>
    %273 = vector.extract_strided_slice %268 {offsets = [0, 32], sizes = [16, 32], strides = [1, 1]} : vector<16x128xf32> to vector<16x32xf32>
    %274 = vector.extract_strided_slice %268 {offsets = [0, 64], sizes = [16, 32], strides = [1, 1]} : vector<16x128xf32> to vector<16x32xf32>
    %275 = arith.addf %273, %274 : vector<16x32xf32>
    %276 = vector.extract_strided_slice %269 {offsets = [0, 0], sizes = [1, 32], strides = [1, 1]} : vector<3x64xf32> to vector<1x32xf32>
    %277 = vector.extract_strided_slice %269 {offsets = [1, 0], sizes = [1, 32], strides = [1, 1]} : vector<3x64xf32> to vector<1x32xf32>
    %278 = vector.extract_strided_slice %269 {offsets = [2, 0], sizes = [1, 32], strides = [1, 1]} : vector<3x64xf32> to vector<1x32xf32>
    %cst_65 = arith.constant dense<0.000000e+00> : vector<32xf32>
    %279 = vector.multi_reduction <add>, %272, %cst_65 [0] : vector<16x32xf32> to vector<32xf32>
    %280 = vector.shape_cast %279 : vector<32xf32> to vector<1x32xf32>
    %cst_66 = arith.constant 6.250000e-02 : f32
    %281 = vector.broadcast %cst_66 : f32 to vector<1x32xf32>
    %282 = arith.mulf %280, %281 : vector<1x32xf32>
    %283 = arith.mulf %272, %272 : vector<16x32xf32>
    %cst_67 = arith.constant dense<0.000000e+00> : vector<32xf32>
    %284 = vector.multi_reduction <add>, %283, %cst_67 [0] : vector<16x32xf32> to vector<32xf32>
    %285 = vector.shape_cast %284 : vector<32xf32> to vector<1x32xf32>
    %cst_68 = arith.constant 6.250000e-02 : f32
    %286 = vector.broadcast %cst_68 : f32 to vector<1x32xf32>
    %287 = arith.mulf %285, %286 : vector<1x32xf32>
    %288 = arith.mulf %282, %282 : vector<1x32xf32>
    %289 = arith.subf %287, %288 : vector<1x32xf32>
    %cst_69 = arith.constant 9.99999974E-6 : f32
    %290 = vector.broadcast %cst_69 : f32 to vector<1x32xf32>
    %291 = arith.addf %289, %290 : vector<1x32xf32>
    %292 = math.rsqrt %291 : vector<1x32xf32>
    %293 = arith.mulf %276, %292 : vector<1x32xf32>
    %294 = arith.mulf %282, %293 : vector<1x32xf32>
    %295 = arith.subf %277, %294 : vector<1x32xf32>
    %296 = vector.broadcast %293 : vector<1x32xf32> to vector<16x32xf32>
    %297 = arith.mulf %272, %296 : vector<16x32xf32>
    %298 = vector.broadcast %295 : vector<1x32xf32> to vector<16x32xf32>
    %299 = arith.addf %297, %298 : vector<16x32xf32>
    %cst_70 = arith.constant 0.000000e+00 : f32
    %300 = vector.broadcast %cst_70 : f32 to vector<16x32xf32>
    %301 = arith.cmpf oge, %299, %300 : vector<16x32xf32>
    %302 = vector.broadcast %278 : vector<1x32xf32> to vector<16x32xf32>
    %303 = arith.mulf %302, %299 : vector<16x32xf32>
    %304 = arith.select %301, %299, %303 : vector<16x32xi1>, vector<16x32xf32>
    %c0_71 = arith.constant 0 : index
    %c0_72 = arith.constant 0 : index
    %305 = vector.load %arg8[%c0_71, %c0_72] : memref<16x64xf32, #tpu.memory_space<vmem>>, vector<16x32xf32>
    tpu.vector_store %arg8[%c0_71, %c0_72], %304 {strides = array<i32>} : memref<16x64xf32, #tpu.memory_space<vmem>>, vector<16x32xf32>,
    %306 = vector.extract_strided_slice %269 {offsets = [0, 32], sizes = [1, 32], strides = [1, 1]} : vector<3x64xf32> to vector<1x32xf32>
    %307 = vector.extract_strided_slice %269 {offsets = [1, 32], sizes = [1, 32], strides = [1, 1]} : vector<3x64xf32> to vector<1x32xf32>
    %308 = vector.extract_strided_slice %269 {offsets = [2, 32], sizes = [1, 32], strides = [1, 1]} : vector<3x64xf32> to vector<1x32xf32>
    %cst_73 = arith.constant dense<0.000000e+00> : vector<32xf32>
    %309 = vector.multi_reduction <add>, %275, %cst_73 [0] : vector<16x32xf32> to vector<32xf32>
    %310 = vector.shape_cast %309 : vector<32xf32> to vector<1x32xf32>
    %cst_74 = arith.constant 6.250000e-02 : f32
    %311 = vector.broadcast %cst_74 : f32 to vector<1x32xf32>
    %312 = arith.mulf %310, %311 : vector<1x32xf32>
    %313 = arith.mulf %275, %275 : vector<16x32xf32>
    %cst_75 = arith.constant dense<0.000000e+00> : vector<32xf32>
    %314 = vector.multi_reduction <add>, %313, %cst_75 [0] : vector<16x32xf32> to vector<32xf32>
    %315 = vector.shape_cast %314 : vector<32xf32> to vector<1x32xf32>
    %cst_76 = arith.constant 6.250000e-02 : f32
    %316 = vector.broadcast %cst_76 : f32 to vector<1x32xf32>
    %317 = arith.mulf %315, %316 : vector<1x32xf32>
    %318 = arith.mulf %312, %312 : vector<1x32xf32>
    %319 = arith.subf %317, %318 : vector<1x32xf32>
    %cst_77 = arith.constant 9.99999974E-6 : f32
    %320 = vector.broadcast %cst_77 : f32 to vector<1x32xf32>
    %321 = arith.addf %319, %320 : vector<1x32xf32>
    %322 = math.rsqrt %321 : vector<1x32xf32>
    %323 = arith.mulf %306, %322 : vector<1x32xf32>
    %324 = arith.mulf %312, %323 : vector<1x32xf32>
    %325 = arith.subf %307, %324 : vector<1x32xf32>
    %326 = vector.broadcast %323 : vector<1x32xf32> to vector<16x32xf32>
    %327 = arith.mulf %275, %326 : vector<16x32xf32>
    %328 = vector.broadcast %325 : vector<1x32xf32> to vector<16x32xf32>
    %329 = arith.addf %327, %328 : vector<16x32xf32>
    %cst_78 = arith.constant 0.000000e+00 : f32
    %330 = vector.broadcast %cst_78 : f32 to vector<16x32xf32>
    %331 = arith.cmpf oge, %329, %330 : vector<16x32xf32>
    %332 = vector.broadcast %308 : vector<1x32xf32> to vector<16x32xf32>
    %333 = arith.mulf %332, %329 : vector<16x32xf32>
    %334 = arith.select %331, %329, %333 : vector<16x32xi1>, vector<16x32xf32>
    %c0_79 = arith.constant 0 : index
    %c32 = arith.constant 32 : index
    %335 = vector.load %arg8[%c0_79, %c32] : memref<16x64xf32, #tpu.memory_space<vmem>>, vector<16x32xf32>
    tpu.vector_store %arg8[%c0_79, %c32], %334 {strides = array<i32>} : memref<16x64xf32, #tpu.memory_space<vmem>>, vector<16x32xf32>,
    return
  }
  func.func @transform_0(%arg0: i32) -> (i32, i32) {
    %c0_i32 = arith.constant 0 : i32
    %c0_i32_0 = arith.constant 0 : i32
    %c0_i32_1 = arith.constant 0 : i32
    return %c0_i32, %c0_i32_0 : i32, i32
  }
  func.func @transform_1(%arg0: i32) -> (i32, i32) {
    %c0_i32 = arith.constant 0 : i32
    %c0_i32_0 = arith.constant 0 : i32
    %c0_i32_1 = arith.constant 0 : i32
    return %c0_i32, %c0_i32_0 : i32, i32
  }
  func.func @transform_2(%arg0: i32) -> (i32, i32) {
    %c0_i32 = arith.constant 0 : i32
    %c0_i32_0 = arith.constant 0 : i32
    %c0_i32_1 = arith.constant 0 : i32
    return %c0_i32, %c0_i32_0 : i32, i32
  }
  func.func @transform_3(%arg0: i32) -> (i32, i32) {
    %c0_i32 = arith.constant 0 : i32
    %c0_i32_0 = arith.constant 0 : i32
    %c0_i32_1 = arith.constant 0 : i32
    return %c0_i32, %c0_i32_0 : i32, i32
  }
  func.func @transform_4(%arg0: i32) -> (i32, i32) {
    %c0_i32 = arith.constant 0 : i32
    %c0_i32_0 = arith.constant 0 : i32
    %c0_i32_1 = arith.constant 0 : i32
    return %c0_i32, %c0_i32_0 : i32, i32
  }
  func.func @transform_5(%arg0: i32) -> (i32, i32) {
    %c0_i32 = arith.constant 0 : i32
    %c0_i32_0 = arith.constant 0 : i32
    %c0_i32_1 = arith.constant 0 : i32
    return %c0_i32, %c0_i32_0 : i32, i32
  }
  func.func @transform_6(%arg0: i32) -> (i32, i32) {
    %c0_i32 = arith.constant 0 : i32
    %c0_i32_0 = arith.constant 0 : i32
    %c0_i32_1 = arith.constant 0 : i32
    return %c0_i32, %c0_i32_0 : i32, i32
  }
  func.func @transform_7(%arg0: i32) -> (i32, i32) {
    %c0_i32 = arith.constant 0 : i32
    %c0_i32_0 = arith.constant 0 : i32
    %c0_i32_1 = arith.constant 0 : i32
    return %c0_i32, %c0_i32_0 : i32, i32
  }
}

</mosaic_0001>

<llo_original>
// kernel: crnn_forward.1
$region0: #{crnn_forward.1}
  #allocation0 [shape = 'u32[]', space=smem, size = 0x4, offset = 0x4, fixed_abs, tag = 'smem constant byte address 0x4 - core index']
  #allocation1 [shape = 'u32[144,128]{1,0:T(1,128)}', space=vmem, size = 0x12000, scoped, tag = 'internal scratch']
  #allocation2 [shape = 'f32[16,128]{1,0:T(8,128)}', space=vmem, size = 0x2000, scoped, tag = 'scratch operand']
  %s0 = inlined_call_operand.vmem [shape: f32[16,64], index: 0, kind: input, shape index: {}]
  %s1 = inlined_call_operand.vmem [shape: f32[64,384], index: 1, kind: input, shape index: {}]
  %s2 = inlined_call_operand.vmem [shape: f32[1,384], index: 2, kind: input, shape index: {}]
  %s3 = inlined_call_operand.vmem [shape: bf16[128,384], index: 3, kind: input, shape index: {}]
  %s4 = inlined_call_operand.hbm [shape: bf16[128,384], index: 4, kind: input, shape index: {}]
  %s5 = inlined_call_operand.vmem [shape: f32[1,128], index: 5, kind: input, shape index: {}]
  %s6 = inlined_call_operand.vmem [shape: f32[3,64], index: 6, kind: input, shape index: {}]
  %s7 = inlined_call_operand.vmem [shape: f32[16,64], index: 7, kind: output, shape index: {}]
  %s8 = sld [smem:[#allocation0]]
  $region42: #{crnn_forward.1} parent=0
    _
  %s10 = ssub.s32 1, %s8
  %s11 = scalar_select 0, %s10, %s8
  $region1: #{crnn_forward.1} parent=0
    #allocation3 [shape = 'u8[98304]{0}', space=vmem, size = 0x18000, scoped, tag = 'input window, operand 4, single buffered']
    #allocation4 [shape = 's32[1]{0}', space=sflag, size = 0x4, scoped, tag = 'scoped memory for crnn_forward.1']
    %12 = vsyncpa [#allocation4], 0
    // Predicated region
    $region2: #{crnn_forward.1} parent=1 // pred_check
      _
    $region3: #{crnn_forward.1} parent=1 // pred_check_branch
      %14 = sbr.rel (0) target = $region5
    $region4: #{crnn_forward.1} parent=1 // pred_region
      _
    $region5: #{crnn_forward.1} parent=1 // pred_fallthru
      _
    // Predicated region
    $region6: #{crnn_forward.1} parent=1 // pred_check
      _
    $region7: #{crnn_forward.1} parent=1 // pred_check_branch
      %16 = sbr.rel (0) target = $region9
    $region8: #{crnn_forward.1} parent=1 // pred_region
      _
    $region9: #{crnn_forward.1} parent=1 // pred_fallthru
      _
    // Predicated region
    $region10: #{crnn_forward.1} parent=1 // pred_check
      _
    $region11: #{crnn_forward.1} parent=1 // pred_check_branch
      %18 = sbr.rel (0) target = $region13
    $region12: #{crnn_forward.1} parent=1 // pred_region
      _
    $region13: #{crnn_forward.1} parent=1 // pred_fallthru
      _
    // Predicated region
    $region14: #{crnn_forward.1} parent=1 // pred_check
      _
    $region15: #{crnn_forward.1} parent=1 // pred_check_branch
      %20 = sbr.rel (0) target = $region17
    $region16: #{crnn_forward.1} parent=1 // pred_region
      _
    $region17: #{crnn_forward.1} parent=1 // pred_fallthru
      _
    // Predicated region
    $region18: #{crnn_forward.1} parent=1 // pred_check
      _
    $region19: #{crnn_forward.1} parent=1 // pred_check_branch
      %22 = sbr.rel (0) target = $region21
    $region20: #{crnn_forward.1} parent=1 // pred_region
      %s24 = ssub.s32 3072, 3072
      %25 = vsyncadd [#allocation4], %s24
      %s26 = sshll.u32 [#allocation3], 4
      %s27 = int_to_ptr.vmem [resolvable:$true] %s26
      %32 = dma.hbm_to_vmem [thread:$0]  %s4, 3072, %s27, [#allocation4], 192, 192, 12
    $region21: #{crnn_forward.1} parent=1 // pred_fallthru
      _
    // Predicated region
    $region22: #{crnn_forward.1} parent=1 // pred_check
      _
    $region23: #{crnn_forward.1} parent=1 // pred_check_branch
      %34 = sbr.rel (0) target = $region25
    $region24: #{crnn_forward.1} parent=1 // pred_region
      _
    $region25: #{crnn_forward.1} parent=1 // pred_fallthru
      _
    // Predicated region
    $region26: #{crnn_forward.1} parent=1 // pred_check
      _
    $region27: #{crnn_forward.1} parent=1 // pred_check_branch
      %36 = sbr.rel (0) target = $region29
    $region28: #{crnn_forward.1} parent=1 // pred_region
      _
    $region29: #{crnn_forward.1} parent=1 // pred_fallthru
      _
    // Predicated region
    $region30: #{crnn_forward.1} parent=1 // pred_check
      _
    $region31: #{crnn_forward.1} parent=1 // pred_check_branch
      %38 = sbr.rel (0) target = $region33
    $region32: #{crnn_forward.1} parent=1 // pred_region
      %39 = dma.done [#allocation4], 3072
    $region33: #{crnn_forward.1} parent=1 // pred_fallthru
      _
    %v41 = vld [vmem:[%s0] sm:$0xff]
    %v42 = vld [vmem:[%s0 + $0x8] sm:$0xff]
    %v43 = vld [vmem:[%s1] sm:$0xff]
    %v44 = vld [vmem:[%s1 + $0x8] sm:$0xff]
    %v45 = vld [vmem:[%s1 + $0x10] sm:$0xff]
    %v46 = vld [vmem:[%s1 + $0x18] sm:$0xff]
    %v47 = vld [vmem:[%s1 + $0x20] sm:$0xff]
    %v48 = vld [vmem:[%s1 + $0x28] sm:$0xff]
    %v49 = vld [vmem:[%s1 + $0x30] sm:$0xff]
    %v50 = vld [vmem:[%s1 + $0x38] sm:$0xff]
    %v51 = vld [vmem:[%s1 + $0x40] sm:$0xff]
    %v52 = vld [vmem:[%s1 + $0x48] sm:$0xff]
    %v53 = vld [vmem:[%s1 + $0x50] sm:$0xff]
    %v54 = vld [vmem:[%s1 + $0x58] sm:$0xff]
    %v55 = vld [vmem:[%s1 + $0x60] sm:$0xff]
    %v56 = vld [vmem:[%s1 + $0x68] sm:$0xff]
    %v57 = vld [vmem:[%s1 + $0x70] sm:$0xff]
    %v58 = vld [vmem:[%s1 + $0x78] sm:$0xff]
    %v59 = vld [vmem:[%s1 + $0x80] sm:$0xff]
    %v60 = vld [vmem:[%s1 + $0x88] sm:$0xff]
    %v61 = vld [vmem:[%s1 + $0x90] sm:$0xff]
    %v62 = vld [vmem:[%s1 + $0x98] sm:$0xff]
    %v63 = vld [vmem:[%s1 + $0xa0] sm:$0xff]
    %v64 = vld [vmem:[%s1 + $0xa8] sm:$0xff]
    %v65 = vld [vmem:[%s1 + $0xb0] sm:$0xff]
    %v66 = vld [vmem:[%s1 + $0xb8] sm:$0xff]
    %v67 = vld [vmem:[%s2] sm:$0x7]
    %v69 = vlaneseq
    %v70 = vshrl.u32 %v69, 7
    %v71 = vsub.s32 0, %v70
    %v72 = vrot.slane %v67, %v71
    %v73 = vlaneseq
    %v74 = vshrl.u32 %v73, 7
    %v75 = vsub.s32 1, %v74
    %v76 = vrot.slane %v67, %v75
    %v77 = vlaneseq
    %v78 = vshrl.u32 %v77, 7
    %v79 = vsub.s32 2, %v78
    %v80 = vrot.slane %v67, %v79
    %vm84 = vcmask 523264
    %v86 = vsel %vm84, %v41, 0
    %v89 = vsel %vm84, %v42, 0
    %v91 = vand.u32 %v44, 4294901760
    %92 = vmatprep.subr.mxu0 %v91
    %v93 = vand.u32 %v43, 4294901760
    %94 = vmatpush1.msra.mxu0 %v93
    %v95 = vand.u32 %v47, 4294901760
    %96 = vmatprep.subr.mxu0 %v95
    %v97 = vand.u32 %v46, 4294901760
    %98 = vmatpush1.msra.mxu0 %v97
    %v99 = vand.u32 %v50, 4294901760
    %100 = vmatprep.subr.mxu0 %v99
    %v101 = vand.u32 %v49, 4294901760
    %102 = vmatpush1.msra.mxu0 %v101
    %v103 = vand.u32 %v53, 4294901760
    %104 = vmatprep.subr.mxu0 %v103
    %v105 = vand.u32 %v52, 4294901760
    %106 = vmatpush1.msra.mxu0 %v105
    %v107 = vand.u32 %v56, 4294901760
    %108 = vmatprep.subr.mxu0 %v107
    %v109 = vand.u32 %v55, 4294901760
    %110 = vmatpush1.msra.mxu0 %v109
    %v111 = vand.u32 %v59, 4294901760
    %112 = vmatprep.subr.mxu0 %v111
    %v113 = vand.u32 %v58, 4294901760
    %114 = vmatpush1.msra.mxu0 %v113
    %v115 = vand.u32 %v62, 4294901760
    %116 = vmatprep.subr.mxu0 %v115
    %v117 = vand.u32 %v61, 4294901760
    %118 = vmatpush1.msra.mxu0 %v117
    %v119 = vand.u32 %v65, 4294901760
    %120 = vmatprep.subr.mxu0 %v119
    %v121 = vand.u32 %v64, 4294901760
    %122 = vmatpush1.msra.mxu0 %v121
    %123 = vmatprep.subr.mxu0 0.0
    %124 = vmatpush1.msra.mxu0 0.0
    %125 = vmatprep.subr.mxu0 0.0
    %126 = vmatpush1.msra.mxu0 0.0
    %127 = vmatprep.subr.mxu0 0.0
    %128 = vmatpush1.msra.mxu0 0.0
    %129 = vmatprep.subr.mxu0 0.0
    %130 = vmatpush1.msra.mxu0 0.0
    %131 = vmatprep.subr.mxu0 0.0
    %132 = vmatpush1.msra.mxu0 0.0
    %133 = vmatprep.subr.mxu0 0.0
    %134 = vmatpush1.msra.mxu0 0.0
    %135 = vmatprep.subr.mxu0 0.0
    %136 = vmatpush1.msra.mxu0 0.0
    %137 = vmatprep.subr.mxu0 0.0
    %138 = vmatpush1.msra.mxu0 0.0
    %139 = vmatprep.subr.mxu0 0.0
    %140 = vmatpush1.msra.mxu0 0.0
    %141 = vmatprep.subr.mxu0 0.0
    %142 = vmatpush1.msra.mxu0 0.0
    %143 = vmatprep.subr.mxu0 0.0
    %144 = vmatpush1.msra.mxu0 0.0
    %145 = vmatprep.subr.mxu0 0.0
    %146 = vmatpush1.msra.mxu0 0.0
    %147 = vmatprep.subr.mxu0 0.0
    %148 = vmatpush1.msra.mxu0 0.0
    %149 = vmatprep.subr.mxu0 0.0
    %150 = vmatpush1.msra.mxu0 0.0
    %151 = vmatprep.subr.mxu0 0.0
    %152 = vmatpush1.msra.mxu0 0.0
    %153 = vmatprep.subr.mxu0 0.0
    %154 = vmatpush1.msra.mxu0 0.0
    %155 = vmatprep.subr.mxu0 0.0
    %156 = vmatpush1.msra.mxu0 0.0
    %157 = vmatprep.subr.mxu0 0.0
    %158 = vmatpush1.msra.mxu0 0.0
    %159 = vmatprep.subr.mxu0 0.0
    %160 = vmatpush1.msra.mxu0 0.0
    %161 = vmatprep.subr.mxu0 0.0
    %162 = vmatpush1.msra.mxu0 0.0
    %163 = vmatprep.subr.mxu0 0.0
    %164 = vmatpush1.msra.mxu0 0.0
    %165 = vmatprep.subr.mxu0 0.0
    %166 = vmatpush1.msra.mxu0 0.0
    %167 = vmatprep.subr.mxu0 0.0
    %168 = vmatpush1.msra.mxu0 0.0
    %169 = vmatprep.subr.mxu0 0.0
    %170 = vmatpush1.msra.mxu0 0.0
    %171 = vmatprep.mubr.f32.mxu0 0.0
    %v172 = vand.u32 %v86, 4294901760
    %v173 = vsub.f32 %v86, %v172
    %v174 = vand.u32 %v173, 4294901760
    %v175 = vsub.f32 %v173, %v174
    %v176 = vand.u32 %v175, 4294901760
    %177 = vmatmul.mubr.f32.gmra.mrb[0].mxu0 %v176
    %v178 = vpop.f32.mrb[0].mxu0
    %v179 = vadd.f32 %v72, %v178
    %v180 = vpop.f32.mrb[0].mxu0
    %v181 = vadd.f32 %v76, %v180
    %182 = vmatprep.mubr.f32.mxu0 0.0
    %v183 = vand.u32 %v89, 4294901760
    %v184 = vsub.f32 %v89, %v183
    %v185 = vand.u32 %v184, 4294901760
    %v186 = vsub.f32 %v184, %v185
    %v187 = vand.u32 %v186, 4294901760
    %188 = vmatmul.mubr.f32.gmra.mrb[0].mxu0 %v187
    %v189 = vpop.f32.mrb[0].mxu0
    %v190 = vadd.f32 %v72, %v189
    %v191 = vpop.f32.mrb[0].mxu0
    %v192 = vadd.f32 %v76, %v191
    %193 = vdwg.mxu0
    %v194 = vand.u32 %v44, 4294901760
    %v195 = vsub.f32 %v44, %v194
    %v196 = vand.u32 %v195, 4294901760
    %v197 = vsub.f32 %v195, %v196
    %v198 = vand.u32 %v197, 4294901760
    %199 = vmatprep.subr.mxu0 %v198
    %v200 = vand.u32 %v43, 4294901760
    %v201 = vsub.f32 %v43, %v200
    %v202 = vand.u32 %v201, 4294901760
    %v203 = vsub.f32 %v201, %v202
    %v204 = vand.u32 %v203, 4294901760
    %205 = vmatpush1.msra.mxu0 %v204
    %v206 = vand.u32 %v47, 4294901760
    %v207 = vsub.f32 %v47, %v206
    %v208 = vand.u32 %v207, 4294901760
    %v209 = vsub.f32 %v207, %v208
    %v210 = vand.u32 %v209, 4294901760
    %211 = vmatprep.subr.mxu0 %v210
    %v212 = vand.u32 %v46, 4294901760
    %v213 = vsub.f32 %v46, %v212
    %v214 = vand.u32 %v213, 4294901760
    %v215 = vsub.f32 %v213, %v214
    %v216 = vand.u32 %v215, 4294901760
    %217 = vmatpush1.msra.mxu0 %v216
    %v218 = vand.u32 %v50, 4294901760
    %v219 = vsub.f32 %v50, %v218
    %v220 = vand.u32 %v219, 4294901760
    %v221 = vsub.f32 %v219, %v220
    %v222 = vand.u32 %v221, 4294901760
    %223 = vmatprep.subr.mxu0 %v222
    %v224 = vand.u32 %v49, 4294901760
    %v225 = vsub.f32 %v49, %v224
    %v226 = vand.u32 %v225, 4294901760
    %v227 = vsub.f32 %v225, %v226
    %v228 = vand.u32 %v227, 4294901760
    %229 = vmatpush1.msra.mxu0 %v228
    %v230 = vand.u32 %v53, 4294901760
    %v231 = vsub.f32 %v53, %v230
    %v232 = vand.u32 %v231, 4294901760
    %v233 = vsub.f32 %v231, %v232
    %v234 = vand.u32 %v233, 4294901760
    %235 = vmatprep.subr.mxu0 %v234
    %v236 = vand.u32 %v52, 4294901760
    %v237 = vsub.f32 %v52, %v236
    %v238 = vand.u32 %v237, 4294901760
    %v239 = vsub.f32 %v237, %v238
    %v240 = vand.u32 %v239, 4294901760
    %241 = vmatpush1.msra.mxu0 %v240
    %v242 = vand.u32 %v56, 4294901760
    %v243 = vsub.f32 %v56, %v242
    %v244 = vand.u32 %v243, 4294901760
    %v245 = vsub.f32 %v243, %v244
    %v246 = vand.u32 %v245, 4294901760
    %247 = vmatprep.subr.mxu0 %v246
    %v248 = vand.u32 %v55, 4294901760
    %v249 = vsub.f32 %v55, %v248
    %v250 = vand.u32 %v249, 4294901760
    %v251 = vsub.f32 %v249, %v250
    %v252 = vand.u32 %v251, 4294901760
    %253 = vmatpush1.msra.mxu0 %v252
    %v254 = vand.u32 %v59, 4294901760
    %v255 = vsub.f32 %v59, %v254
    %v256 = vand.u32 %v255, 4294901760
    %v257 = vsub.f32 %v255, %v256
    %v258 = vand.u32 %v257, 4294901760
    %259 = vmatprep.subr.mxu0 %v258
    %v260 = vand.u32 %v58, 4294901760
    %v261 = vsub.f32 %v58, %v260
    %v262 = vand.u32 %v261, 4294901760
    %v263 = vsub.f32 %v261, %v262
    %v264 = vand.u32 %v263, 4294901760
    %265 = vmatpush1.msra.mxu0 %v264
    %v266 = vand.u32 %v62, 4294901760
    %v267 = vsub.f32 %v62, %v266
    %v268 = vand.u32 %v267, 4294901760
    %v269 = vsub.f32 %v267, %v268
    %v270 = vand.u32 %v269, 4294901760
    %271 = vmatprep.subr.mxu0 %v270
    %v272 = vand.u32 %v61, 4294901760
    %v273 = vsub.f32 %v61, %v272
    %v274 = vand.u32 %v273, 4294901760
    %v275 = vsub.f32 %v273, %v274
    %v276 = vand.u32 %v275, 4294901760
    %277 = vmatpush1.msra.mxu0 %v276
    %v278 = vand.u32 %v65, 4294901760
    %v279 = vsub.f32 %v65, %v278
    %v280 = vand.u32 %v279, 4294901760
    %v281 = vsub.f32 %v279, %v280
    %v282 = vand.u32 %v281, 4294901760
    %283 = vmatprep.subr.mxu0 %v282
    %v284 = vand.u32 %v64, 4294901760
    %v285 = vsub.f32 %v64, %v284
    %v286 = vand.u32 %v285, 4294901760
    %v287 = vsub.f32 %v285, %v286
    %v288 = vand.u32 %v287, 4294901760
    %289 = vmatpush1.msra.mxu0 %v288
    %290 = vmatprep.subr.mxu0 0.0
    %291 = vmatpush1.msra.mxu0 0.0
    %292 = vmatprep.subr.mxu0 0.0
    %293 = vmatpush1.msra.mxu0 0.0
    %294 = vmatprep.subr.mxu0 0.0
    %295 = vmatpush1.msra.mxu0 0.0
    %296 = vmatprep.subr.mxu0 0.0
    %297 = vmatpush1.msra.mxu0 0.0
    %298 = vmatprep.subr.mxu0 0.0
    %299 = vmatpush1.msra.mxu0 0.0
    %300 = vmatprep.subr.mxu0 0.0
    %301 = vmatpush1.msra.mxu0 0.0
    %302 = vmatprep.subr.mxu0 0.0
    %303 = vmatpush1.msra.mxu0 0.0
    %304 = vmatprep.subr.mxu0 0.0
    %305 = vmatpush1.msra.mxu0 0.0
    %306 = vmatprep.subr.mxu0 0.0
    %307 = vmatpush1.msra.mxu0 0.0
    %308 = vmatprep.subr.mxu0 0.0
    %309 = vmatpush1.msra.mxu0 0.0
    %310 = vmatprep.subr.mxu0 0.0
    %311 = vmatpush1.msra.mxu0 0.0
    %312 = vmatprep.subr.mxu0 0.0
    %313 = vmatpush1.msra.mxu0 0.0
    %314 = vmatprep.subr.mxu0 0.0
    %315 = vmatpush1.msra.mxu0 0.0
    %316 = vmatprep.subr.mxu0 0.0
    %317 = vmatpush1.msra.mxu0 0.0
    %318 = vmatprep.subr.mxu0 0.0
    %319 = vmatpush1.msra.mxu0 0.0
    %320 = vmatprep.subr.mxu0 0.0
    %321 = vmatpush1.msra.mxu0 0.0
    %322 = vmatprep.subr.mxu0 0.0
    %323 = vmatpush1.msra.mxu0 0.0
    %324 = vmatprep.subr.mxu0 0.0
    %325 = vmatpush1.msra.mxu0 0.0
    %326 = vmatprep.subr.mxu0 0.0
    %327 = vmatpush1.msra.mxu0 0.0
    %328 = vmatprep.subr.mxu0 0.0
    %329 = vmatpush1.msra.mxu0 0.0
    %330 = vmatprep.subr.mxu0 0.0
    %331 = vmatpush1.msra.mxu0 0.0
    %332 = vmatprep.subr.mxu0 0.0
    %333 = vmatpush1.msra.mxu0 0.0
    %334 = vmatprep.subr.mxu0 0.0
    %335 = vmatpush1.msra.mxu0 0.0
    %336 = vmatprep.subr.mxu0 0.0
    %337 = vmatpush1.msra.mxu0 0.0
    %338 = vmatprep.mubr.f32.mxu0 0.0
    %v339 = vand.u32 %v86, 4294901760
    %340 = vmatmul.mubr.f32.gmra.mrb[0].mxu0 %v339
    %v341 = vpop.f32.mrb[0].mxu0
    %v342 = vadd.f32 %v179, %v341
    %v343 = vpop.f32.mrb[0].mxu0
    %v344 = vadd.f32 %v181, %v343
    %345 = vmatprep.mubr.f32.mxu0 0.0
    %v346 = vand.u32 %v89, 4294901760
    %347 = vmatmul.mubr.f32.gmra.mrb[0].mxu0 %v346
    %v348 = vpop.f32.mrb[0].mxu0
    %v349 = vadd.f32 %v190, %v348
    %v350 = vpop.f32.mrb[0].mxu0
    %v351 = vadd.f32 %v192, %v350
    %352 = vdwg.mxu0
    %v353 = vand.u32 %v44, 4294901760
    %v354 = vsub.f32 %v44, %v353
    %355 = vmatprep.subr.mxu0 %v354
    %v356 = vand.u32 %v43, 4294901760
    %v357 = vsub.f32 %v43, %v356
    %358 = vmatpush1.msra.mxu0 %v357
    %v359 = vand.u32 %v47, 4294901760
    %v360 = vsub.f32 %v47, %v359
    %361 = vmatprep.subr.mxu0 %v360
    %v362 = vand.u32 %v46, 4294901760
    %v363 = vsub.f32 %v46, %v362
    %364 = vmatpush1.msra.mxu0 %v363
    %v365 = vand.u32 %v50, 4294901760
    %v366 = vsub.f32 %v50, %v365
    %367 = vmatprep.subr.mxu0 %v366
    %v368 = vand.u32 %v49, 4294901760
    %v369 = vsub.f32 %v49, %v368
    %370 = vmatpush1.msra.mxu0 %v369
    %v371 = vand.u32 %v53, 4294901760
    %v372 = vsub.f32 %v53, %v371
    %373 = vmatprep.subr.mxu0 %v372
    %v374 = vand.u32 %v52, 4294901760
    %v375 = vsub.f32 %v52, %v374
    %376 = vmatpush1.msra.mxu0 %v375
    %v377 = vand.u32 %v56, 4294901760
    %v378 = vsub.f32 %v56, %v377
    %379 = vmatprep.subr.mxu0 %v378
    %v380 = vand.u32 %v55, 4294901760
    %v381 = vsub.f32 %v55, %v380
    %382 = vmatpush1.msra.mxu0 %v381
    %v383 = vand.u32 %v59, 4294901760
    %v384 = vsub.f32 %v59, %v383
    %385 = vmatprep.subr.mxu0 %v384
    %v386 = vand.u32 %v58, 4294901760
    %v387 = vsub.f32 %v58, %v386
    %388 = vmatpush1.msra.mxu0 %v387
    %v389 = vand.u32 %v62, 4294901760
    %v390 = vsub.f32 %v62, %v389
    %391 = vmatprep.subr.mxu0 %v390
    %v392 = vand.u32 %v61, 4294901760
    %v393 = vsub.f32 %v61, %v392
    %394 = vmatpush1.msra.mxu0 %v393
    %v395 = vand.u32 %v65, 4294901760
    %v396 = vsub.f32 %v65, %v395
    %397 = vmatprep.subr.mxu0 %v396
    %v398 = vand.u32 %v64, 4294901760
    %v399 = vsub.f32 %v64, %v398
    %400 = vmatpush1.msra.mxu0 %v399
    %401 = vmatprep.subr.mxu0 0.0
    %402 = vmatpush1.msra.mxu0 0.0
    %403 = vmatprep.subr.mxu0 0.0
    %404 = vmatpush1.msra.mxu0 0.0
    %405 = vmatprep.subr.mxu0 0.0
    %406 = vmatpush1.msra.mxu0 0.0
    %407 = vmatprep.subr.mxu0 0.0
    %408 = vmatpush1.msra.mxu0 0.0
    %409 = vmatprep.subr.mxu0 0.0
    %410 = vmatpush1.msra.mxu0 0.0
    %411 = vmatprep.subr.mxu0 0.0
    %412 = vmatpush1.msra.mxu0 0.0
    %413 = vmatprep.subr.mxu0 0.0
    %414 = vmatpush1.msra.mxu0 0.0
    %415 = vmatprep.subr.mxu0 0.0
    %416 = vmatpush1.msra.mxu0 0.0
    %417 = vmatprep.subr.mxu0 0.0
    %418 = vmatpush1.msra.mxu0 0.0
    %419 = vmatprep.subr.mxu0 0.0
    %420 = vmatpush1.msra.mxu0 0.0
    %421 = vmatprep.subr.mxu0 0.0
    %422 = vmatpush1.msra.mxu0 0.0
    %423 = vmatprep.subr.mxu0 0.0
    %424 = vmatpush1.msra.mxu0 0.0
    %425 = vmatprep.subr.mxu0 0.0
    %426 = vmatpush1.msra.mxu0 0.0
    %427 = vmatprep.subr.mxu0 0.0
    %428 = vmatpush1.msra.mxu0 0.0
    %429 = vmatprep.subr.mxu0 0.0
    %430 = vmatpush1.msra.mxu0 0.0
    %431 = vmatprep.subr.mxu0 0.0
    %432 = vmatpush1.msra.mxu0 0.0
    %433 = vmatprep.subr.mxu0 0.0
    %434 = vmatpush1.msra.mxu0 0.0
    %435 = vmatprep.subr.mxu0 0.0
    %436 = vmatpush1.msra.mxu0 0.0
    %437 = vmatprep.subr.mxu0 0.0
    %438 = vmatpush1.msra.mxu0 0.0
    %439 = vmatprep.subr.mxu0 0.0
    %440 = vmatpush1.msra.mxu0 0.0
    %441 = vmatprep.subr.mxu0 0.0
    %442 = vmatpush1.msra.mxu0 0.0
    %443 = vmatprep.subr.mxu0 0.0
    %444 = vmatpush1.msra.mxu0 0.0
    %445 = vmatprep.subr.mxu0 0.0
    %446 = vmatpush1.msra.mxu0 0.0
    %447 = vmatprep.subr.mxu0 0.0
    %448 = vmatpush1.msra.mxu0 0.0
    %449 = vmatprep.mubr.f32.mxu0 0.0
    %v450 = vand.u32 %v86, 4294901760
    %v451 = vsub.f32 %v86, %v450
    %452 = vmatmul.mubr.f32.gmra.mrb[0].mxu0 %v451
    %v453 = vpop.f32.mrb[0].mxu0
    %v454 = vadd.f32 %v342, %v453
    %v455 = vpop.f32.mrb[0].mxu0
    %v456 = vadd.f32 %v344, %v455
    %457 = vmatprep.mubr.f32.mxu0 0.0
    %v458 = vand.u32 %v89, 4294901760
    %v459 = vsub.f32 %v89, %v458
    %460 = vmatmul.mubr.f32.gmra.mrb[0].mxu0 %v459
    %v461 = vpop.f32.mrb[0].mxu0
    %v462 = vadd.f32 %v349, %v461
    %v463 = vpop.f32.mrb[0].mxu0
    %v464 = vadd.f32 %v351, %v463
    %465 = vdwg.mxu0
    %v466 = vand.u32 %v44, 4294901760
    %467 = vmatprep.subr.mxu0 %v466
    %v468 = vand.u32 %v43, 4294901760
    %469 = vmatpush1.msra.mxu0 %v468
    %v470 = vand.u32 %v47, 4294901760
    %471 = vmatprep.subr.mxu0 %v470
    %v472 = vand.u32 %v46, 4294901760
    %473 = vmatpush1.msra.mxu0 %v472
    %v474 = vand.u32 %v50, 4294901760
    %475 = vmatprep.subr.mxu0 %v474
    %v476 = vand.u32 %v49, 4294901760
    %477 = vmatpush1.msra.mxu0 %v476
    %v478 = vand.u32 %v53, 4294901760
    %479 = vmatprep.subr.mxu0 %v478
    %v480 = vand.u32 %v52, 4294901760
    %481 = vmatpush1.msra.mxu0 %v480
    %v482 = vand.u32 %v56, 4294901760
    %483 = vmatprep.subr.mxu0 %v482
    %v484 = vand.u32 %v55, 4294901760
    %485 = vmatpush1.msra.mxu0 %v484
    %v486 = vand.u32 %v59, 4294901760
    %487 = vmatprep.subr.mxu0 %v486
    %v488 = vand.u32 %v58, 4294901760
    %489 = vmatpush1.msra.mxu0 %v488
    %v490 = vand.u32 %v62, 4294901760
    %491 = vmatprep.subr.mxu0 %v490
    %v492 = vand.u32 %v61, 4294901760
    %493 = vmatpush1.msra.mxu0 %v492
    %v494 = vand.u32 %v65, 4294901760
    %495 = vmatprep.subr.mxu0 %v494
    %v496 = vand.u32 %v64, 4294901760
    %497 = vmatpush1.msra.mxu0 %v496
    %498 = vmatprep.subr.mxu0 0.0
    %499 = vmatpush1.msra.mxu0 0.0
    %500 = vmatprep.subr.mxu0 0.0
    %501 = vmatpush1.msra.mxu0 0.0
    %502 = vmatprep.subr.mxu0 0.0
    %503 = vmatpush1.msra.mxu0 0.0
    %504 = vmatprep.subr.mxu0 0.0
    %505 = vmatpush1.msra.mxu0 0.0
    %506 = vmatprep.subr.mxu0 0.0
    %507 = vmatpush1.msra.mxu0 0.0
    %508 = vmatprep.subr.mxu0 0.0
    %509 = vmatpush1.msra.mxu0 0.0
    %510 = vmatprep.subr.mxu0 0.0
    %511 = vmatpush1.msra.mxu0 0.0
    %512 = vmatprep.subr.mxu0 0.0
    %513 = vmatpush1.msra.mxu0 0.0
    %514 = vmatprep.subr.mxu0 0.0
    %515 = vmatpush1.msra.mxu0 0.0
    %516 = vmatprep.subr.mxu0 0.0
    %517 = vmatpush1.msra.mxu0 0.0
    %518 = vmatprep.subr.mxu0 0.0
    %519 = vmatpush1.msra.mxu0 0.0
    %520 = vmatprep.subr.mxu0 0.0
    %521 = vmatpush1.msra.mxu0 0.0
    %522 = vmatprep.subr.mxu0 0.0
    %523 = vmatpush1.msra.mxu0 0.0
    %524 = vmatprep.subr.mxu0 0.0
    %525 = vmatpush1.msra.mxu0 0.0
    %526 = vmatprep.subr.mxu0 0.0
    %527 = vmatpush1.msra.mxu0 0.0
    %528 = vmatprep.subr.mxu0 0.0
    %529 = vmatpush1.msra.mxu0 0.0
    %530 = vmatprep.subr.mxu0 0.0
    %531 = vmatpush1.msra.mxu0 0.0
    %532 = vmatprep.subr.mxu0 0.0
    %533 = vmatpush1.msra.mxu0 0.0
    %534 = vmatprep.subr.mxu0 0.0
    %535 = vmatpush1.msra.mxu0 0.0
    %536 = vmatprep.subr.mxu0 0.0
    %537 = vmatpush1.msra.mxu0 0.0
    %538 = vmatprep.subr.mxu0 0.0
    %539 = vmatpush1.msra.mxu0 0.0
    %540 = vmatprep.subr.mxu0 0.0
    %541 = vmatpush1.msra.mxu0 0.0
    %542 = vmatprep.subr.mxu0 0.0
    %543 = vmatpush1.msra.mxu0 0.0
    %544 = vmatprep.subr.mxu0 0.0
    %545 = vmatpush1.msra.mxu0 0.0
    %546 = vmatprep.mubr.f32.mxu0 0.0
    %v547 = vand.u32 %v86, 4294901760
    %v548 = vsub.f32 %v86, %v547
    %v549 = vand.u32 %v548, 4294901760
    %550 = vmatmul.mubr.f32.gmra.mrb[0].mxu0 %v549
    %v551 = vpop.f32.mrb[0].mxu0
    %v552 = vadd.f32 %v454, %v551
    %v553 = vpop.f32.mrb[0].mxu0
    %v554 = vadd.f32 %v456, %v553
    %555 = vmatprep.mubr.f32.mxu0 0.0
    %v556 = vand.u32 %v89, 4294901760
    %v557 = vsub.f32 %v89, %v556
    %v558 = vand.u32 %v557, 4294901760
    %559 = vmatmul.mubr.f32.gmra.mrb[0].mxu0 %v558
    %v560 = vpop.f32.mrb[0].mxu0
    %v561 = vadd.f32 %v462, %v560
    %v562 = vpop.f32.mrb[0].mxu0
    %v563 = vadd.f32 %v464, %v562
    %564 = vdwg.mxu0
    %v565 = vand.u32 %v44, 4294901760
    %v566 = vsub.f32 %v44, %v565
    %v567 = vand.u32 %v566, 4294901760
    %568 = vmatprep.subr.mxu0 %v567
    %v569 = vand.u32 %v43, 4294901760
    %v570 = vsub.f32 %v43, %v569
    %v571 = vand.u32 %v570, 4294901760
    %572 = vmatpush1.msra.mxu0 %v571
    %v573 = vand.u32 %v47, 4294901760
    %v574 = vsub.f32 %v47, %v573
    %v575 = vand.u32 %v574, 4294901760
    %576 = vmatprep.subr.mxu0 %v575
    %v577 = vand.u32 %v46, 4294901760
    %v578 = vsub.f32 %v46, %v577
    %v579 = vand.u32 %v578, 4294901760
    %580 = vmatpush1.msra.mxu0 %v579
    %v581 = vand.u32 %v50, 4294901760
    %v582 = vsub.f32 %v50, %v581
    %v583 = vand.u32 %v582, 4294901760
    %584 = vmatprep.subr.mxu0 %v583
    %v585 = vand.u32 %v49, 4294901760
    %v586 = vsub.f32 %v49, %v585
    %v587 = vand.u32 %v586, 4294901760
    %588 = vmatpush1.msra.mxu0 %v587
    %v589 = vand.u32 %v53, 4294901760
    %v590 = vsub.f32 %v53, %v589
    %v591 = vand.u32 %v590, 4294901760
    %592 = vmatprep.subr.mxu0 %v591
    %v593 = vand.u32 %v52, 4294901760
    %v594 = vsub.f32 %v52, %v593
    %v595 = vand.u32 %v594, 4294901760
    %596 = vmatpush1.msra.mxu0 %v595
    %v597 = vand.u32 %v56, 4294901760
    %v598 = vsub.f32 %v56, %v597
    %v599 = vand.u32 %v598, 4294901760
    %600 = vmatprep.subr.mxu0 %v599
    %v601 = vand.u32 %v55, 4294901760
    %v602 = vsub.f32 %v55, %v601
    %v603 = vand.u32 %v602, 4294901760
    %604 = vmatpush1.msra.mxu0 %v603
    %v605 = vand.u32 %v59, 4294901760
    %v606 = vsub.f32 %v59, %v605
    %v607 = vand.u32 %v606, 4294901760
    %608 = vmatprep.subr.mxu0 %v607
    %v609 = vand.u32 %v58, 4294901760
    %v610 = vsub.f32 %v58, %v609
    %v611 = vand.u32 %v610, 4294901760
    %612 = vmatpush1.msra.mxu0 %v611
    %v613 = vand.u32 %v62, 4294901760
    %v614 = vsub.f32 %v62, %v613
    %v615 = vand.u32 %v614, 4294901760
    %616 = vmatprep.subr.mxu0 %v615
    %v617 = vand.u32 %v61, 4294901760
    %v618 = vsub.f32 %v61, %v617
    %v619 = vand.u32 %v618, 4294901760
    %620 = vmatpush1.msra.mxu0 %v619
    %v621 = vand.u32 %v65, 4294901760
    %v622 = vsub.f32 %v65, %v621
    %v623 = vand.u32 %v622, 4294901760
    %624 = vmatprep.subr.mxu0 %v623
    %v625 = vand.u32 %v64, 4294901760
    %v626 = vsub.f32 %v64, %v625
    %v627 = vand.u32 %v626, 4294901760
    %628 = vmatpush1.msra.mxu0 %v627
    %629 = vmatprep.subr.mxu0 0.0
    %630 = vmatpush1.msra.mxu0 0.0
    %631 = vmatprep.subr.mxu0 0.0
    %632 = vmatpush1.msra.mxu0 0.0
    %633 = vmatprep.subr.mxu0 0.0
    %634 = vmatpush1.msra.mxu0 0.0
    %635 = vmatprep.subr.mxu0 0.0
    %636 = vmatpush1.msra.mxu0 0.0
    %637 = vmatprep.subr.mxu0 0.0
    %638 = vmatpush1.msra.mxu0 0.0
    %639 = vmatprep.subr.mxu0 0.0
    %640 = vmatpush1.msra.mxu0 0.0
    %641 = vmatprep.subr.mxu0 0.0
    %642 = vmatpush1.msra.mxu0 0.0
    %643 = vmatprep.subr.mxu0 0.0
    %644 = vmatpush1.msra.mxu0 0.0
    %645 = vmatprep.subr.mxu0 0.0
    %646 = vmatpush1.msra.mxu0 0.0
    %647 = vmatprep.subr.mxu0 0.0
    %648 = vmatpush1.msra.mxu0 0.0
    %649 = vmatprep.subr.mxu0 0.0
    %650 = vmatpush1.msra.mxu0 0.0
    %651 = vmatprep.subr.mxu0 0.0
    %652 = vmatpush1.msra.mxu0 0.0
    %653 = vmatprep.subr.mxu0 0.0
    %654 = vmatpush1.msra.mxu0 0.0
    %655 = vmatprep.subr.mxu0 0.0
    %656 = vmatpush1.msra.mxu0 0.0
    %657 = vmatprep.subr.mxu0 0.0
    %658 = vmatpush1.msra.mxu0 0.0
    %659 = vmatprep.subr.mxu0 0.0
    %660 = vmatpush1.msra.mxu0 0.0
    %661 = vmatprep.subr.mxu0 0.0
    %662 = vmatpush1.msra.mxu0 0.0
    %663 = vmatprep.subr.mxu0 0.0
    %664 = vmatpush1.msra.mxu0 0.0
    %665 = vmatprep.subr.mxu0 0.0
    %666 = vmatpush1.msra.mxu0 0.0
    %667 = vmatprep.subr.mxu0 0.0
    %668 = vmatpush1.msra.mxu0 0.0
    %669 = vmatprep.subr.mxu0 0.0
    %670 = vmatpush1.msra.mxu0 0.0
    %671 = vmatprep.subr.mxu0 0.0
    %672 = vmatpush1.msra.mxu0 0.0
    %673 = vmatprep.subr.mxu0 0.0
    %674 = vmatpush1.msra.mxu0 0.0
    %675 = vmatprep.subr.mxu0 0.0
    %676 = vmatpush1.msra.mxu0 0.0
    %677 = vmatprep.mubr.f32.mxu0 0.0
    %v678 = vand.u32 %v86, 4294901760
    %679 = vmatmul.mubr.f32.gmra.mrb[0].mxu0 %v678
    %v680 = vpop.f32.mrb[0].mxu0
    %v681 = vadd.f32 %v552, %v680
    %v682 = vpop.f32.mrb[0].mxu0
    %v683 = vadd.f32 %v554, %v682
    %684 = vmatprep.mubr.f32.mxu0 0.0
    %v685 = vand.u32 %v89, 4294901760
    %686 = vmatmul.mubr.f32.gmra.mrb[0].mxu0 %v685
    %v687 = vpop.f32.mrb[0].mxu0
    %v688 = vadd.f32 %v561, %v687
    %v689 = vpop.f32.mrb[0].mxu0
    %v690 = vadd.f32 %v563, %v689
    %691 = vdwg.mxu0
    %v692 = vand.u32 %v44, 4294901760
    %693 = vmatprep.subr.mxu0 %v692
    %v694 = vand.u32 %v43, 4294901760
    %695 = vmatpush1.msra.mxu0 %v694
    %v696 = vand.u32 %v47, 4294901760
    %697 = vmatprep.subr.mxu0 %v696
    %v698 = vand.u32 %v46, 4294901760
    %699 = vmatpush1.msra.mxu0 %v698
    %v700 = vand.u32 %v50, 4294901760
    %701 = vmatprep.subr.mxu0 %v700
    %v702 = vand.u32 %v49, 4294901760
    %703 = vmatpush1.msra.mxu0 %v702
    %v704 = vand.u32 %v53, 4294901760
    %705 = vmatprep.subr.mxu0 %v704
    %v706 = vand.u32 %v52, 4294901760
    %707 = vmatpush1.msra.mxu0 %v706
    %v708 = vand.u32 %v56, 4294901760
    %709 = vmatprep.subr.mxu0 %v708
    %v710 = vand.u32 %v55, 4294901760
    %711 = vmatpush1.msra.mxu0 %v710
    %v712 = vand.u32 %v59, 4294901760
    %713 = vmatprep.subr.mxu0 %v712
    %v714 = vand.u32 %v58, 4294901760
    %715 = vmatpush1.msra.mxu0 %v714
    %v716 = vand.u32 %v62, 4294901760
    %717 = vmatprep.subr.mxu0 %v716
    %v718 = vand.u32 %v61, 4294901760
    %719 = vmatpush1.msra.mxu0 %v718
    %v720 = vand.u32 %v65, 4294901760
    %721 = vmatprep.subr.mxu0 %v720
    %v722 = vand.u32 %v64, 4294901760
    %723 = vmatpush1.msra.mxu0 %v722
    %724 = vmatprep.subr.mxu0 0.0
    %725 = vmatpush1.msra.mxu0 0.0
    %726 = vmatprep.subr.mxu0 0.0
    %727 = vmatpush1.msra.mxu0 0.0
    %728 = vmatprep.subr.mxu0 0.0
    %729 = vmatpush1.msra.mxu0 0.0
    %730 = vmatprep.subr.mxu0 0.0
    %731 = vmatpush1.msra.mxu0 0.0
    %732 = vmatprep.subr.mxu0 0.0
    %733 = vmatpush1.msra.mxu0 0.0
    %734 = vmatprep.subr.mxu0 0.0
    %735 = vmatpush1.msra.mxu0 0.0
    %736 = vmatprep.subr.mxu0 0.0
    %737 = vmatpush1.msra.mxu0 0.0
    %738 = vmatprep.subr.mxu0 0.0
    %739 = vmatpush1.msra.mxu0 0.0
    %740 = vmatprep.subr.mxu0 0.0
    %741 = vmatpush1.msra.mxu0 0.0
    %742 = vmatprep.subr.mxu0 0.0
    %743 = vmatpush1.msra.mxu0 0.0
    %744 = vmatprep.subr.mxu0 0.0
    %745 = vmatpush1.msra.mxu0 0.0
    %746 = vmatprep.subr.mxu0 0.0
    %747 = vmatpush1.msra.mxu0 0.0
    %748 = vmatprep.subr.mxu0 0.0
    %749 = vmatpush1.msra.mxu0 0.0
    %750 = vmatprep.subr.mxu0 0.0
    %751 = vmatpush1.msra.mxu0 0.0
    %752 = vmatprep.subr.mxu0 0.0
    %753 = vmatpush1.msra.mxu0 0.0
    %754 = vmatprep.subr.mxu0 0.0
    %755 = vmatpush1.msra.mxu0 0.0
    %756 = vmatprep.subr.mxu0 0.0
    %757 = vmatpush1.msra.mxu0 0.0
    %758 = vmatprep.subr.mxu0 0.0
    %759 = vmatpush1.msra.mxu0 0.0
    %760 = vmatprep.subr.mxu0 0.0
    %761 = vmatpush1.msra.mxu0 0.0
    %762 = vmatprep.subr.mxu0 0.0
    %763 = vmatpush1.msra.mxu0 0.0
    %764 = vmatprep.subr.mxu0 0.0
    %765 = vmatpush1.msra.mxu0 0.0
    %766 = vmatprep.subr.mxu0 0.0
    %767 = vmatpush1.msra.mxu0 0.0
    %768 = vmatprep.subr.mxu0 0.0
    %769 = vmatpush1.msra.mxu0 0.0
    %770 = vmatprep.subr.mxu0 0.0
    %771 = vmatpush1.msra.mxu0 0.0
    %772 = vmatprep.mubr.f32.mxu0 0.0
    %v773 = vand.u32 %v86, 4294901760
    %774 = vmatmul.mubr.f32.gmra.mrb[0].mxu0 %v773
    %v775 = vpop.f32.mrb[0].mxu0
    %v776 = vadd.f32 %v681, %v775
    %v777 = vpop.f32.mrb[0].mxu0
    %v778 = vadd.f32 %v683, %v777
    %779 = vmatprep.mubr.f32.mxu0 0.0
    %v780 = vand.u32 %v89, 4294901760
    %781 = vmatmul.mubr.f32.gmra.mrb[0].mxu0 %v780
    %v782 = vpop.f32.mrb[0].mxu0
    %v783 = vadd.f32 %v688, %v782
    %v784 = vpop.f32.mrb[0].mxu0
    %v785 = vadd.f32 %v690, %v784
    %786 = vdwg.mxu0
    %787 = vmatprep.subr.mxu0 0.0
    %v788 = vand.u32 %v45, 4294901760
    %789 = vmatpush1.msra.mxu0 %v788
    %790 = vmatprep.subr.mxu0 0.0
    %v791 = vand.u32 %v48, 4294901760
    %792 = vmatpush1.msra.mxu0 %v791
    %793 = vmatprep.subr.mxu0 0.0
    %v794 = vand.u32 %v51, 4294901760
    %795 = vmatpush1.msra.mxu0 %v794
    %796 = vmatprep.subr.mxu0 0.0
    %v797 = vand.u32 %v54, 4294901760
    %798 = vmatpush1.msra.mxu0 %v797
    %799 = vmatprep.subr.mxu0 0.0
    %v800 = vand.u32 %v57, 4294901760
    %801 = vmatpush1.msra.mxu0 %v800
    %802 = vmatprep.subr.mxu0 0.0
    %v803 = vand.u32 %v60, 4294901760
    %804 = vmatpush1.msra.mxu0 %v803
    %805 = vmatprep.subr.mxu0 0.0
    %v806 = vand.u32 %v63, 4294901760
    %807 = vmatpush1.msra.mxu0 %v806
    %808 = vmatprep.subr.mxu0 0.0
    %v809 = vand.u32 %v66, 4294901760
    %810 = vmatpush1.msra.mxu0 %v809
    %811 = vmatprep.subr.mxu0 0.0
    %812 = vmatpush1.msra.mxu0 0.0
    %813 = vmatprep.subr.mxu0 0.0
    %814 = vmatpush1.msra.mxu0 0.0
    %815 = vmatprep.subr.mxu0 0.0
    %816 = vmatpush1.msra.mxu0 0.0
    %817 = vmatprep.subr.mxu0 0.0
    %818 = vmatpush1.msra.mxu0 0.0
    %819 = vmatprep.subr.mxu0 0.0
    %820 = vmatpush1.msra.mxu0 0.0
    %821 = vmatprep.subr.mxu0 0.0
    %822 = vmatpush1.msra.mxu0 0.0
    %823 = vmatprep.subr.mxu0 0.0
    %824 = vmatpush1.msra.mxu0 0.0
    %825 = vmatprep.subr.mxu0 0.0
    %826 = vmatpush1.msra.mxu0 0.0
    %827 = vmatprep.subr.mxu0 0.0
    %828 = vmatpush1.msra.mxu0 0.0
    %829 = vmatprep.subr.mxu0 0.0
    %830 = vmatpush1.msra.mxu0 0.0
    %831 = vmatprep.subr.mxu0 0.0
    %832 = vmatpush1.msra.mxu0 0.0
    %833 = vmatprep.subr.mxu0 0.0
    %834 = vmatpush1.msra.mxu0 0.0
    %835 = vmatprep.subr.mxu0 0.0
    %836 = vmatpush1.msra.mxu0 0.0
    %837 = vmatprep.subr.mxu0 0.0
    %838 = vmatpush1.msra.mxu0 0.0
    %839 = vmatprep.subr.mxu0 0.0
    %840 = vmatpush1.msra.mxu0 0.0
    %841 = vmatprep.subr.mxu0 0.0
    %842 = vmatpush1.msra.mxu0 0.0
    %843 = vmatprep.subr.mxu0 0.0
    %844 = vmatpush1.msra.mxu0 0.0
    %845 = vmatprep.subr.mxu0 0.0
    %846 = vmatpush1.msra.mxu0 0.0
    %847 = vmatprep.subr.mxu0 0.0
    %848 = vmatpush1.msra.mxu0 0.0
    %849 = vmatprep.subr.mxu0 0.0
    %850 = vmatpush1.msra.mxu0 0.0
    %851 = vmatprep.subr.mxu0 0.0
    %852 = vmatpush1.msra.mxu0 0.0
    %853 = vmatprep.subr.mxu0 0.0
    %854 = vmatpush1.msra.mxu0 0.0
    %855 = vmatprep.subr.mxu0 0.0
    %856 = vmatpush1.msra.mxu0 0.0
    %857 = vmatprep.subr.mxu0 0.0
    %858 = vmatpush1.msra.mxu0 0.0
    %859 = vmatprep.mubr.f32.mxu0 0.0
    %v860 = vand.u32 %v86, 4294901760
    %v861 = vsub.f32 %v86, %v860
    %v862 = vand.u32 %v861, 4294901760
    %v863 = vsub.f32 %v861, %v862
    %v864 = vand.u32 %v863, 4294901760
    %865 = vmatmul.mubr.f32.gmra.mrb[0].mxu0 %v864
    %v866 = vpop.f32.mrb[0].mxu0
    %v867 = vadd.f32 %v80, %v866
    %v868 = vpop.f32.mrb[0].mxu0
    %869 = vmatprep.mubr.f32.mxu0 0.0
    %v870 = vand.u32 %v89, 4294901760
    %v871 = vsub.f32 %v89, %v870
    %v872 = vand.u32 %v871, 4294901760
    %v873 = vsub.f32 %v871, %v872
    %v874 = vand.u32 %v873, 4294901760
    %875 = vmatmul.mubr.f32.gmra.mrb[0].mxu0 %v874
    %v876 = vpop.f32.mrb[0].mxu0
    %v877 = vadd.f32 %v80, %v876
    %v878 = vpop.f32.mrb[0].mxu0
    %879 = vdwg.mxu0
    %880 = vmatprep.subr.mxu0 0.0
    %v881 = vand.u32 %v45, 4294901760
    %v882 = vsub.f32 %v45, %v881
    %v883 = vand.u32 %v882, 4294901760
    %v884 = vsub.f32 %v882, %v883
    %v885 = vand.u32 %v884, 4294901760
    %886 = vmatpush1.msra.mxu0 %v885
    %887 = vmatprep.subr.mxu0 0.0
    %v888 = vand.u32 %v48, 4294901760
    %v889 = vsub.f32 %v48, %v888
    %v890 = vand.u32 %v889, 4294901760
    %v891 = vsub.f32 %v889, %v890
    %v892 = vand.u32 %v891, 4294901760
    %893 = vmatpush1.msra.mxu0 %v892
    %894 = vmatprep.subr.mxu0 0.0
    %v895 = vand.u32 %v51, 4294901760
    %v896 = vsub.f32 %v51, %v895
    %v897 = vand.u32 %v896, 4294901760
    %v898 = vsub.f32 %v896, %v897
    %v899 = vand.u32 %v898, 4294901760
    %900 = vmatpush1.msra.mxu0 %v899
    %901 = vmatprep.subr.mxu0 0.0
    %v902 = vand.u32 %v54, 4294901760
    %v903 = vsub.f32 %v54, %v902
    %v904 = vand.u32 %v903, 4294901760
    %v905 = vsub.f32 %v903, %v904
    %v906 = vand.u32 %v905, 4294901760
    %907 = vmatpush1.msra.mxu0 %v906
    %908 = vmatprep.subr.mxu0 0.0
    %v909 = vand.u32 %v57, 4294901760
    %v910 = vsub.f32 %v57, %v909
    %v911 = vand.u32 %v910, 4294901760
    %v912 = vsub.f32 %v910, %v911
    %v913 = vand.u32 %v912, 4294901760
    %914 = vmatpush1.msra.mxu0 %v913
    %915 = vmatprep.subr.mxu0 0.0
    %v916 = vand.u32 %v60, 4294901760
    %v917 = vsub.f32 %v60, %v916
    %v918 = vand.u32 %v917, 4294901760
    %v919 = vsub.f32 %v917, %v918
    %v920 = vand.u32 %v919, 4294901760
    %921 = vmatpush1.msra.mxu0 %v920
    %922 = vmatprep.subr.mxu0 0.0
    %v923 = vand.u32 %v63, 4294901760
    %v924 = vsub.f32 %v63, %v923
    %v925 = vand.u32 %v924, 4294901760
    %v926 = vsub.f32 %v924, %v925
    %v927 = vand.u32 %v926, 4294901760
    %928 = vmatpush1.msra.mxu0 %v927
    %929 = vmatprep.subr.mxu0 0.0
    %v930 = vand.u32 %v66, 4294901760
    %v931 = vsub.f32 %v66, %v930
    %v932 = vand.u32 %v931, 4294901760
    %v933 = vsub.f32 %v931, %v932
    %v934 = vand.u32 %v933, 4294901760
    %935 = vmatpush1.msra.mxu0 %v934
    %936 = vmatprep.subr.mxu0 0.0
    %937 = vmatpush1.msra.mxu0 0.0
    %938 = vmatprep.subr.mxu0 0.0
    %939 = vmatpush1.msra.mxu0 0.0
    %940 = vmatprep.subr.mxu0 0.0
    %941 = vmatpush1.msra.mxu0 0.0
    %942 = vmatprep.subr.mxu0 0.0
    %943 = vmatpush1.msra.mxu0 0.0
    %944 = vmatprep.subr.mxu0 0.0
    %945 = vmatpush1.msra.mxu0 0.0
    %946 = vmatprep.subr.mxu0 0.0
    %947 = vmatpush1.msra.mxu0 0.0
    %948 = vmatprep.subr.mxu0 0.0
    %949 = vmatpush1.msra.mxu0 0.0
    %950 = vmatprep.subr.mxu0 0.0
    %951 = vmatpush1.msra.mxu0 0.0
    %952 = vmatprep.subr.mxu0 0.0
    %953 = vmatpush1.msra.mxu0 0.0
    %954 = vmatprep.subr.mxu0 0.0
    %955 = vmatpush1.msra.mxu0 0.0
    %956 = vmatprep.subr.mxu0 0.0
    %957 = vmatpush1.msra.mxu0 0.0
    %958 = vmatprep.subr.mxu0 0.0
    %959 = vmatpush1.msra.mxu0 0.0
    %960 = vmatprep.subr.mxu0 0.0
    %961 = vmatpush1.msra.mxu0 0.0
    %962 = vmatprep.subr.mxu0 0.0
    %963 = vmatpush1.msra.mxu0 0.0
    %964 = vmatprep.subr.mxu0 0.0
    %965 = vmatpush1.msra.mxu0 0.0
    %966 = vmatprep.subr.mxu0 0.0
    %967 = vmatpush1.msra.mxu0 0.0
    %968 = vmatprep.subr.mxu0 0.0
    %969 = vmatpush1.msra.mxu0 0.0
    %970 = vmatprep.subr.mxu0 0.0
    %971 = vmatpush1.msra.mxu0 0.0
    %972 = vmatprep.subr.mxu0 0.0
    %973 = vmatpush1.msra.mxu0 0.0
    %974 = vmatprep.subr.mxu0 0.0
    %975 = vmatpush1.msra.mxu0 0.0
    %976 = vmatprep.subr.mxu0 0.0
    %977 = vmatpush1.msra.mxu0 0.0
    %978 = vmatprep.subr.mxu0 0.0
    %979 = vmatpush1.msra.mxu0 0.0
    %980 = vmatprep.subr.mxu0 0.0
    %981 = vmatpush1.msra.mxu0 0.0
    %982 = vmatprep.subr.mxu0 0.0
    %983 = vmatpush1.msra.mxu0 0.0
    %984 = vmatprep.mubr.f32.mxu0 0.0
    %v985 = vand.u32 %v86, 4294901760
    %986 = vmatmul.mubr.f32.gmra.mrb[0].mxu0 %v985
    %v987 = vpop.f32.mrb[0].mxu0
    %v988 = vadd.f32 %v867, %v987
    %v989 = vpop.f32.mrb[0].mxu0
    %990 = vmatprep.mubr.f32.mxu0 0.0
    %v991 = vand.u32 %v89, 4294901760
    %992 = vmatmul.mubr.f32.gmra.mrb[0].mxu0 %v991
    %v993 = vpop.f32.mrb[0].mxu0
    %v994 = vadd.f32 %v877, %v993
    %v995 = vpop.f32.mrb[0].mxu0
    %996 = vdwg.mxu0
    %997 = vmatprep.subr.mxu0 0.0
    %v998 = vand.u32 %v45, 4294901760
    %v999 = vsub.f32 %v45, %v998
    %1000 = vmatpush1.msra.mxu0 %v999
    %1001 = vmatprep.subr.mxu0 0.0
    %v1002 = vand.u32 %v48, 4294901760
    %v1003 = vsub.f32 %v48, %v1002
    %1004 = vmatpush1.msra.mxu0 %v1003
    %1005 = vmatprep.subr.mxu0 0.0
    %v1006 = vand.u32 %v51, 4294901760
    %v1007 = vsub.f32 %v51, %v1006
    %1008 = vmatpush1.msra.mxu0 %v1007
    %1009 = vmatprep.subr.mxu0 0.0
    %v1010 = vand.u32 %v54, 4294901760
    %v1011 = vsub.f32 %v54, %v1010
    %1012 = vmatpush1.msra.mxu0 %v1011
    %1013 = vmatprep.subr.mxu0 0.0
    %v1014 = vand.u32 %v57, 4294901760
    %v1015 = vsub.f32 %v57, %v1014
    %1016 = vmatpush1.msra.mxu0 %v1015
    %1017 = vmatprep.subr.mxu0 0.0
    %v1018 = vand.u32 %v60, 4294901760
    %v1019 = vsub.f32 %v60, %v1018
    %1020 = vmatpush1.msra.mxu0 %v1019
    %1021 = vmatprep.subr.mxu0 0.0
    %v1022 = vand.u32 %v63, 4294901760
    %v1023 = vsub.f32 %v63, %v1022
    %1024 = vmatpush1.msra.mxu0 %v1023
    %1025 = vmatprep.subr.mxu0 0.0
    %v1026 = vand.u32 %v66, 4294901760
    %v1027 = vsub.f32 %v66, %v1026
    %1028 = vmatpush1.msra.mxu0 %v1027
    %1029 = vmatprep.subr.mxu0 0.0
    %1030 = vmatpush1.msra.mxu0 0.0
    %1031 = vmatprep.subr.mxu0 0.0
    %1032 = vmatpush1.msra.mxu0 0.0
    %1033 = vmatprep.subr.mxu0 0.0
    %1034 = vmatpush1.msra.mxu0 0.0
    %1035 = vmatprep.subr.mxu0 0.0
    %1036 = vmatpush1.msra.mxu0 0.0
    %1037 = vmatprep.subr.mxu0 0.0
    %1038 = vmatpush1.msra.mxu0 0.0
    %1039 = vmatprep.subr.mxu0 0.0
    %1040 = vmatpush1.msra.mxu0 0.0
    %1041 = vmatprep.subr.mxu0 0.0
    %1042 = vmatpush1.msra.mxu0 0.0
    %1043 = vmatprep.subr.mxu0 0.0
    %1044 = vmatpush1.msra.mxu0 0.0
    %1045 = vmatprep.subr.mxu0 0.0
    %1046 = vmatpush1.msra.mxu0 0.0
    %1047 = vmatprep.subr.mxu0 0.0
    %1048 = vmatpush1.msra.mxu0 0.0
    %1049 = vmatprep.subr.mxu0 0.0
    %1050 = vmatpush1.msra.mxu0 0.0
    %1051 = vmatprep.subr.mxu0 0.0
    %1052 = vmatpush1.msra.mxu0 0.0
    %1053 = vmatprep.subr.mxu0 0.0
    %1054 = vmatpush1.msra.mxu0 0.0
    %1055 = vmatprep.subr.mxu0 0.0
    %1056 = vmatpush1.msra.mxu0 0.0
    %1057 = vmatprep.subr.mxu0 0.0
    %1058 = vmatpush1.msra.mxu0 0.0
    %1059 = vmatprep.subr.mxu0 0.0
    %1060 = vmatpush1.msra.mxu0 0.0
    %1061 = vmatprep.subr.mxu0 0.0
    %1062 = vmatpush1.msra.mxu0 0.0
    %1063 = vmatprep.subr.mxu0 0.0
    %1064 = vmatpush1.msra.mxu0 0.0
    %1065 = vmatprep.subr.mxu0 0.0
    %1066 = vmatpush1.msra.mxu0 0.0
    %1067 = vmatprep.subr.mxu0 0.0
    %1068 = vmatpush1.msra.mxu0 0.0
    %1069 = vmatprep.subr.mxu0 0.0
    %1070 = vmatpush1.msra.mxu0 0.0
    %1071 = vmatprep.subr.mxu0 0.0
    %1072 = vmatpush1.msra.mxu0 0.0
    %1073 = vmatprep.subr.mxu0 0.0
    %1074 = vmatpush1.msra.mxu0 0.0
    %1075 = vmatprep.subr.mxu0 0.0
    %1076 = vmatpush1.msra.mxu0 0.0
    %1077 = vmatprep.mubr.f32.mxu0 0.0
    %v1078 = vand.u32 %v86, 4294901760
    %v1079 = vsub.f32 %v86, %v1078
    %1080 = vmatmul.mubr.f32.gmra.mrb[0].mxu0 %v1079
    %v1081 = vpop.f32.mrb[0].mxu0
    %v1082 = vadd.f32 %v988, %v1081
    %v1083 = vpop.f32.mrb[0].mxu0
    %1084 = vmatprep.mubr.f32.mxu0 0.0
    %v1085 = vand.u32 %v89, 4294901760
    %v1086 = vsub.f32 %v89, %v1085
    %1087 = vmatmul.mubr.f32.gmra.mrb[0].mxu0 %v1086
    %v1088 = vpop.f32.mrb[0].mxu0
    %v1089 = vadd.f32 %v994, %v1088
    %v1090 = vpop.f32.mrb[0].mxu0
    %1091 = vdwg.mxu0
    %1092 = vmatprep.subr.mxu0 0.0
    %v1093 = vand.u32 %v45, 4294901760
    %1094 = vmatpush1.msra.mxu0 %v1093
    %1095 = vmatprep.subr.mxu0 0.0
    %v1096 = vand.u32 %v48, 4294901760
    %1097 = vmatpush1.msra.mxu0 %v1096
    %1098 = vmatprep.subr.mxu0 0.0
    %v1099 = vand.u32 %v51, 4294901760
    %1100 = vmatpush1.msra.mxu0 %v1099
    %1101 = vmatprep.subr.mxu0 0.0
    %v1102 = vand.u32 %v54, 4294901760
    %1103 = vmatpush1.msra.mxu0 %v1102
    %1104 = vmatprep.subr.mxu0 0.0
    %v1105 = vand.u32 %v57, 4294901760
    %1106 = vmatpush1.msra.mxu0 %v1105
    %1107 = vmatprep.subr.mxu0 0.0
    %v1108 = vand.u32 %v60, 4294901760
    %1109 = vmatpush1.msra.mxu0 %v1108
    %1110 = vmatprep.subr.mxu0 0.0
    %v1111 = vand.u32 %v63, 4294901760
    %1112 = vmatpush1.msra.mxu0 %v1111
    %1113 = vmatprep.subr.mxu0 0.0
    %v1114 = vand.u32 %v66, 4294901760
    %1115 = vmatpush1.msra.mxu0 %v1114
    %1116 = vmatprep.subr.mxu0 0.0
    %1117 = vmatpush1.msra.mxu0 0.0
    %1118 = vmatprep.subr.mxu0 0.0
    %1119 = vmatpush1.msra.mxu0 0.0
    %1120 = vmatprep.subr.mxu0 0.0
    %1121 = vmatpush1.msra.mxu0 0.0
    %1122 = vmatprep.subr.mxu0 0.0
    %1123 = vmatpush1.msra.mxu0 0.0
    %1124 = vmatprep.subr.mxu0 0.0
    %1125 = vmatpush1.msra.mxu0 0.0
    %1126 = vmatprep.subr.mxu0 0.0
    %1127 = vmatpush1.msra.mxu0 0.0
    %1128 = vmatprep.subr.mxu0 0.0
    %1129 = vmatpush1.msra.mxu0 0.0
    %1130 = vmatprep.subr.mxu0 0.0
    %1131 = vmatpush1.msra.mxu0 0.0
    %1132 = vmatprep.subr.mxu0 0.0
    %1133 = vmatpush1.msra.mxu0 0.0
    %1134 = vmatprep.subr.mxu0 0.0
    %1135 = vmatpush1.msra.mxu0 0.0
    %1136 = vmatprep.subr.mxu0 0.0
    %1137 = vmatpush1.msra.mxu0 0.0
    %1138 = vmatprep.subr.mxu0 0.0
    %1139 = vmatpush1.msra.mxu0 0.0
    %1140 = vmatprep.subr.mxu0 0.0
    %1141 = vmatpush1.msra.mxu0 0.0
    %1142 = vmatprep.subr.mxu0 0.0
    %1143 = vmatpush1.msra.mxu0 0.0
    %1144 = vmatprep.subr.mxu0 0.0
    %1145 = vmatpush1.msra.mxu0 0.0
    %1146 = vmatprep.subr.mxu0 0.0
    %1147 = vmatpush1.msra.mxu0 0.0
    %1148 = vmatprep.subr.mxu0 0.0
    %1149 = vmatpush1.msra.mxu0 0.0
    %1150 = vmatprep.subr.mxu0 0.0
    %1151 = vmatpush1.msra.mxu0 0.0
    %1152 = vmatprep.subr.mxu0 0.0
    %1153 = vmatpush1.msra.mxu0 0.0
    %1154 = vmatprep.subr.mxu0 0.0
    %1155 = vmatpush1.msra.mxu0 0.0
    %1156 = vmatprep.subr.mxu0 0.0
    %1157 = vmatpush1.msra.mxu0 0.0
    %1158 = vmatprep.subr.mxu0 0.0
    %1159 = vmatpush1.msra.mxu0 0.0
    %1160 = vmatprep.subr.mxu0 0.0
    %1161 = vmatpush1.msra.mxu0 0.0
    %1162 = vmatprep.subr.mxu0 0.0
    %1163 = vmatpush1.msra.mxu0 0.0
    %1164 = vmatprep.mubr.f32.mxu0 0.0
    %v1165 = vand.u32 %v86, 4294901760
    %v1166 = vsub.f32 %v86, %v1165
    %v1167 = vand.u32 %v1166, 4294901760
    %1168 = vmatmul.mubr.f32.gmra.mrb[0].mxu0 %v1167
    %v1169 = vpop.f32.mrb[0].mxu0
    %v1170 = vadd.f32 %v1082, %v1169
    %v1171 = vpop.f32.mrb[0].mxu0
    %1172 = vmatprep.mubr.f32.mxu0 0.0
    %v1173 = vand.u32 %v89, 4294901760
    %v1174 = vsub.f32 %v89, %v1173
    %v1175 = vand.u32 %v1174, 4294901760
    %1176 = vmatmul.mubr.f32.gmra.mrb[0].mxu0 %v1175
    %v1177 = vpop.f32.mrb[0].mxu0
    %v1178 = vadd.f32 %v1089, %v1177
    %v1179 = vpop.f32.mrb[0].mxu0
    %1180 = vdwg.mxu0
    %1181 = vmatprep.subr.mxu0 0.0
    %v1182 = vand.u32 %v45, 4294901760
    %v1183 = vsub.f32 %v45, %v1182
    %v1184 = vand.u32 %v1183, 4294901760
    %1185 = vmatpush1.msra.mxu0 %v1184
    %1186 = vmatprep.subr.mxu0 0.0
    %v1187 = vand.u32 %v48, 4294901760
    %v1188 = vsub.f32 %v48, %v1187
    %v1189 = vand.u32 %v1188, 4294901760
    %1190 = vmatpush1.msra.mxu0 %v1189
    %1191 = vmatprep.subr.mxu0 0.0
    %v1192 = vand.u32 %v51, 4294901760
    %v1193 = vsub.f32 %v51, %v1192
    %v1194 = vand.u32 %v1193, 4294901760
    %1195 = vmatpush1.msra.mxu0 %v1194
    %1196 = vmatprep.subr.mxu0 0.0
    %v1197 = vand.u32 %v54, 4294901760
    %v1198 = vsub.f32 %v54, %v1197
    %v1199 = vand.u32 %v1198, 4294901760
    %1200 = vmatpush1.msra.mxu0 %v1199
    %1201 = vmatprep.subr.mxu0 0.0
    %v1202 = vand.u32 %v57, 4294901760
    %v1203 = vsub.f32 %v57, %v1202
    %v1204 = vand.u32 %v1203, 4294901760
    %1205 = vmatpush1.msra.mxu0 %v1204
    %1206 = vmatprep.subr.mxu0 0.0
    %v1207 = vand.u32 %v60, 4294901760
    %v1208 = vsub.f32 %v60, %v1207
    %v1209 = vand.u32 %v1208, 4294901760
    %1210 = vmatpush1.msra.mxu0 %v1209
    %1211 = vmatprep.subr.mxu0 0.0
    %v1212 = vand.u32 %v63, 4294901760
    %v1213 = vsub.f32 %v63, %v1212
    %v1214 = vand.u32 %v1213, 4294901760
    %1215 = vmatpush1.msra.mxu0 %v1214
    %1216 = vmatprep.subr.mxu0 0.0
    %v1217 = vand.u32 %v66, 4294901760
    %v1218 = vsub.f32 %v66, %v1217
    %v1219 = vand.u32 %v1218, 4294901760
    %1220 = vmatpush1.msra.mxu0 %v1219
    %1221 = vmatprep.subr.mxu0 0.0
    %1222 = vmatpush1.msra.mxu0 0.0
    %1223 = vmatprep.subr.mxu0 0.0
    %1224 = vmatpush1.msra.mxu0 0.0
    %1225 = vmatprep.subr.mxu0 0.0
    %1226 = vmatpush1.msra.mxu0 0.0
    %1227 = vmatprep.subr.mxu0 0.0
    %1228 = vmatpush1.msra.mxu0 0.0
    %1229 = vmatprep.subr.mxu0 0.0
    %1230 = vmatpush1.msra.mxu0 0.0
    %1231 = vmatprep.subr.mxu0 0.0
    %1232 = vmatpush1.msra.mxu0 0.0
    %1233 = vmatprep.subr.mxu0 0.0
    %1234 = vmatpush1.msra.mxu0 0.0
    %1235 = vmatprep.subr.mxu0 0.0
    %1236 = vmatpush1.msra.mxu0 0.0
    %1237 = vmatprep.subr.mxu0 0.0
    %1238 = vmatpush1.msra.mxu0 0.0
    %1239 = vmatprep.subr.mxu0 0.0
    %1240 = vmatpush1.msra.mxu0 0.0
    %1241 = vmatprep.subr.mxu0 0.0
    %1242 = vmatpush1.msra.mxu0 0.0
    %1243 = vmatprep.subr.mxu0 0.0
    %1244 = vmatpush1.msra.mxu0 0.0
    %1245 = vmatprep.subr.mxu0 0.0
    %1246 = vmatpush1.msra.mxu0 0.0
    %1247 = vmatprep.subr.mxu0 0.0
    %1248 = vmatpush1.msra.mxu0 0.0
    %1249 = vmatprep.subr.mxu0 0.0
    %1250 = vmatpush1.msra.mxu0 0.0
    %1251 = vmatprep.subr.mxu0 0.0
    %1252 = vmatpush1.msra.mxu0 0.0
    %1253 = vmatprep.subr.mxu0 0.0
    %1254 = vmatpush1.msra.mxu0 0.0
    %1255 = vmatprep.subr.mxu0 0.0
    %1256 = vmatpush1.msra.mxu0 0.0
    %1257 = vmatprep.subr.mxu0 0.0
    %1258 = vmatpush1.msra.mxu0 0.0
    %1259 = vmatprep.subr.mxu0 0.0
    %1260 = vmatpush1.msra.mxu0 0.0
    %1261 = vmatprep.subr.mxu0 0.0
    %1262 = vmatpush1.msra.mxu0 0.0
    %1263 = vmatprep.subr.mxu0 0.0
    %1264 = vmatpush1.msra.mxu0 0.0
    %1265 = vmatprep.subr.mxu0 0.0
    %1266 = vmatpush1.msra.mxu0 0.0
    %1267 = vmatprep.subr.mxu0 0.0
    %1268 = vmatpush1.msra.mxu0 0.0
    %1269 = vmatprep.mubr.f32.mxu0 0.0
    %v1270 = vand.u32 %v86, 4294901760
    %1271 = vmatmul.mubr.f32.gmra.mrb[0].mxu0 %v1270
    %v1272 = vpop.f32.mrb[0].mxu0
    %v1273 = vadd.f32 %v1170, %v1272
    %v1274 = vpop.f32.mrb[0].mxu0
    %1275 = vmatprep.mubr.f32.mxu0 0.0
    %v1276 = vand.u32 %v89, 4294901760
    %1277 = vmatmul.mubr.f32.gmra.mrb[0].mxu0 %v1276
    %v1278 = vpop.f32.mrb[0].mxu0
    %v1279 = vadd.f32 %v1178, %v1278
    %v1280 = vpop.f32.mrb[0].mxu0
    %1281 = vdwg.mxu0
    %1282 = vmatprep.subr.mxu0 0.0
    %v1283 = vand.u32 %v45, 4294901760
    %1284 = vmatpush1.msra.mxu0 %v1283
    %1285 = vmatprep.subr.mxu0 0.0
    %v1286 = vand.u32 %v48, 4294901760
    %1287 = vmatpush1.msra.mxu0 %v1286
    %1288 = vmatprep.subr.mxu0 0.0
    %v1289 = vand.u32 %v51, 4294901760
    %1290 = vmatpush1.msra.mxu0 %v1289
    %1291 = vmatprep.subr.mxu0 0.0
    %v1292 = vand.u32 %v54, 4294901760
    %1293 = vmatpush1.msra.mxu0 %v1292
    %1294 = vmatprep.subr.mxu0 0.0
    %v1295 = vand.u32 %v57, 4294901760
    %1296 = vmatpush1.msra.mxu0 %v1295
    %1297 = vmatprep.subr.mxu0 0.0
    %v1298 = vand.u32 %v60, 4294901760
    %1299 = vmatpush1.msra.mxu0 %v1298
    %1300 = vmatprep.subr.mxu0 0.0
    %v1301 = vand.u32 %v63, 4294901760
    %1302 = vmatpush1.msra.mxu0 %v1301
    %1303 = vmatprep.subr.mxu0 0.0
    %v1304 = vand.u32 %v66, 4294901760
    %1305 = vmatpush1.msra.mxu0 %v1304
    %1306 = vmatprep.subr.mxu0 0.0
    %1307 = vmatpush1.msra.mxu0 0.0
    %1308 = vmatprep.subr.mxu0 0.0
    %1309 = vmatpush1.msra.mxu0 0.0
    %1310 = vmatprep.subr.mxu0 0.0
    %1311 = vmatpush1.msra.mxu0 0.0
    %1312 = vmatprep.subr.mxu0 0.0
    %1313 = vmatpush1.msra.mxu0 0.0
    %1314 = vmatprep.subr.mxu0 0.0
    %1315 = vmatpush1.msra.mxu0 0.0
    %1316 = vmatprep.subr.mxu0 0.0
    %1317 = vmatpush1.msra.mxu0 0.0
    %1318 = vmatprep.subr.mxu0 0.0
    %1319 = vmatpush1.msra.mxu0 0.0
    %1320 = vmatprep.subr.mxu0 0.0
    %1321 = vmatpush1.msra.mxu0 0.0
    %1322 = vmatprep.subr.mxu0 0.0
    %1323 = vmatpush1.msra.mxu0 0.0
    %1324 = vmatprep.subr.mxu0 0.0
    %1325 = vmatpush1.msra.mxu0 0.0
    %1326 = vmatprep.subr.mxu0 0.0
    %1327 = vmatpush1.msra.mxu0 0.0
    %1328 = vmatprep.subr.mxu0 0.0
    %1329 = vmatpush1.msra.mxu0 0.0
    %1330 = vmatprep.subr.mxu0 0.0
    %1331 = vmatpush1.msra.mxu0 0.0
    %1332 = vmatprep.subr.mxu0 0.0
    %1333 = vmatpush1.msra.mxu0 0.0
    %1334 = vmatprep.subr.mxu0 0.0
    %1335 = vmatpush1.msra.mxu0 0.0
    %1336 = vmatprep.subr.mxu0 0.0
    %1337 = vmatpush1.msra.mxu0 0.0
    %1338 = vmatprep.subr.mxu0 0.0
    %1339 = vmatpush1.msra.mxu0 0.0
    %1340 = vmatprep.subr.mxu0 0.0
    %1341 = vmatpush1.msra.mxu0 0.0
    %1342 = vmatprep.subr.mxu0 0.0
    %1343 = vmatpush1.msra.mxu0 0.0
    %1344 = vmatprep.subr.mxu0 0.0
    %1345 = vmatpush1.msra.mxu0 0.0
    %1346 = vmatprep.subr.mxu0 0.0
    %1347 = vmatpush1.msra.mxu0 0.0
    %1348 = vmatprep.subr.mxu0 0.0
    %1349 = vmatpush1.msra.mxu0 0.0
    %1350 = vmatprep.subr.mxu0 0.0
    %1351 = vmatpush1.msra.mxu0 0.0
    %1352 = vmatprep.subr.mxu0 0.0
    %1353 = vmatpush1.msra.mxu0 0.0
    %1354 = vmatprep.mubr.f32.mxu0 0.0
    %v1355 = vand.u32 %v86, 4294901760
    %1356 = vmatmul.mubr.f32.gmra.mrb[0].mxu0 %v1355
    %v1357 = vpop.f32.mrb[0].mxu0
    %v1358 = vadd.f32 %v1273, %v1357
    %v1359 = vpop.f32.mrb[0].mxu0
    %1360 = vmatprep.mubr.f32.mxu0 0.0
    %v1361 = vand.u32 %v89, 4294901760
    %1362 = vmatmul.mubr.f32.gmra.mrb[0].mxu0 %v1361
    %v1363 = vpop.f32.mrb[0].mxu0
    %v1364 = vadd.f32 %v1279, %v1363
    %v1365 = vpop.f32.mrb[0].mxu0
    %1366 = vdwg.mxu0
    %v1367 = vld [vmem:[%s3] sm:$0xff]
    %v1368 = vld [vmem:[%s3 + $0x8] sm:$0xf]
    %v1369 = vld [vmem:[%s3 + $0xc] sm:$0xff]
    %v1370 = vld [vmem:[%s3 + $0x14] sm:$0xf]
    %v1371 = vld [vmem:[%s3 + $0x18] sm:$0xff]
    %v1372 = vld [vmem:[%s3 + $0x20] sm:$0xf]
    %v1373 = vld [vmem:[%s3 + $0x24] sm:$0xff]
    %v1374 = vld [vmem:[%s3 + $0x2c] sm:$0xf]
    %v1375 = vld [vmem:[%s3 + $0x30] sm:$0xff]
    %v1376 = vld [vmem:[%s3 + $0x38] sm:$0xf]
    %v1377 = vld [vmem:[%s3 + $0x3c] sm:$0xff]
    %v1378 = vld [vmem:[%s3 + $0x44] sm:$0xf]
    %v1379 = vld [vmem:[%s3 + $0x48] sm:$0xff]
    %v1380 = vld [vmem:[%s3 + $0x50] sm:$0xf]
    %v1381 = vld [vmem:[%s3 + $0x54] sm:$0xff]
    %v1382 = vld [vmem:[%s3 + $0x5c] sm:$0xf]
    %v1383 = vld [vmem:[%s3 + $0x60] sm:$0xff]
    %v1384 = vld [vmem:[%s3 + $0x68] sm:$0xf]
    %v1385 = vld [vmem:[%s3 + $0x6c] sm:$0xff]
    %v1386 = vld [vmem:[%s3 + $0x74] sm:$0xf]
    %v1387 = vld [vmem:[%s3 + $0x78] sm:$0xff]
    %v1388 = vld [vmem:[%s3 + $0x80] sm:$0xf]
    %v1389 = vld [vmem:[%s3 + $0x84] sm:$0xff]
    %v1390 = vld [vmem:[%s3 + $0x8c] sm:$0xf]
    %v1391 = vld [vmem:[%s3 + $0x90] sm:$0xff]
    %v1392 = vld [vmem:[%s3 + $0x98] sm:$0xf]
    %v1393 = vld [vmem:[%s3 + $0x9c] sm:$0xff]
    %v1394 = vld [vmem:[%s3 + $0xa4] sm:$0xf]
    %v1395 = vld [vmem:[%s3 + $0xa8] sm:$0xff]
    %v1396 = vld [vmem:[%s3 + $0xb0] sm:$0xf]
    %v1397 = vld [vmem:[%s3 + $0xb4] sm:$0xff]
    %v1398 = vld [vmem:[%s3 + $0xbc] sm:$0xf]
    %v1399 = vld [vmem:[#allocation3] sm:$0xff]
    %v1400 = vld [vmem:[#allocation3 + $0x8] sm:$0xf]
    %v1401 = vld [vmem:[#allocation3 + $0xc] sm:$0xff]
    %v1402 = vld [vmem:[#allocation3 + $0x14] sm:$0xf]
    %v1403 = vld [vmem:[#allocation3 + $0x18] sm:$0xff]
    %v1404 = vld [vmem:[#allocation3 + $0x20] sm:$0xf]
    %v1405 = vld [vmem:[#allocation3 + $0x24] sm:$0xff]
    %v1406 = vld [vmem:[#allocation3 + $0x2c] sm:$0xf]
    %v1407 = vld [vmem:[#allocation3 + $0x30] sm:$0xff]
    %v1408 = vld [vmem:[#allocation3 + $0x38] sm:$0xf]
    %v1409 = vld [vmem:[#allocation3 + $0x3c] sm:$0xff]
    %v1410 = vld [vmem:[#allocation3 + $0x44] sm:$0xf]
    %v1411 = vld [vmem:[#allocation3 + $0x48] sm:$0xff]
    %v1412 = vld [vmem:[#allocation3 + $0x50] sm:$0xf]
    %v1413 = vld [vmem:[#allocation3 + $0x54] sm:$0xff]
    %v1414 = vld [vmem:[#allocation3 + $0x5c] sm:$0xf]
    %v1415 = vld [vmem:[#allocation3 + $0x60] sm:$0xff]
    %v1416 = vld [vmem:[#allocation3 + $0x68] sm:$0xf]
    %v1417 = vld [vmem:[#allocation3 + $0x6c] sm:$0xff]
    %v1418 = vld [vmem:[#allocation3 + $0x74] sm:$0xf]
    %v1419 = vld [vmem:[#allocation3 + $0x78] sm:$0xff]
    %v1420 = vld [vmem:[#allocation3 + $0x80] sm:$0xf]
    %v1421 = vld [vmem:[#allocation3 + $0x84] sm:$0xff]
    %v1422 = vld [vmem:[#allocation3 + $0x8c] sm:$0xf]
    %v1423 = vld [vmem:[#allocation3 + $0x90] sm:$0xff]
    %v1424 = vld [vmem:[#allocation3 + $0x98] sm:$0xf]
    %v1425 = vld [vmem:[#allocation3 + $0x9c] sm:$0xff]
    %v1426 = vld [vmem:[#allocation3 + $0xa4] sm:$0xf]
    %v1427 = vld [vmem:[#allocation3 + $0xa8] sm:$0xff]
    %v1428 = vld [vmem:[#allocation3 + $0xb0] sm:$0xf]
    %v1429 = vld [vmem:[#allocation3 + $0xb4] sm:$0xff]
    %v1430 = vld [vmem:[#allocation3 + $0xbc] sm:$0xf]
    %v1431 = vld [vmem:[%s5] sm:$0x1]
    %v1433 = vlaneseq
    %v1434 = vshrl.u32 %v1433, 7
    %v1435 = vsub.s32 0, %v1434
    %v1436 = vrot.slane %v1431, %v1435
    %v1470 = vunpack.c.l.b16 %v1399
    %v1471 = vunpack.c.h.b16 %v1399
    %v1472 = vunpack.c.l.b16 %v1400
    %v1473 = vunpack.c.l.b16 %v1401
    %v1474 = vunpack.c.h.b16 %v1401
    %v1475 = vunpack.c.l.b16 %v1402
    %v1476 = vunpack.c.l.b16 %v1403
    %v1477 = vunpack.c.h.b16 %v1403
    %v1478 = vunpack.c.l.b16 %v1404
    %v1479 = vunpack.c.l.b16 %v1405
    %v1480 = vunpack.c.h.b16 %v1405
    %v1481 = vunpack.c.l.b16 %v1406
    %v1482 = vunpack.c.l.b16 %v1407
    %v1483 = vunpack.c.h.b16 %v1407
    %v1484 = vunpack.c.l.b16 %v1408
    %v1485 = vunpack.c.l.b16 %v1409
    %v1486 = vunpack.c.h.b16 %v1409
    %v1487 = vunpack.c.l.b16 %v1410
    %v1488 = vunpack.c.l.b16 %v1411
    %v1489 = vunpack.c.h.b16 %v1411
    %v1490 = vunpack.c.l.b16 %v1412
    %v1491 = vunpack.c.l.b16 %v1413
    %v1492 = vunpack.c.h.b16 %v1413
    %v1493 = vunpack.c.l.b16 %v1414
    %v1494 = vunpack.c.l.b16 %v1415
    %v1495 = vunpack.c.h.b16 %v1415
    %v1496 = vunpack.c.l.b16 %v1416
    %v1497 = vunpack.c.l.b16 %v1417
    %v1498 = vunpack.c.h.b16 %v1417
    %v1499 = vunpack.c.l.b16 %v1418
    %v1500 = vunpack.c.l.b16 %v1419
    %v1501 = vunpack.c.h.b16 %v1419
    %v1502 = vunpack.c.l.b16 %v1420
    %v1503 = vunpack.c.l.b16 %v1421
    %v1504 = vunpack.c.h.b16 %v1421
    %v1505 = vunpack.c.l.b16 %v1422
    %v1506 = vunpack.c.l.b16 %v1423
    %v1507 = vunpack.c.h.b16 %v1423
    %v1508 = vunpack.c.l.b16 %v1424
    %v1509 = vunpack.c.l.b16 %v1425
    %v1510 = vunpack.c.h.b16 %v1425
    %v1511 = vunpack.c.l.b16 %v1426
    %v1512 = vunpack.c.l.b16 %v1427
    %v1513 = vunpack.c.h.b16 %v1427
    %v1514 = vunpack.c.l.b16 %v1428
    %v1515 = vunpack.c.l.b16 %v1429
    %v1516 = vunpack.c.h.b16 %v1429
    %v1517 = vunpack.c.l.b16 %v1430
    %v1518 = vpack.c.b16 %v1473, %v1470
    %v1519 = vpack.c.b16 %v1474, %v1471
    %v1520 = vpack.c.b16 %v1475, %v1472
    %v1521 = vpack.c.b16 %v1479, %v1476
    %v1522 = vpack.c.b16 %v1480, %v1477
    %v1523 = vpack.c.b16 %v1481, %v1478
    %v1524 = vpack.c.b16 %v1485, %v1482
    %v1525 = vpack.c.b16 %v1486, %v1483
    %v1526 = vpack.c.b16 %v1487, %v1484
    %v1527 = vpack.c.b16 %v1491, %v1488
    %v1528 = vpack.c.b16 %v1492, %v1489
    %v1529 = vpack.c.b16 %v1493, %v1490
    %v1530 = vpack.c.b16 %v1497, %v1494
    %v1531 = vpack.c.b16 %v1498, %v1495
    %v1532 = vpack.c.b16 %v1499, %v1496
    %v1533 = vpack.c.b16 %v1503, %v1500
    %v1534 = vpack.c.b16 %v1504, %v1501
    %v1535 = vpack.c.b16 %v1505, %v1502
    %v1536 = vpack.c.b16 %v1509, %v1506
    %v1537 = vpack.c.b16 %v1510, %v1507
    %v1538 = vpack.c.b16 %v1511, %v1508
    %v1539 = vpack.c.b16 %v1515, %v1512
    %v1540 = vpack.c.b16 %v1516, %v1513
    %v1541 = vpack.c.b16 %v1517, %v1514
    %1566 = vmatprep.subr.bf16.mxu0 %v1519
    %1567 = vmatpush1.bf16.msra.mxu0 %v1518
    %1568 = vmatprep.subr.bf16.mxu0 %v1522
    %1569 = vmatpush1.bf16.msra.mxu0 %v1521
    %1570 = vmatprep.subr.bf16.mxu0 %v1525
    %1571 = vmatpush1.bf16.msra.mxu0 %v1524
    %1572 = vmatprep.subr.bf16.mxu0 %v1528
    %1573 = vmatpush1.bf16.msra.mxu0 %v1527
    %1574 = vmatprep.subr.bf16.mxu0 %v1531
    %1575 = vmatpush1.bf16.msra.mxu0 %v1530
    %1576 = vmatprep.subr.bf16.mxu0 %v1534
    %1577 = vmatpush1.bf16.msra.mxu0 %v1533
    %1578 = vmatprep.subr.bf16.mxu0 %v1537
    %1579 = vmatpush1.bf16.msra.mxu0 %v1536
    %1580 = vmatprep.subr.bf16.mxu0 %v1540
    %1581 = vmatpush1.bf16.msra.mxu0 %v1539
    %1582 = vmatprep.subr.bf16.mxu0 0
    %1583 = vmatpush1.bf16.msra.mxu0 0
    %1584 = vmatprep.subr.bf16.mxu0 0
    %1585 = vmatpush1.bf16.msra.mxu0 0
    %1586 = vmatprep.subr.bf16.mxu0 0
    %1587 = vmatpush1.bf16.msra.mxu0 0
    %1588 = vmatprep.subr.bf16.mxu0 0
    %1589 = vmatpush1.bf16.msra.mxu0 0
    %1590 = vmatprep.subr.bf16.mxu0 0
    %1591 = vmatpush1.bf16.msra.mxu0 0
    %1592 = vmatprep.subr.bf16.mxu0 0
    %1593 = vmatpush1.bf16.msra.mxu0 0
    %1594 = vmatprep.subr.bf16.mxu0 0
    %1595 = vmatpush1.bf16.msra.mxu0 0
    %1596 = vmatprep.subr.bf16.mxu0 0
    %1597 = vmatpush1.bf16.msra.mxu0 0
    %1598 = vmatprep.mubr.bf16.mxu0 0
    %1599 = vmatmul.mubr.bf16.gmra.mrb[0].mxu0 0
    %v1600 = vpop.f32.mrb[0].mxu0
    %v1601 = vadd.f32 0.0, %v1600
    %v1602 = vpop.f32.mrb[0].mxu0
    %v1603 = vadd.f32 0.0, %v1602
    %v1604 = vpop.f32.mrb[0].mxu0
    %v1605 = vpop.f32.mrb[0].mxu0
    %1606 = vdwg.mxu0
    %1607 = vmatprep.subr.bf16.mxu0 0
    %1608 = vmatpush1.bf16.msra.mxu0 %v1520
    %1609 = vmatprep.subr.bf16.mxu0 0
    %1610 = vmatpush1.bf16.msra.mxu0 %v1523
    %1611 = vmatprep.subr.bf16.mxu0 0
    %1612 = vmatpush1.bf16.msra.mxu0 %v1526
    %1613 = vmatprep.subr.bf16.mxu0 0
    %1614 = vmatpush1.bf16.msra.mxu0 %v1529
    %1615 = vmatprep.subr.bf16.mxu0 0
    %1616 = vmatpush1.bf16.msra.mxu0 %v1532
    %1617 = vmatprep.subr.bf16.mxu0 0
    %1618 = vmatpush1.bf16.msra.mxu0 %v1535
    %1619 = vmatprep.subr.bf16.mxu0 0
    %1620 = vmatpush1.bf16.msra.mxu0 %v1538
    %1621 = vmatprep.subr.bf16.mxu0 0
    %1622 = vmatpush1.bf16.msra.mxu0 %v1541
    %1623 = vmatprep.subr.bf16.mxu0 0
    %1624 = vmatpush1.bf16.msra.mxu0 0
    %1625 = vmatprep.subr.bf16.mxu0 0
    %1626 = vmatpush1.bf16.msra.mxu0 0
    %1627 = vmatprep.subr.bf16.mxu0 0
    %1628 = vmatpush1.bf16.msra.mxu0 0
    %1629 = vmatprep.subr.bf16.mxu0 0
    %1630 = vmatpush1.bf16.msra.mxu0 0
    %1631 = vmatprep.subr.bf16.mxu0 0
    %1632 = vmatpush1.bf16.msra.mxu0 0
    %1633 = vmatprep.subr.bf16.mxu0 0
    %1634 = vmatpush1.bf16.msra.mxu0 0
    %1635 = vmatprep.subr.bf16.mxu0 0
    %1636 = vmatpush1.bf16.msra.mxu0 0
    %1637 = vmatprep.subr.bf16.mxu0 0
    %1638 = vmatpush1.bf16.msra.mxu0 0
    %1639 = vmatprep.mubr.bf16.mxu0 0
    %1640 = vmatmul.mubr.bf16.gmra.mrb[0].mxu0 0
    %v1641 = vpop.f32.mrb[0].mxu0
    %v1642 = vadd.f32 0.0, %v1641
    %v1643 = vpop.f32.mrb[0].mxu0
    %v1644 = vpop.f32.mrb[0].mxu0
    %v1645 = vpop.f32.mrb[0].mxu0
    %1646 = vdwg.mxu0
    %v1679 = vunpack.c.l.b16 %v1367
    %v1680 = vunpack.c.h.b16 %v1367
    %v1681 = vunpack.c.l.b16 %v1368
    %v1682 = vunpack.c.l.b16 %v1369
    %v1683 = vunpack.c.h.b16 %v1369
    %v1684 = vunpack.c.l.b16 %v1370
    %v1685 = vunpack.c.l.b16 %v1371
    %v1686 = vunpack.c.h.b16 %v1371
    %v1687 = vunpack.c.l.b16 %v1372
    %v1688 = vunpack.c.l.b16 %v1373
    %v1689 = vunpack.c.h.b16 %v1373
    %v1690 = vunpack.c.l.b16 %v1374
    %v1691 = vunpack.c.l.b16 %v1375
    %v1692 = vunpack.c.h.b16 %v1375
    %v1693 = vunpack.c.l.b16 %v1376
    %v1694 = vunpack.c.l.b16 %v1377
    %v1695 = vunpack.c.h.b16 %v1377
    %v1696 = vunpack.c.l.b16 %v1378
    %v1697 = vunpack.c.l.b16 %v1379
    %v1698 = vunpack.c.h.b16 %v1379
    %v1699 = vunpack.c.l.b16 %v1380
    %v1700 = vunpack.c.l.b16 %v1381
    %v1701 = vunpack.c.h.b16 %v1381
    %v1702 = vunpack.c.l.b16 %v1382
    %v1703 = vunpack.c.l.b16 %v1383
    %v1704 = vunpack.c.h.b16 %v1383
    %v1705 = vunpack.c.l.b16 %v1384
    %v1706 = vunpack.c.l.b16 %v1385
    %v1707 = vunpack.c.h.b16 %v1385
    %v1708 = vunpack.c.l.b16 %v1386
    %v1709 = vunpack.c.l.b16 %v1387
    %v1710 = vunpack.c.h.b16 %v1387
    %v1711 = vunpack.c.l.b16 %v1388
    %v1712 = vunpack.c.l.b16 %v1389
    %v1713 = vunpack.c.h.b16 %v1389
    %v1714 = vunpack.c.l.b16 %v1390
    %v1715 = vunpack.c.l.b16 %v1391
    %v1716 = vunpack.c.h.b16 %v1391
    %v1717 = vunpack.c.l.b16 %v1392
    %v1718 = vunpack.c.l.b16 %v1393
    %v1719 = vunpack.c.h.b16 %v1393
    %v1720 = vunpack.c.l.b16 %v1394
    %v1721 = vunpack.c.l.b16 %v1395
    %v1722 = vunpack.c.h.b16 %v1395
    %v1723 = vunpack.c.l.b16 %v1396
    %v1724 = vunpack.c.l.b16 %v1397
    %v1725 = vunpack.c.h.b16 %v1397
    %v1726 = vunpack.c.l.b16 %v1398
    %v1727 = vpack.c.b16 %v1682, %v1679
    %v1728 = vpack.c.b16 %v1683, %v1680
    %v1729 = vpack.c.b16 %v1684, %v1681
    %v1730 = vpack.c.b16 %v1688, %v1685
    %v1731 = vpack.c.b16 %v1689, %v1686
    %v1732 = vpack.c.b16 %v1690, %v1687
    %v1733 = vpack.c.b16 %v1694, %v1691
    %v1734 = vpack.c.b16 %v1695, %v1692
    %v1735 = vpack.c.b16 %v1696, %v1693
    %v1736 = vpack.c.b16 %v1700, %v1697
    %v1737 = vpack.c.b16 %v1701, %v1698
    %v1738 = vpack.c.b16 %v1702, %v1699
    %v1739 = vpack.c.b16 %v1706, %v1703
    %v1740 = vpack.c.b16 %v1707, %v1704
    %v1741 = vpack.c.b16 %v1708, %v1705
    %v1742 = vpack.c.b16 %v1712, %v1709
    %v1743 = vpack.c.b16 %v1713, %v1710
    %v1744 = vpack.c.b16 %v1714, %v1711
    %v1745 = vpack.c.b16 %v1718, %v1715
    %v1746 = vpack.c.b16 %v1719, %v1716
    %v1747 = vpack.c.b16 %v1720, %v1717
    %v1748 = vpack.c.b16 %v1724, %v1721
    %v1749 = vpack.c.b16 %v1725, %v1722
    %v1750 = vpack.c.b16 %v1726, %v1723
    %1775 = vmatprep.subr.bf16.mxu0 %v1728
    %1776 = vmatpush1.bf16.msra.mxu0 %v1727
    %1777 = vmatprep.subr.bf16.mxu0 %v1731
    %1778 = vmatpush1.bf16.msra.mxu0 %v1730
    %1779 = vmatprep.subr.bf16.mxu0 %v1734
    %1780 = vmatpush1.bf16.msra.mxu0 %v1733
    %1781 = vmatprep.subr.bf16.mxu0 %v1737
    %1782 = vmatpush1.bf16.msra.mxu0 %v1736
    %1783 = vmatprep.subr.bf16.mxu0 %v1740
    %1784 = vmatpush1.bf16.msra.mxu0 %v1739
    %1785 = vmatprep.subr.bf16.mxu0 %v1743
    %1786 = vmatpush1.bf16.msra.mxu0 %v1742
    %1787 = vmatprep.subr.bf16.mxu0 %v1746
    %1788 = vmatpush1.bf16.msra.mxu0 %v1745
    %1789 = vmatprep.subr.bf16.mxu0 %v1749
    %1790 = vmatpush1.bf16.msra.mxu0 %v1748
    %1791 = vmatprep.subr.bf16.mxu0 0
    %1792 = vmatpush1.bf16.msra.mxu0 0
    %1793 = vmatprep.subr.bf16.mxu0 0
    %1794 = vmatpush1.bf16.msra.mxu0 0
    %1795 = vmatprep.subr.bf16.mxu0 0
    %1796 = vmatpush1.bf16.msra.mxu0 0
    %1797 = vmatprep.subr.bf16.mxu0 0
    %1798 = vmatpush1.bf16.msra.mxu0 0
    %1799 = vmatprep.subr.bf16.mxu0 0
    %1800 = vmatpush1.bf16.msra.mxu0 0
    %1801 = vmatprep.subr.bf16.mxu0 0
    %1802 = vmatpush1.bf16.msra.mxu0 0
    %1803 = vmatprep.subr.bf16.mxu0 0
    %1804 = vmatpush1.bf16.msra.mxu0 0
    %1805 = vmatprep.subr.bf16.mxu0 0
    %1806 = vmatpush1.bf16.msra.mxu0 0
    %1807 = vmatprep.mubr.bf16.mxu0 0
    %1808 = vmatmul.mubr.bf16.gmra.mrb[0].mxu0 0
    %v1809 = vpop.f32.mrb[0].mxu0
    %v1810 = vadd.f32 %v1601, %v1809
    %v1811 = vpop.f32.mrb[0].mxu0
    %v1812 = vadd.f32 %v1603, %v1811
    %v1813 = vpop.f32.mrb[0].mxu0
    %v1814 = vpop.f32.mrb[0].mxu0
    %1815 = vdwg.mxu0
    %1816 = vmatprep.subr.bf16.mxu0 0
    %1817 = vmatpush1.bf16.msra.mxu0 %v1729
    %1818 = vmatprep.subr.bf16.mxu0 0
    %1819 = vmatpush1.bf16.msra.mxu0 %v1732
    %1820 = vmatprep.subr.bf16.mxu0 0
    %1821 = vmatpush1.bf16.msra.mxu0 %v1735
    %1822 = vmatprep.subr.bf16.mxu0 0
    %1823 = vmatpush1.bf16.msra.mxu0 %v1738
    %1824 = vmatprep.subr.bf16.mxu0 0
    %1825 = vmatpush1.bf16.msra.mxu0 %v1741
    %1826 = vmatprep.subr.bf16.mxu0 0
    %1827 = vmatpush1.bf16.msra.mxu0 %v1744
    %1828 = vmatprep.subr.bf16.mxu0 0
    %1829 = vmatpush1.bf16.msra.mxu0 %v1747
    %1830 = vmatprep.subr.bf16.mxu0 0
    %1831 = vmatpush1.bf16.msra.mxu0 %v1750
    %1832 = vmatprep.subr.bf16.mxu0 0
    %1833 = vmatpush1.bf16.msra.mxu0 0
    %1834 = vmatprep.subr.bf16.mxu0 0
    %1835 = vmatpush1.bf16.msra.mxu0 0
    %1836 = vmatprep.subr.bf16.mxu0 0
    %1837 = vmatpush1.bf16.msra.mxu0 0
    %1838 = vmatprep.subr.bf16.mxu0 0
    %1839 = vmatpush1.bf16.msra.mxu0 0
    %1840 = vmatprep.subr.bf16.mxu0 0
    %1841 = vmatpush1.bf16.msra.mxu0 0
    %1842 = vmatprep.subr.bf16.mxu0 0
    %1843 = vmatpush1.bf16.msra.mxu0 0
    %1844 = vmatprep.subr.bf16.mxu0 0
    %1845 = vmatpush1.bf16.msra.mxu0 0
    %1846 = vmatprep.subr.bf16.mxu0 0
    %1847 = vmatpush1.bf16.msra.mxu0 0
    %1848 = vmatprep.mubr.bf16.mxu0 0
    %1849 = vmatmul.mubr.bf16.gmra.mrb[0].mxu0 0
    %v1850 = vpop.f32.mrb[0].mxu0
    %v1851 = vadd.f32 %v1642, %v1850
    %v1852 = vpop.f32.mrb[0].mxu0
    %v1853 = vpop.f32.mrb[0].mxu0
    %v1854 = vpop.f32.mrb[0].mxu0
    %1855 = vdwg.mxu0
    %1856 = vmatprep.subr.bf16.mxu0 %v1728
    %1857 = vmatpush1.bf16.msra.mxu0 %v1727
    %1858 = vmatprep.subr.bf16.mxu0 %v1731
    %1859 = vmatpush1.bf16.msra.mxu0 %v1730
    %1860 = vmatprep.subr.bf16.mxu0 %v1734
    %1861 = vmatpush1.bf16.msra.mxu0 %v1733
    %1862 = vmatprep.subr.bf16.mxu0 %v1737
    %1863 = vmatpush1.bf16.msra.mxu0 %v1736
    %1864 = vmatprep.subr.bf16.mxu0 %v1740
    %1865 = vmatpush1.bf16.msra.mxu0 %v1739
    %1866 = vmatprep.subr.bf16.mxu0 %v1743
    %1867 = vmatpush1.bf16.msra.mxu0 %v1742
    %1868 = vmatprep.subr.bf16.mxu0 %v1746
    %1869 = vmatpush1.bf16.msra.mxu0 %v1745
    %1870 = vmatprep.subr.bf16.mxu0 %v1749
    %1871 = vmatpush1.bf16.msra.mxu0 %v1748
    %1872 = vmatprep.subr.bf16.mxu0 0
    %1873 = vmatpush1.bf16.msra.mxu0 0
    %1874 = vmatprep.subr.bf16.mxu0 0
    %1875 = vmatpush1.bf16.msra.mxu0 0
    %1876 = vmatprep.subr.bf16.mxu0 0
    %1877 = vmatpush1.bf16.msra.mxu0 0
    %1878 = vmatprep.subr.bf16.mxu0 0
    %1879 = vmatpush1.bf16.msra.mxu0 0
    %1880 = vmatprep.subr.bf16.mxu0 0
    %1881 = vmatpush1.bf16.msra.mxu0 0
    %1882 = vmatprep.subr.bf16.mxu0 0
    %1883 = vmatpush1.bf16.msra.mxu0 0
    %1884 = vmatprep.subr.bf16.mxu0 0
    %1885 = vmatpush1.bf16.msra.mxu0 0
    %1886 = vmatprep.subr.bf16.mxu0 0
    %1887 = vmatpush1.bf16.msra.mxu0 0
    %1888 = vmatprep.mubr.bf16.mxu0 0
    %1889 = vmatmul.mubr.bf16.gmra.mrb[0].mxu0 0
    %v1890 = vpop.f32.mrb[0].mxu0
    %v1891 = vadd.f32 0.0, %v1890
    %v1892 = vpop.f32.mrb[0].mxu0
    %v1893 = vadd.f32 0.0, %v1892
    %v1894 = vpop.f32.mrb[0].mxu0
    %v1895 = vpop.f32.mrb[0].mxu0
    %1896 = vdwg.mxu0
    %1897 = vmatprep.subr.bf16.mxu0 0
    %1898 = vmatpush1.bf16.msra.mxu0 %v1729
    %1899 = vmatprep.subr.bf16.mxu0 0
    %1900 = vmatpush1.bf16.msra.mxu0 %v1732
    %1901 = vmatprep.subr.bf16.mxu0 0
    %1902 = vmatpush1.bf16.msra.mxu0 %v1735
    %1903 = vmatprep.subr.bf16.mxu0 0
    %1904 = vmatpush1.bf16.msra.mxu0 %v1738
    %1905 = vmatprep.subr.bf16.mxu0 0
    %1906 = vmatpush1.bf16.msra.mxu0 %v1741
    %1907 = vmatprep.subr.bf16.mxu0 0
    %1908 = vmatpush1.bf16.msra.mxu0 %v1744
    %1909 = vmatprep.subr.bf16.mxu0 0
    %1910 = vmatpush1.bf16.msra.mxu0 %v1747
    %1911 = vmatprep.subr.bf16.mxu0 0
    %1912 = vmatpush1.bf16.msra.mxu0 %v1750
    %1913 = vmatprep.subr.bf16.mxu0 0
    %1914 = vmatpush1.bf16.msra.mxu0 0
    %1915 = vmatprep.subr.bf16.mxu0 0
    %1916 = vmatpush1.bf16.msra.mxu0 0
    %1917 = vmatprep.subr.bf16.mxu0 0
    %1918 = vmatpush1.bf16.msra.mxu0 0
    %1919 = vmatprep.subr.bf16.mxu0 0
    %1920 = vmatpush1.bf16.msra.mxu0 0
    %1921 = vmatprep.subr.bf16.mxu0 0
    %1922 = vmatpush1.bf16.msra.mxu0 0
    %1923 = vmatprep.subr.bf16.mxu0 0
    %1924 = vmatpush1.bf16.msra.mxu0 0
    %1925 = vmatprep.subr.bf16.mxu0 0
    %1926 = vmatpush1.bf16.msra.mxu0 0
    %1927 = vmatprep.subr.bf16.mxu0 0
    %1928 = vmatpush1.bf16.msra.mxu0 0
    %1929 = vmatprep.mubr.bf16.mxu0 0
    %1930 = vmatmul.mubr.bf16.gmra.mrb[0].mxu0 0
    %v1931 = vpop.f32.mrb[0].mxu0
    %v1932 = vadd.f32 0.0, %v1931
    %v1933 = vpop.f32.mrb[0].mxu0
    %v1934 = vpop.f32.mrb[0].mxu0
    %v1935 = vpop.f32.mrb[0].mxu0
    %1936 = vdwg.mxu0
    %v1937 = vadd.f32 %v1810, %v1891
    %v1938 = vadd.f32 %v1812, %v1893
    %v1939 = vadd.f32 %v1851, %v1932
    %v1940 = vadd.f32 %v776, %v1937
    %v1941 = vadd.f32 %v778, %v1938
    %v1942 = vxor.u32 %v1940, 2147483648
    %v1943 = vxor.u32 %v1941, 2147483648
    %v1944 = vmul.f32 %v1942, 1.442695
    %v1945 = vpow.pop %v1944
    %v1946 = vmul.f32 %v1943, 1.442695
    %v1947 = vpow.pop %v1946
    %v1948 = vadd.f32 %v1945, 1.0
    %v1949 = vadd.f32 %v1947, 1.0
    %v1950 = vrcp.pop %v1948
    %v1951 = vmul.f32 1.0, %v1950
    %v1952 = vrcp.pop %v1949
    %v1953 = vmul.f32 1.0, %v1952
    %v1954 = vadd.f32 %v1939, %v1436
    %v1955 = vmul.f32 %v1951, %v1954
    %v1956 = vadd.f32 %v1358, %v1955
    %v1957 = vtanh.pop %v1956
    %v1958 = vsub.f32 1.0, %v1953
    %v1959 = vmul.f32 %v1958, %v1957
    %v1960 = vmul.f32 %v1953, 0.0
    %v1961 = vadd.f32 %v1959, %v1960
    %1962 = vst [vmem:[#allocation2] sm:$0x3] %v1961
    %v1963 = vpack.c.bf16 %v1961, %v1961
    %v1964 = vunpack.c.l.bf16 %v1963
    %v1965 = vsub.f32 %v1961, %v1964
    %v1966 = vpack.c.bf16 %v1965, %v1965
    %1967 = vmatprep.subr.bf16.mxu0 %v1519
    %1968 = vmatpush1.bf16.msra.mxu0 %v1518
    %1969 = vmatprep.subr.bf16.mxu0 %v1522
    %1970 = vmatpush1.bf16.msra.mxu0 %v1521
    %1971 = vmatprep.subr.bf16.mxu0 %v1525
    %1972 = vmatpush1.bf16.msra.mxu0 %v1524
    %1973 = vmatprep.subr.bf16.mxu0 %v1528
    %1974 = vmatpush1.bf16.msra.mxu0 %v1527
    %1975 = vmatprep.subr.bf16.mxu0 %v1531
    %1976 = vmatpush1.bf16.msra.mxu0 %v1530
    %1977 = vmatprep.subr.bf16.mxu0 %v1534
    %1978 = vmatpush1.bf16.msra.mxu0 %v1533
    %1979 = vmatprep.subr.bf16.mxu0 %v1537
    %1980 = vmatpush1.bf16.msra.mxu0 %v1536
    %1981 = vmatprep.subr.bf16.mxu0 %v1540
    %1982 = vmatpush1.bf16.msra.mxu0 %v1539
    %1983 = vmatprep.subr.bf16.mxu0 0
    %1984 = vmatpush1.bf16.msra.mxu0 0
    %1985 = vmatprep.subr.bf16.mxu0 0
    %1986 = vmatpush1.bf16.msra.mxu0 0
    %1987 = vmatprep.subr.bf16.mxu0 0
    %1988 = vmatpush1.bf16.msra.mxu0 0
    %1989 = vmatprep.subr.bf16.mxu0 0
    %1990 = vmatpush1.bf16.msra.mxu0 0
    %1991 = vmatprep.subr.bf16.mxu0 0
    %1992 = vmatpush1.bf16.msra.mxu0 0
    %1993 = vmatprep.subr.bf16.mxu0 0
    %1994 = vmatpush1.bf16.msra.mxu0 0
    %1995 = vmatprep.subr.bf16.mxu0 0
    %1996 = vmatpush1.bf16.msra.mxu0 0
    %1997 = vmatprep.subr.bf16.mxu0 0
    %1998 = vmatpush1.bf16.msra.mxu0 0
    %1999 = vmatprep.mubr.bf16.mxu0 0
    %2000 = vmatmul.mubr.bf16.gmra.mrb[0].mxu0 %v1963
    %v2001 = vpop.f32.mrb[0].mxu0
    %v2002 = vadd.f32 0.0, %v2001
    %v2003 = vpop.f32.mrb[0].mxu0
    %v2004 = vadd.f32 0.0, %v2003
    %v2005 = vpop.f32.mrb[0].mxu0
    %v2006 = vpop.f32.mrb[0].mxu0
    %2007 = vdwg.mxu0
    %2008 = vmatprep.subr.bf16.mxu0 0
    %2009 = vmatpush1.bf16.msra.mxu0 %v1520
    %2010 = vmatprep.subr.bf16.mxu0 0
    %2011 = vmatpush1.bf16.msra.mxu0 %v1523
    %2012 = vmatprep.subr.bf16.mxu0 0
    %2013 = vmatpush1.bf16.msra.mxu0 %v1526
    %2014 = vmatprep.subr.bf16.mxu0 0
    %2015 = vmatpush1.bf16.msra.mxu0 %v1529
    %2016 = vmatprep.subr.bf16.mxu0 0
    %2017 = vmatpush1.bf16.msra.mxu0 %v1532
    %2018 = vmatprep.subr.bf16.mxu0 0
    %2019 = vmatpush1.bf16.msra.mxu0 %v1535
    %2020 = vmatprep.subr.bf16.mxu0 0
    %2021 = vmatpush1.bf16.msra.mxu0 %v1538
    %2022 = vmatprep.subr.bf16.mxu0 0
    %2023 = vmatpush1.bf16.msra.mxu0 %v1541
    %2024 = vmatprep.subr.bf16.mxu0 0
    %2025 = vmatpush1.bf16.msra.mxu0 0
    %2026 = vmatprep.subr.bf16.mxu0 0
    %2027 = vmatpush1.bf16.msra.mxu0 0
    %2028 = vmatprep.subr.bf16.mxu0 0
    %2029 = vmatpush1.bf16.msra.mxu0 0
    %2030 = vmatprep.subr.bf16.mxu0 0
    %2031 = vmatpush1.bf16.msra.mxu0 0
    %2032 = vmatprep.subr.bf16.mxu0 0
    %2033 = vmatpush1.bf16.msra.mxu0 0
    %2034 = vmatprep.subr.bf16.mxu0 0
    %2035 = vmatpush1.bf16.msra.mxu0 0
    %2036 = vmatprep.subr.bf16.mxu0 0
    %2037 = vmatpush1.bf16.msra.mxu0 0
    %2038 = vmatprep.subr.bf16.mxu0 0
    %2039 = vmatpush1.bf16.msra.mxu0 0
    %2040 = vmatprep.mubr.bf16.mxu0 0
    %2041 = vmatmul.mubr.bf16.gmra.mrb[0].mxu0 %v1963
    %v2042 = vpop.f32.mrb[0].mxu0
    %v2043 = vadd.f32 0.0, %v2042
    %v2044 = vpop.f32.mrb[0].mxu0
    %v2045 = vpop.f32.mrb[0].mxu0
    %v2046 = vpop.f32.mrb[0].mxu0
    %2047 = vdwg.mxu0
    %2048 = vmatprep.subr.bf16.mxu0 %v1728
    %2049 = vmatpush1.bf16.msra.mxu0 %v1727
    %2050 = vmatprep.subr.bf16.mxu0 %v1731
    %2051 = vmatpush1.bf16.msra.mxu0 %v1730
    %2052 = vmatprep.subr.bf16.mxu0 %v1734
    %2053 = vmatpush1.bf16.msra.mxu0 %v1733
    %2054 = vmatprep.subr.bf16.mxu0 %v1737
    %2055 = vmatpush1.bf16.msra.mxu0 %v1736
    %2056 = vmatprep.subr.bf16.mxu0 %v1740
    %2057 = vmatpush1.bf16.msra.mxu0 %v1739
    %2058 = vmatprep.subr.bf16.mxu0 %v1743
    %2059 = vmatpush1.bf16.msra.mxu0 %v1742
    %2060 = vmatprep.subr.bf16.mxu0 %v1746
    %2061 = vmatpush1.bf16.msra.mxu0 %v1745
    %2062 = vmatprep.subr.bf16.mxu0 %v1749
    %2063 = vmatpush1.bf16.msra.mxu0 %v1748
    %2064 = vmatprep.subr.bf16.mxu0 0
    %2065 = vmatpush1.bf16.msra.mxu0 0
    %2066 = vmatprep.subr.bf16.mxu0 0
    %2067 = vmatpush1.bf16.msra.mxu0 0
    %2068 = vmatprep.subr.bf16.mxu0 0
    %2069 = vmatpush1.bf16.msra.mxu0 0
    %2070 = vmatprep.subr.bf16.mxu0 0
    %2071 = vmatpush1.bf16.msra.mxu0 0
    %2072 = vmatprep.subr.bf16.mxu0 0
    %2073 = vmatpush1.bf16.msra.mxu0 0
    %2074 = vmatprep.subr.bf16.mxu0 0
    %2075 = vmatpush1.bf16.msra.mxu0 0
    %2076 = vmatprep.subr.bf16.mxu0 0
    %2077 = vmatpush1.bf16.msra.mxu0 0
    %2078 = vmatprep.subr.bf16.mxu0 0
    %2079 = vmatpush1.bf16.msra.mxu0 0
    %2080 = vmatprep.mubr.bf16.mxu0 0
    %2081 = vmatmul.mubr.bf16.gmra.mrb[0].mxu0 %v1963
    %v2082 = vpop.f32.mrb[0].mxu0
    %v2083 = vadd.f32 %v2002, %v2082
    %v2084 = vpop.f32.mrb[0].mxu0
    %v2085 = vadd.f32 %v2004, %v2084
    %v2086 = vpop.f32.mrb[0].mxu0
    %v2087 = vpop.f32.mrb[0].mxu0
    %2088 = vdwg.mxu0
    %2089 = vmatprep.subr.bf16.mxu0 0
    %2090 = vmatpush1.bf16.msra.mxu0 %v1729
    %2091 = vmatprep.subr.bf16.mxu0 0
    %2092 = vmatpush1.bf16.msra.mxu0 %v1732
    %2093 = vmatprep.subr.bf16.mxu0 0
    %2094 = vmatpush1.bf16.msra.mxu0 %v1735
    %2095 = vmatprep.subr.bf16.mxu0 0
    %2096 = vmatpush1.bf16.msra.mxu0 %v1738
    %2097 = vmatprep.subr.bf16.mxu0 0
    %2098 = vmatpush1.bf16.msra.mxu0 %v1741
    %2099 = vmatprep.subr.bf16.mxu0 0
    %2100 = vmatpush1.bf16.msra.mxu0 %v1744
    %2101 = vmatprep.subr.bf16.mxu0 0
    %2102 = vmatpush1.bf16.msra.mxu0 %v1747
    %2103 = vmatprep.subr.bf16.mxu0 0
    %2104 = vmatpush1.bf16.msra.mxu0 %v1750
    %2105 = vmatprep.subr.bf16.mxu0 0
    %2106 = vmatpush1.bf16.msra.mxu0 0
    %2107 = vmatprep.subr.bf16.mxu0 0
    %2108 = vmatpush1.bf16.msra.mxu0 0
    %2109 = vmatprep.subr.bf16.mxu0 0
    %2110 = vmatpush1.bf16.msra.mxu0 0
    %2111 = vmatprep.subr.bf16.mxu0 0
    %2112 = vmatpush1.bf16.msra.mxu0 0
    %2113 = vmatprep.subr.bf16.mxu0 0
    %2114 = vmatpush1.bf16.msra.mxu0 0
    %2115 = vmatprep.subr.bf16.mxu0 0
    %2116 = vmatpush1.bf16.msra.mxu0 0
    %2117 = vmatprep.subr.bf16.mxu0 0
    %2118 = vmatpush1.bf16.msra.mxu0 0
    %2119 = vmatprep.subr.bf16.mxu0 0
    %2120 = vmatpush1.bf16.msra.mxu0 0
    %2121 = vmatprep.mubr.bf16.mxu0 0
    %2122 = vmatmul.mubr.bf16.gmra.mrb[0].mxu0 %v1963
    %v2123 = vpop.f32.mrb[0].mxu0
    %v2124 = vadd.f32 %v2043, %v2123
    %v2125 = vpop.f32.mrb[0].mxu0
    %v2126 = vpop.f32.mrb[0].mxu0
    %v2127 = vpop.f32.mrb[0].mxu0
    %2128 = vdwg.mxu0
    %2129 = vmatprep.subr.bf16.mxu0 %v1728
    %2130 = vmatpush1.bf16.msra.mxu0 %v1727
    %2131 = vmatprep.subr.bf16.mxu0 %v1731
    %2132 = vmatpush1.bf16.msra.mxu0 %v1730
    %2133 = vmatprep.subr.bf16.mxu0 %v1734
    %2134 = vmatpush1.bf16.msra.mxu0 %v1733
    %2135 = vmatprep.subr.bf16.mxu0 %v1737
    %2136 = vmatpush1.bf16.msra.mxu0 %v1736
    %2137 = vmatprep.subr.bf16.mxu0 %v1740
    %2138 = vmatpush1.bf16.msra.mxu0 %v1739
    %2139 = vmatprep.subr.bf16.mxu0 %v1743
    %2140 = vmatpush1.bf16.msra.mxu0 %v1742
    %2141 = vmatprep.subr.bf16.mxu0 %v1746
    %2142 = vmatpush1.bf16.msra.mxu0 %v1745
    %2143 = vmatprep.subr.bf16.mxu0 %v1749
    %2144 = vmatpush1.bf16.msra.mxu0 %v1748
    %2145 = vmatprep.subr.bf16.mxu0 0
    %2146 = vmatpush1.bf16.msra.mxu0 0
    %2147 = vmatprep.subr.bf16.mxu0 0
    %2148 = vmatpush1.bf16.msra.mxu0 0
    %2149 = vmatprep.subr.bf16.mxu0 0
    %2150 = vmatpush1.bf16.msra.mxu0 0
    %2151 = vmatprep.subr.bf16.mxu0 0
    %2152 = vmatpush1.bf16.msra.mxu0 0
    %2153 = vmatprep.subr.bf16.mxu0 0
    %2154 = vmatpush1.bf16.msra.mxu0 0
    %2155 = vmatprep.subr.bf16.mxu0 0
    %2156 = vmatpush1.bf16.msra.mxu0 0
    %2157 = vmatprep.subr.bf16.mxu0 0
    %2158 = vmatpush1.bf16.msra.mxu0 0
    %2159 = vmatprep.subr.bf16.mxu0 0
    %2160 = vmatpush1.bf16.msra.mxu0 0
    %2161 = vmatprep.mubr.bf16.mxu0 0
    %2162 = vmatmul.mubr.bf16.gmra.mrb[0].mxu0 %v1966
    %v2163 = vpop.f32.mrb[0].mxu0
    %v2164 = vadd.f32 0.0, %v2163
    %v2165 = vpop.f32.mrb[0].mxu0
    %v2166 = vadd.f32 0.0, %v2165
    %v2167 = vpop.f32.mrb[0].mxu0
    %v2168 = vpop.f32.mrb[0].mxu0
    %2169 = vdwg.mxu0
    %2170 = vmatprep.subr.bf16.mxu0 0
    %2171 = vmatpush1.bf16.msra.mxu0 %v1729
    %2172 = vmatprep.subr.bf16.mxu0 0
    %2173 = vmatpush1.bf16.msra.mxu0 %v1732
    %2174 = vmatprep.subr.bf16.mxu0 0
    %2175 = vmatpush1.bf16.msra.mxu0 %v1735
    %2176 = vmatprep.subr.bf16.mxu0 0
    %2177 = vmatpush1.bf16.msra.mxu0 %v1738
    %2178 = vmatprep.subr.bf16.mxu0 0
    %2179 = vmatpush1.bf16.msra.mxu0 %v1741
    %2180 = vmatprep.subr.bf16.mxu0 0
    %2181 = vmatpush1.bf16.msra.mxu0 %v1744
    %2182 = vmatprep.subr.bf16.mxu0 0
    %2183 = vmatpush1.bf16.msra.mxu0 %v1747
    %2184 = vmatprep.subr.bf16.mxu0 0
    %2185 = vmatpush1.bf16.msra.mxu0 %v1750
    %2186 = vmatprep.subr.bf16.mxu0 0
    %2187 = vmatpush1.bf16.msra.mxu0 0
    %2188 = vmatprep.subr.bf16.mxu0 0
    %2189 = vmatpush1.bf16.msra.mxu0 0
    %2190 = vmatprep.subr.bf16.mxu0 0
    %2191 = vmatpush1.bf16.msra.mxu0 0
    %2192 = vmatprep.subr.bf16.mxu0 0
    %2193 = vmatpush1.bf16.msra.mxu0 0
    %2194 = vmatprep.subr.bf16.mxu0 0
    %2195 = vmatpush1.bf16.msra.mxu0 0
    %2196 = vmatprep.subr.bf16.mxu0 0
    %2197 = vmatpush1.bf16.msra.mxu0 0
    %2198 = vmatprep.subr.bf16.mxu0 0
    %2199 = vmatpush1.bf16.msra.mxu0 0
    %2200 = vmatprep.subr.bf16.mxu0 0
    %2201 = vmatpush1.bf16.msra.mxu0 0
    %2202 = vmatprep.mubr.bf16.mxu0 0
    %2203 = vmatmul.mubr.bf16.gmra.mrb[0].mxu0 %v1966
    %v2204 = vpop.f32.mrb[0].mxu0
    %v2205 = vadd.f32 0.0, %v2204
    %v2206 = vpop.f32.mrb[0].mxu0
    %v2207 = vpop.f32.mrb[0].mxu0
    %v2208 = vpop.f32.mrb[0].mxu0
    %2209 = vdwg.mxu0
    %v2210 = vadd.f32 %v2083, %v2164
    %v2211 = vadd.f32 %v2085, %v2166
    %v2212 = vadd.f32 %v2124, %v2205
    %v2215 = vrot.slane %v2210, 6
    %v2216 = vrot.slane %v2211, 6
    %v2219 = vadd.f32 %v776, %v2215
    %v2220 = vadd.f32 %v778, %v2216
    %v2221 = vxor.u32 %v2219, 2147483648
    %v2222 = vxor.u32 %v2220, 2147483648
    %v2223 = vmul.f32 %v2221, 1.442695
    %v2224 = vpow.pop %v2223
    %v2225 = vmul.f32 %v2222, 1.442695
    %v2226 = vpow.pop %v2225
    %v2227 = vadd.f32 %v2224, 1.0
    %v2228 = vadd.f32 %v2226, 1.0
    %v2229 = vrcp.pop %v2227
    %v2230 = vmul.f32 1.0, %v2229
    %v2231 = vrcp.pop %v2228
    %v2232 = vmul.f32 1.0, %v2231
    %v2233 = vadd.f32 %v2212, %v1436
    %v2235 = vrot.slane %v2233, 6
    %v2237 = vmul.f32 %v2230, %v2235
    %v2238 = vadd.f32 %v1358, %v2237
    %v2239 = vtanh.pop %v2238
    %v2240 = vsub.f32 1.0, %v2232
    %v2241 = vmul.f32 %v2240, %v2239
    %v2243 = vrot.slane %v1961, 6
    %v2245 = vmul.f32 %v2232, %v2243
    %v2246 = vadd.f32 %v2241, %v2245
    %2247 = vst [vmem:[#allocation2] sm:$0xc] %v2246
    %v2248 = vpack.c.bf16 %v2246, %v2246
    %v2249 = vunpack.c.l.bf16 %v2248
    %v2250 = vsub.f32 %v2246, %v2249
    %v2251 = vpack.c.bf16 %v2250, %v2250
    %v2253 = vrot.slane %v2248, 1
    %2255 = vmatprep.subr.bf16.mxu0 %v1519
    %2256 = vmatpush1.bf16.msra.mxu0 %v1518
    %2257 = vmatprep.subr.bf16.mxu0 %v1522
    %2258 = vmatpush1.bf16.msra.mxu0 %v1521
    %2259 = vmatprep.subr.bf16.mxu0 %v1525
    %2260 = vmatpush1.bf16.msra.mxu0 %v1524
    %2261 = vmatprep.subr.bf16.mxu0 %v1528
    %2262 = vmatpush1.bf16.msra.mxu0 %v1527
    %2263 = vmatprep.subr.bf16.mxu0 %v1531
    %2264 = vmatpush1.bf16.msra.mxu0 %v1530
    %2265 = vmatprep.subr.bf16.mxu0 %v1534
    %2266 = vmatpush1.bf16.msra.mxu0 %v1533
    %2267 = vmatprep.subr.bf16.mxu0 %v1537
    %2268 = vmatpush1.bf16.msra.mxu0 %v1536
    %2269 = vmatprep.subr.bf16.mxu0 %v1540
    %2270 = vmatpush1.bf16.msra.mxu0 %v1539
    %2271 = vmatprep.subr.bf16.mxu0 0
    %2272 = vmatpush1.bf16.msra.mxu0 0
    %2273 = vmatprep.subr.bf16.mxu0 0
    %2274 = vmatpush1.bf16.msra.mxu0 0
    %2275 = vmatprep.subr.bf16.mxu0 0
    %2276 = vmatpush1.bf16.msra.mxu0 0
    %2277 = vmatprep.subr.bf16.mxu0 0
    %2278 = vmatpush1.bf16.msra.mxu0 0
    %2279 = vmatprep.subr.bf16.mxu0 0
    %2280 = vmatpush1.bf16.msra.mxu0 0
    %2281 = vmatprep.subr.bf16.mxu0 0
    %2282 = vmatpush1.bf16.msra.mxu0 0
    %2283 = vmatprep.subr.bf16.mxu0 0
    %2284 = vmatpush1.bf16.msra.mxu0 0
    %2285 = vmatprep.subr.bf16.mxu0 0
    %2286 = vmatpush1.bf16.msra.mxu0 0
    %2287 = vmatprep.mubr.bf16.mxu0 0
    %2288 = vmatmul.mubr.bf16.gmra.mrb[0].mxu0 %v2253
    %v2289 = vpop.f32.mrb[0].mxu0
    %v2290 = vadd.f32 0.0, %v2289
    %v2291 = vpop.f32.mrb[0].mxu0
    %v2292 = vadd.f32 0.0, %v2291
    %v2293 = vpop.f32.mrb[0].mxu0
    %v2294 = vpop.f32.mrb[0].mxu0
    %2295 = vdwg.mxu0
    %2296 = vmatprep.subr.bf16.mxu0 0
    %2297 = vmatpush1.bf16.msra.mxu0 %v1520
    %2298 = vmatprep.subr.bf16.mxu0 0
    %2299 = vmatpush1.bf16.msra.mxu0 %v1523
    %2300 = vmatprep.subr.bf16.mxu0 0
    %2301 = vmatpush1.bf16.msra.mxu0 %v1526
    %2302 = vmatprep.subr.bf16.mxu0 0
    %2303 = vmatpush1.bf16.msra.mxu0 %v1529
    %2304 = vmatprep.subr.bf16.mxu0 0
    %2305 = vmatpush1.bf16.msra.mxu0 %v1532
    %2306 = vmatprep.subr.bf16.mxu0 0
    %2307 = vmatpush1.bf16.msra.mxu0 %v1535
    %2308 = vmatprep.subr.bf16.mxu0 0
    %2309 = vmatpush1.bf16.msra.mxu0 %v1538
    %2310 = vmatprep.subr.bf16.mxu0 0
    %2311 = vmatpush1.bf16.msra.mxu0 %v1541
    %2312 = vmatprep.subr.bf16.mxu0 0
    %2313 = vmatpush1.bf16.msra.mxu0 0
    %2314 = vmatprep.subr.bf16.mxu0 0
    %2315 = vmatpush1.bf16.msra.mxu0 0
    %2316 = vmatprep.subr.bf16.mxu0 0
    %2317 = vmatpush1.bf16.msra.mxu0 0
    %2318 = vmatprep.subr.bf16.mxu0 0
    %2319 = vmatpush1.bf16.msra.mxu0 0
    %2320 = vmatprep.subr.bf16.mxu0 0
    %2321 = vmatpush1.bf16.msra.mxu0 0
    %2322 = vmatprep.subr.bf16.mxu0 0
    %2323 = vmatpush1.bf16.msra.mxu0 0
    %2324 = vmatprep.subr.bf16.mxu0 0
    %2325 = vmatpush1.bf16.msra.mxu0 0
    %2326 = vmatprep.subr.bf16.mxu0 0
    %2327 = vmatpush1.bf16.msra.mxu0 0
    %2328 = vmatprep.mubr.bf16.mxu0 0
    %2329 = vmatmul.mubr.bf16.gmra.mrb[0].mxu0 %v2253
    %v2330 = vpop.f32.mrb[0].mxu0
    %v2331 = vadd.f32 0.0, %v2330
    %v2332 = vpop.f32.mrb[0].mxu0
    %v2333 = vpop.f32.mrb[0].mxu0
    %v2334 = vpop.f32.mrb[0].mxu0
    %2335 = vdwg.mxu0
    %2336 = vmatprep.subr.bf16.mxu0 %v1728
    %2337 = vmatpush1.bf16.msra.mxu0 %v1727
    %2338 = vmatprep.subr.bf16.mxu0 %v1731
    %2339 = vmatpush1.bf16.msra.mxu0 %v1730
    %2340 = vmatprep.subr.bf16.mxu0 %v1734
    %2341 = vmatpush1.bf16.msra.mxu0 %v1733
    %2342 = vmatprep.subr.bf16.mxu0 %v1737
    %2343 = vmatpush1.bf16.msra.mxu0 %v1736
    %2344 = vmatprep.subr.bf16.mxu0 %v1740
    %2345 = vmatpush1.bf16.msra.mxu0 %v1739
    %2346 = vmatprep.subr.bf16.mxu0 %v1743
    %2347 = vmatpush1.bf16.msra.mxu0 %v1742
    %2348 = vmatprep.subr.bf16.mxu0 %v1746
    %2349 = vmatpush1.bf16.msra.mxu0 %v1745
    %2350 = vmatprep.subr.bf16.mxu0 %v1749
    %2351 = vmatpush1.bf16.msra.mxu0 %v1748
    %2352 = vmatprep.subr.bf16.mxu0 0
    %2353 = vmatpush1.bf16.msra.mxu0 0
    %2354 = vmatprep.subr.bf16.mxu0 0
    %2355 = vmatpush1.bf16.msra.mxu0 0
    %2356 = vmatprep.subr.bf16.mxu0 0
    %2357 = vmatpush1.bf16.msra.mxu0 0
    %2358 = vmatprep.subr.bf16.mxu0 0
    %2359 = vmatpush1.bf16.msra.mxu0 0
    %2360 = vmatprep.subr.bf16.mxu0 0
    %2361 = vmatpush1.bf16.msra.mxu0 0
    %2362 = vmatprep.subr.bf16.mxu0 0
    %2363 = vmatpush1.bf16.msra.mxu0 0
    %2364 = vmatprep.subr.bf16.mxu0 0
    %2365 = vmatpush1.bf16.msra.mxu0 0
    %2366 = vmatprep.subr.bf16.mxu0 0
    %2367 = vmatpush1.bf16.msra.mxu0 0
    %2368 = vmatprep.mubr.bf16.mxu0 0
    %2369 = vmatmul.mubr.bf16.gmra.mrb[0].mxu0 %v2253
    %v2370 = vpop.f32.mrb[0].mxu0
    %v2371 = vadd.f32 %v2290, %v2370
    %v2372 = vpop.f32.mrb[0].mxu0
    %v2373 = vadd.f32 %v2292, %v2372
    %v2374 = vpop.f32.mrb[0].mxu0
    %v2375 = vpop.f32.mrb[0].mxu0
    %2376 = vdwg.mxu0
    %2377 = vmatprep.subr.bf16.mxu0 0
    %2378 = vmatpush1.bf16.msra.mxu0 %v1729
    %2379 = vmatprep.subr.bf16.mxu0 0
    %2380 = vmatpush1.bf16.msra.mxu0 %v1732
    %2381 = vmatprep.subr.bf16.mxu0 0
    %2382 = vmatpush1.bf16.msra.mxu0 %v1735
    %2383 = vmatprep.subr.bf16.mxu0 0
    %2384 = vmatpush1.bf16.msra.mxu0 %v1738
    %2385 = vmatprep.subr.bf16.mxu0 0
    %2386 = vmatpush1.bf16.msra.mxu0 %v1741
    %2387 = vmatprep.subr.bf16.mxu0 0
    %2388 = vmatpush1.bf16.msra.mxu0 %v1744
    %2389 = vmatprep.subr.bf16.mxu0 0
    %2390 = vmatpush1.bf16.msra.mxu0 %v1747
    %2391 = vmatprep.subr.bf16.mxu0 0
    %2392 = vmatpush1.bf16.msra.mxu0 %v1750
    %2393 = vmatprep.subr.bf16.mxu0 0
    %2394 = vmatpush1.bf16.msra.mxu0 0
    %2395 = vmatprep.subr.bf16.mxu0 0
    %2396 = vmatpush1.bf16.msra.mxu0 0
    %2397 = vmatprep.subr.bf16.mxu0 0
    %2398 = vmatpush1.bf16.msra.mxu0 0
    %2399 = vmatprep.subr.bf16.mxu0 0
    %2400 = vmatpush1.bf16.msra.mxu0 0
    %2401 = vmatprep.subr.bf16.mxu0 0
    %2402 = vmatpush1.bf16.msra.mxu0 0
    %2403 = vmatprep.subr.bf16.mxu0 0
    %2404 = vmatpush1.bf16.msra.mxu0 0
    %2405 = vmatprep.subr.bf16.mxu0 0
    %2406 = vmatpush1.bf16.msra.mxu0 0
    %2407 = vmatprep.subr.bf16.mxu0 0
    %2408 = vmatpush1.bf16.msra.mxu0 0
    %2409 = vmatprep.mubr.bf16.mxu0 0
    %2410 = vmatmul.mubr.bf16.gmra.mrb[0].mxu0 %v2253
    %v2411 = vpop.f32.mrb[0].mxu0
    %v2412 = vadd.f32 %v2331, %v2411
    %v2413 = vpop.f32.mrb[0].mxu0
    %v2414 = vpop.f32.mrb[0].mxu0
    %v2415 = vpop.f32.mrb[0].mxu0
    %2416 = vdwg.mxu0
    %v2418 = vrot.slane %v2251, 1
    %2420 = vmatprep.subr.bf16.mxu0 %v1728
    %2421 = vmatpush1.bf16.msra.mxu0 %v1727
    %2422 = vmatprep.subr.bf16.mxu0 %v1731
    %2423 = vmatpush1.bf16.msra.mxu0 %v1730
    %2424 = vmatprep.subr.bf16.mxu0 %v1734
    %2425 = vmatpush1.bf16.msra.mxu0 %v1733
    %2426 = vmatprep.subr.bf16.mxu0 %v1737
    %2427 = vmatpush1.bf16.msra.mxu0 %v1736
    %2428 = vmatprep.subr.bf16.mxu0 %v1740
    %2429 = vmatpush1.bf16.msra.mxu0 %v1739
    %2430 = vmatprep.subr.bf16.mxu0 %v1743
    %2431 = vmatpush1.bf16.msra.mxu0 %v1742
    %2432 = vmatprep.subr.bf16.mxu0 %v1746
    %2433 = vmatpush1.bf16.msra.mxu0 %v1745
    %2434 = vmatprep.subr.bf16.mxu0 %v1749
    %2435 = vmatpush1.bf16.msra.mxu0 %v1748
    %2436 = vmatprep.subr.bf16.mxu0 0
    %2437 = vmatpush1.bf16.msra.mxu0 0
    %2438 = vmatprep.subr.bf16.mxu0 0
    %2439 = vmatpush1.bf16.msra.mxu0 0
    %2440 = vmatprep.subr.bf16.mxu0 0
    %2441 = vmatpush1.bf16.msra.mxu0 0
    %2442 = vmatprep.subr.bf16.mxu0 0
    %2443 = vmatpush1.bf16.msra.mxu0 0
    %2444 = vmatprep.subr.bf16.mxu0 0
    %2445 = vmatpush1.bf16.msra.mxu0 0
    %2446 = vmatprep.subr.bf16.mxu0 0
    %2447 = vmatpush1.bf16.msra.mxu0 0
    %2448 = vmatprep.subr.bf16.mxu0 0
    %2449 = vmatpush1.bf16.msra.mxu0 0
    %2450 = vmatprep.subr.bf16.mxu0 0
    %2451 = vmatpush1.bf16.msra.mxu0 0
    %2452 = vmatprep.mubr.bf16.mxu0 0
    %2453 = vmatmul.mubr.bf16.gmra.mrb[0].mxu0 %v2418
    %v2454 = vpop.f32.mrb[0].mxu0
    %v2455 = vadd.f32 0.0, %v2454
    %v2456 = vpop.f32.mrb[0].mxu0
    %v2457 = vadd.f32 0.0, %v2456
    %v2458 = vpop.f32.mrb[0].mxu0
    %v2459 = vpop.f32.mrb[0].mxu0
    %2460 = vdwg.mxu0
    %2461 = vmatprep.subr.bf16.mxu0 0
    %2462 = vmatpush1.bf16.msra.mxu0 %v1729
    %2463 = vmatprep.subr.bf16.mxu0 0
    %2464 = vmatpush1.bf16.msra.mxu0 %v1732
    %2465 = vmatprep.subr.bf16.mxu0 0
    %2466 = vmatpush1.bf16.msra.mxu0 %v1735
    %2467 = vmatprep.subr.bf16.mxu0 0
    %2468 = vmatpush1.bf16.msra.mxu0 %v1738
    %2469 = vmatprep.subr.bf16.mxu0 0
    %2470 = vmatpush1.bf16.msra.mxu0 %v1741
    %2471 = vmatprep.subr.bf16.mxu0 0
    %2472 = vmatpush1.bf16.msra.mxu0 %v1744
    %2473 = vmatprep.subr.bf16.mxu0 0
    %2474 = vmatpush1.bf16.msra.mxu0 %v1747
    %2475 = vmatprep.subr.bf16.mxu0 0
    %2476 = vmatpush1.bf16.msra.mxu0 %v1750
    %2477 = vmatprep.subr.bf16.mxu0 0
    %2478 = vmatpush1.bf16.msra.mxu0 0
    %2479 = vmatprep.subr.bf16.mxu0 0
    %2480 = vmatpush1.bf16.msra.mxu0 0
    %2481 = vmatprep.subr.bf16.mxu0 0
    %2482 = vmatpush1.bf16.msra.mxu0 0
    %2483 = vmatprep.subr.bf16.mxu0 0
    %2484 = vmatpush1.bf16.msra.mxu0 0
    %2485 = vmatprep.subr.bf16.mxu0 0
    %2486 = vmatpush1.bf16.msra.mxu0 0
    %2487 = vmatprep.subr.bf16.mxu0 0
    %2488 = vmatpush1.bf16.msra.mxu0 0
    %2489 = vmatprep.subr.bf16.mxu0 0
    %2490 = vmatpush1.bf16.msra.mxu0 0
    %2491 = vmatprep.subr.bf16.mxu0 0
    %2492 = vmatpush1.bf16.msra.mxu0 0
    %2493 = vmatprep.mubr.bf16.mxu0 0
    %2494 = vmatmul.mubr.bf16.gmra.mrb[0].mxu0 %v2418
    %v2495 = vpop.f32.mrb[0].mxu0
    %v2496 = vadd.f32 0.0, %v2495
    %v2497 = vpop.f32.mrb[0].mxu0
    %v2498 = vpop.f32.mrb[0].mxu0
    %v2499 = vpop.f32.mrb[0].mxu0
    %2500 = vdwg.mxu0
    %v2501 = vadd.f32 %v2371, %v2455
    %v2502 = vadd.f32 %v2373, %v2457
    %v2503 = vadd.f32 %v2412, %v2496
    %v2506 = vrot.slane %v2501, 4
    %v2507 = vrot.slane %v2502, 4
    %v2510 = vadd.f32 %v776, %v2506
    %v2511 = vadd.f32 %v778, %v2507
    %v2512 = vxor.u32 %v2510, 2147483648
    %v2513 = vxor.u32 %v2511, 2147483648
    %v2514 = vmul.f32 %v2512, 1.442695
    %v2515 = vpow.pop %v2514
    %v2516 = vmul.f32 %v2513, 1.442695
    %v2517 = vpow.pop %v2516
    %v2518 = vadd.f32 %v2515, 1.0
    %v2519 = vadd.f32 %v2517, 1.0
    %v2520 = vrcp.pop %v2518
    %v2521 = vmul.f32 1.0, %v2520
    %v2522 = vrcp.pop %v2519
    %v2523 = vmul.f32 1.0, %v2522
    %v2524 = vadd.f32 %v2503, %v1436
    %v2526 = vrot.slane %v2524, 4
    %v2528 = vmul.f32 %v2521, %v2526
    %v2529 = vadd.f32 %v1358, %v2528
    %v2530 = vtanh.pop %v2529
    %v2531 = vsub.f32 1.0, %v2523
    %v2532 = vmul.f32 %v2531, %v2530
    %v2534 = vrot.slane %v2246, 6
    %v2536 = vmul.f32 %v2523, %v2534
    %v2537 = vadd.f32 %v2532, %v2536
    %2538 = vst [vmem:[#allocation2] sm:$0x30] %v2537
    %v2539 = vpack.c.bf16 %v2537, %v2537
    %v2540 = vunpack.c.l.bf16 %v2539
    %v2541 = vsub.f32 %v2537, %v2540
    %v2542 = vpack.c.bf16 %v2541, %v2541
    %v2544 = vrot.slane %v2539, 2
    %2546 = vmatprep.subr.bf16.mxu0 %v1519
    %2547 = vmatpush1.bf16.msra.mxu0 %v1518
    %2548 = vmatprep.subr.bf16.mxu0 %v1522
    %2549 = vmatpush1.bf16.msra.mxu0 %v1521
    %2550 = vmatprep.subr.bf16.mxu0 %v1525
    %2551 = vmatpush1.bf16.msra.mxu0 %v1524
    %2552 = vmatprep.subr.bf16.mxu0 %v1528
    %2553 = vmatpush1.bf16.msra.mxu0 %v1527
    %2554 = vmatprep.subr.bf16.mxu0 %v1531
    %2555 = vmatpush1.bf16.msra.mxu0 %v1530
    %2556 = vmatprep.subr.bf16.mxu0 %v1534
    %2557 = vmatpush1.bf16.msra.mxu0 %v1533
    %2558 = vmatprep.subr.bf16.mxu0 %v1537
    %2559 = vmatpush1.bf16.msra.mxu0 %v1536
    %2560 = vmatprep.subr.bf16.mxu0 %v1540
    %2561 = vmatpush1.bf16.msra.mxu0 %v1539
    %2562 = vmatprep.subr.bf16.mxu0 0
    %2563 = vmatpush1.bf16.msra.mxu0 0
    %2564 = vmatprep.subr.bf16.mxu0 0
    %2565 = vmatpush1.bf16.msra.mxu0 0
    %2566 = vmatprep.subr.bf16.mxu0 0
    %2567 = vmatpush1.bf16.msra.mxu0 0
    %2568 = vmatprep.subr.bf16.mxu0 0
    %2569 = vmatpush1.bf16.msra.mxu0 0
    %2570 = vmatprep.subr.bf16.mxu0 0
    %2571 = vmatpush1.bf16.msra.mxu0 0
    %2572 = vmatprep.subr.bf16.mxu0 0
    %2573 = vmatpush1.bf16.msra.mxu0 0
    %2574 = vmatprep.subr.bf16.mxu0 0
    %2575 = vmatpush1.bf16.msra.mxu0 0
    %2576 = vmatprep.subr.bf16.mxu0 0
    %2577 = vmatpush1.bf16.msra.mxu0 0
    %2578 = vmatprep.mubr.bf16.mxu0 0
    %2579 = vmatmul.mubr.bf16.gmra.mrb[0].mxu0 %v2544
    %v2580 = vpop.f32.mrb[0].mxu0
    %v2581 = vadd.f32 0.0, %v2580
    %v2582 = vpop.f32.mrb[0].mxu0
    %v2583 = vadd.f32 0.0, %v2582
    %v2584 = vpop.f32.mrb[0].mxu0
    %v2585 = vpop.f32.mrb[0].mxu0
    %2586 = vdwg.mxu0
    %2587 = vmatprep.subr.bf16.mxu0 0
    %2588 = vmatpush1.bf16.msra.mxu0 %v1520
    %2589 = vmatprep.subr.bf16.mxu0 0
    %2590 = vmatpush1.bf16.msra.mxu0 %v1523
    %2591 = vmatprep.subr.bf16.mxu0 0
    %2592 = vmatpush1.bf16.msra.mxu0 %v1526
    %2593 = vmatprep.subr.bf16.mxu0 0
    %2594 = vmatpush1.bf16.msra.mxu0 %v1529
    %2595 = vmatprep.subr.bf16.mxu0 0
    %2596 = vmatpush1.bf16.msra.mxu0 %v1532
    %2597 = vmatprep.subr.bf16.mxu0 0
    %2598 = vmatpush1.bf16.msra.mxu0 %v1535
    %2599 = vmatprep.subr.bf16.mxu0 0
    %2600 = vmatpush1.bf16.msra.mxu0 %v1538
    %2601 = vmatprep.subr.bf16.mxu0 0
    %2602 = vmatpush1.bf16.msra.mxu0 %v1541
    %2603 = vmatprep.subr.bf16.mxu0 0
    %2604 = vmatpush1.bf16.msra.mxu0 0
    %2605 = vmatprep.subr.bf16.mxu0 0
    %2606 = vmatpush1.bf16.msra.mxu0 0
    %2607 = vmatprep.subr.bf16.mxu0 0
    %2608 = vmatpush1.bf16.msra.mxu0 0
    %2609 = vmatprep.subr.bf16.mxu0 0
    %2610 = vmatpush1.bf16.msra.mxu0 0
    %2611 = vmatprep.subr.bf16.mxu0 0
    %2612 = vmatpush1.bf16.msra.mxu0 0
    %2613 = vmatprep.subr.bf16.mxu0 0
    %2614 = vmatpush1.bf16.msra.mxu0 0
    %2615 = vmatprep.subr.bf16.mxu0 0
    %2616 = vmatpush1.bf16.msra.mxu0 0
    %2617 = vmatprep.subr.bf16.mxu0 0
    %2618 = vmatpush1.bf16.msra.mxu0 0
    %2619 = vmatprep.mubr.bf16.mxu0 0
    %2620 = vmatmul.mubr.bf16.gmra.mrb[0].mxu0 %v2544
    %v2621 = vpop.f32.mrb[0].mxu0
    %v2622 = vadd.f32 0.0, %v2621
    %v2623 = vpop.f32.mrb[0].mxu0
    %v2624 = vpop.f32.mrb[0].mxu0
    %v2625 = vpop.f32.mrb[0].mxu0
    %2626 = vdwg.mxu0
    %2627 = vmatprep.subr.bf16.mxu0 %v1728
    %2628 = vmatpush1.bf16.msra.mxu0 %v1727
    %2629 = vmatprep.subr.bf16.mxu0 %v1731
    %2630 = vmatpush1.bf16.msra.mxu0 %v1730
    %2631 = vmatprep.subr.bf16.mxu0 %v1734
    %2632 = vmatpush1.bf16.msra.mxu0 %v1733
    %2633 = vmatprep.subr.bf16.mxu0 %v1737
    %2634 = vmatpush1.bf16.msra.mxu0 %v1736
    %2635 = vmatprep.subr.bf16.mxu0 %v1740
    %2636 = vmatpush1.bf16.msra.mxu0 %v1739
    %2637 = vmatprep.subr.bf16.mxu0 %v1743
    %2638 = vmatpush1.bf16.msra.mxu0 %v1742
    %2639 = vmatprep.subr.bf16.mxu0 %v1746
    %2640 = vmatpush1.bf16.msra.mxu0 %v1745
    %2641 = vmatprep.subr.bf16.mxu0 %v1749
    %2642 = vmatpush1.bf16.msra.mxu0 %v1748
    %2643 = vmatprep.subr.bf16.mxu0 0
    %2644 = vmatpush1.bf16.msra.mxu0 0
    %2645 = vmatprep.subr.bf16.mxu0 0
    %2646 = vmatpush1.bf16.msra.mxu0 0
    %2647 = vmatprep.subr.bf16.mxu0 0
    %2648 = vmatpush1.bf16.msra.mxu0 0
    %2649 = vmatprep.subr.bf16.mxu0 0
    %2650 = vmatpush1.bf16.msra.mxu0 0
    %2651 = vmatprep.subr.bf16.mxu0 0
    %2652 = vmatpush1.bf16.msra.mxu0 0
    %2653 = vmatprep.subr.bf16.mxu0 0
    %2654 = vmatpush1.bf16.msra.mxu0 0
    %2655 = vmatprep.subr.bf16.mxu0 0
    %2656 = vmatpush1.bf16.msra.mxu0 0
    %2657 = vmatprep.subr.bf16.mxu0 0
    %2658 = vmatpush1.bf16.msra.mxu0 0
    %2659 = vmatprep.mubr.bf16.mxu0 0
    %2660 = vmatmul.mubr.bf16.gmra.mrb[0].mxu0 %v2544
    %v2661 = vpop.f32.mrb[0].mxu0
    %v2662 = vadd.f32 %v2581, %v2661
    %v2663 = vpop.f32.mrb[0].mxu0
    %v2664 = vadd.f32 %v2583, %v2663
    %v2665 = vpop.f32.mrb[0].mxu0
    %v2666 = vpop.f32.mrb[0].mxu0
    %2667 = vdwg.mxu0
    %2668 = vmatprep.subr.bf16.mxu0 0
    %2669 = vmatpush1.bf16.msra.mxu0 %v1729
    %2670 = vmatprep.subr.bf16.mxu0 0
    %2671 = vmatpush1.bf16.msra.mxu0 %v1732
    %2672 = vmatprep.subr.bf16.mxu0 0
    %2673 = vmatpush1.bf16.msra.mxu0 %v1735
    %2674 = vmatprep.subr.bf16.mxu0 0
    %2675 = vmatpush1.bf16.msra.mxu0 %v1738
    %2676 = vmatprep.subr.bf16.mxu0 0
    %2677 = vmatpush1.bf16.msra.mxu0 %v1741
    %2678 = vmatprep.subr.bf16.mxu0 0
    %2679 = vmatpush1.bf16.msra.mxu0 %v1744
    %2680 = vmatprep.subr.bf16.mxu0 0
    %2681 = vmatpush1.bf16.msra.mxu0 %v1747
    %2682 = vmatprep.subr.bf16.mxu0 0
    %2683 = vmatpush1.bf16.msra.mxu0 %v1750
    %2684 = vmatprep.subr.bf16.mxu0 0
    %2685 = vmatpush1.bf16.msra.mxu0 0
    %2686 = vmatprep.subr.bf16.mxu0 0
    %2687 = vmatpush1.bf16.msra.mxu0 0
    %2688 = vmatprep.subr.bf16.mxu0 0
    %2689 = vmatpush1.bf16.msra.mxu0 0
    %2690 = vmatprep.subr.bf16.mxu0 0
    %2691 = vmatpush1.bf16.msra.mxu0 0
    %2692 = vmatprep.subr.bf16.mxu0 0
    %2693 = vmatpush1.bf16.msra.mxu0 0
    %2694 = vmatprep.subr.bf16.mxu0 0
    %2695 = vmatpush1.bf16.msra.mxu0 0
    %2696 = vmatprep.subr.bf16.mxu0 0
    %2697 = vmatpush1.bf16.msra.mxu0 0
    %2698 = vmatprep.subr.bf16.mxu0 0
    %2699 = vmatpush1.bf16.msra.mxu0 0
    %2700 = vmatprep.mubr.bf16.mxu0 0
    %2701 = vmatmul.mubr.bf16.gmra.mrb[0].mxu0 %v2544
    %v2702 = vpop.f32.mrb[0].mxu0
    %v2703 = vadd.f32 %v2622, %v2702
    %v2704 = vpop.f32.mrb[0].mxu0
    %v2705 = vpop.f32.mrb[0].mxu0
    %v2706 = vpop.f32.mrb[0].mxu0
    %2707 = vdwg.mxu0
    %v2709 = vrot.slane %v2542, 2
    %2711 = vmatprep.subr.bf16.mxu0 %v1728
    %2712 = vmatpush1.bf16.msra.mxu0 %v1727
    %2713 = vmatprep.subr.bf16.mxu0 %v1731
    %2714 = vmatpush1.bf16.msra.mxu0 %v1730
    %2715 = vmatprep.subr.bf16.mxu0 %v1734
    %2716 = vmatpush1.bf16.msra.mxu0 %v1733
    %2717 = vmatprep.subr.bf16.mxu0 %v1737
    %2718 = vmatpush1.bf16.msra.mxu0 %v1736
    %2719 = vmatprep.subr.bf16.mxu0 %v1740
    %2720 = vmatpush1.bf16.msra.mxu0 %v1739
    %2721 = vmatprep.subr.bf16.mxu0 %v1743
    %2722 = vmatpush1.bf16.msra.mxu0 %v1742
    %2723 = vmatprep.subr.bf16.mxu0 %v1746
    %2724 = vmatpush1.bf16.msra.mxu0 %v1745
    %2725 = vmatprep.subr.bf16.mxu0 %v1749
    %2726 = vmatpush1.bf16.msra.mxu0 %v1748
    %2727 = vmatprep.subr.bf16.mxu0 0
    %2728 = vmatpush1.bf16.msra.mxu0 0
    %2729 = vmatprep.subr.bf16.mxu0 0
    %2730 = vmatpush1.bf16.msra.mxu0 0
    %2731 = vmatprep.subr.bf16.mxu0 0
    %2732 = vmatpush1.bf16.msra.mxu0 0
    %2733 = vmatprep.subr.bf16.mxu0 0
    %2734 = vmatpush1.bf16.msra.mxu0 0
    %2735 = vmatprep.subr.bf16.mxu0 0
    %2736 = vmatpush1.bf16.msra.mxu0 0
    %2737 = vmatprep.subr.bf16.mxu0 0
    %2738 = vmatpush1.bf16.msra.mxu0 0
    %2739 = vmatprep.subr.bf16.mxu0 0
    %2740 = vmatpush1.bf16.msra.mxu0 0
    %2741 = vmatprep.subr.bf16.mxu0 0
    %2742 = vmatpush1.bf16.msra.mxu0 0
    %2743 = vmatprep.mubr.bf16.mxu0 0
    %2744 = vmatmul.mubr.bf16.gmra.mrb[0].mxu0 %v2709
    %v2745 = vpop.f32.mrb[0].mxu0
    %v2746 = vadd.f32 0.0, %v2745
    %v2747 = vpop.f32.mrb[0].mxu0
    %v2748 = vadd.f32 0.0, %v2747
    %v2749 = vpop.f32.mrb[0].mxu0
    %v2750 = vpop.f32.mrb[0].mxu0
    %2751 = vdwg.mxu0
    %2752 = vmatprep.subr.bf16.mxu0 0
    %2753 = vmatpush1.bf16.msra.mxu0 %v1729
    %2754 = vmatprep.subr.bf16.mxu0 0
    %2755 = vmatpush1.bf16.msra.mxu0 %v1732
    %2756 = vmatprep.subr.bf16.mxu0 0
    %2757 = vmatpush1.bf16.msra.mxu0 %v1735
    %2758 = vmatprep.subr.bf16.mxu0 0
    %2759 = vmatpush1.bf16.msra.mxu0 %v1738
    %2760 = vmatprep.subr.bf16.mxu0 0
    %2761 = vmatpush1.bf16.msra.mxu0 %v1741
    %2762 = vmatprep.subr.bf16.mxu0 0
    %2763 = vmatpush1.bf16.msra.mxu0 %v1744
    %2764 = vmatprep.subr.bf16.mxu0 0
    %2765 = vmatpush1.bf16.msra.mxu0 %v1747
    %2766 = vmatprep.subr.bf16.mxu0 0
    %2767 = vmatpush1.bf16.msra.mxu0 %v1750
    %2768 = vmatprep.subr.bf16.mxu0 0
    %2769 = vmatpush1.bf16.msra.mxu0 0
    %2770 = vmatprep.subr.bf16.mxu0 0
    %2771 = vmatpush1.bf16.msra.mxu0 0
    %2772 = vmatprep.subr.bf16.mxu0 0
    %2773 = vmatpush1.bf16.msra.mxu0 0
    %2774 = vmatprep.subr.bf16.mxu0 0
    %2775 = vmatpush1.bf16.msra.mxu0 0
    %2776 = vmatprep.subr.bf16.mxu0 0
    %2777 = vmatpush1.bf16.msra.mxu0 0
    %2778 = vmatprep.subr.bf16.mxu0 0
    %2779 = vmatpush1.bf16.msra.mxu0 0
    %2780 = vmatprep.subr.bf16.mxu0 0
    %2781 = vmatpush1.bf16.msra.mxu0 0
    %2782 = vmatprep.subr.bf16.mxu0 0
    %2783 = vmatpush1.bf16.msra.mxu0 0
    %2784 = vmatprep.mubr.bf16.mxu0 0
    %2785 = vmatmul.mubr.bf16.gmra.mrb[0].mxu0 %v2709
    %v2786 = vpop.f32.mrb[0].mxu0
    %v2787 = vadd.f32 0.0, %v2786
    %v2788 = vpop.f32.mrb[0].mxu0
    %v2789 = vpop.f32.mrb[0].mxu0
    %v2790 = vpop.f32.mrb[0].mxu0
    %2791 = vdwg.mxu0
    %v2792 = vadd.f32 %v2662, %v2746
    %v2793 = vadd.f32 %v2664, %v2748
    %v2794 = vadd.f32 %v2703, %v2787
    %v2797 = vrot.slane %v2792, 2
    %v2798 = vrot.slane %v2793, 2
    %v2801 = vadd.f32 %v776, %v2797
    %v2802 = vadd.f32 %v778, %v2798
    %v2803 = vxor.u32 %v2801, 2147483648
    %v2804 = vxor.u32 %v2802, 2147483648
    %v2805 = vmul.f32 %v2803, 1.442695
    %v2806 = vpow.pop %v2805
    %v2807 = vmul.f32 %v2804, 1.442695
    %v2808 = vpow.pop %v2807
    %v2809 = vadd.f32 %v2806, 1.0
    %v2810 = vadd.f32 %v2808, 1.0
    %v2811 = vrcp.pop %v2809
    %v2812 = vmul.f32 1.0, %v2811
    %v2813 = vrcp.pop %v2810
    %v2814 = vmul.f32 1.0, %v2813
    %v2815 = vadd.f32 %v2794, %v1436
    %v2817 = vrot.slane %v2815, 2
    %v2819 = vmul.f32 %v2812, %v2817
    %v2820 = vadd.f32 %v1358, %v2819
    %v2821 = vtanh.pop %v2820
    %v2822 = vsub.f32 1.0, %v2814
    %v2823 = vmul.f32 %v2822, %v2821
    %v2825 = vrot.slane %v2537, 6
    %v2827 = vmul.f32 %v2814, %v2825
    %v2828 = vadd.f32 %v2823, %v2827
    %2829 = vst [vmem:[#allocation2] sm:$0xc0] %v2828
    %v2830 = vpack.c.bf16 %v2828, %v2828
    %v2831 = vunpack.c.l.bf16 %v2830
    %v2832 = vsub.f32 %v2828, %v2831
    %v2833 = vpack.c.bf16 %v2832, %v2832
    %v2835 = vrot.slane %v2830, 3
    %2837 = vmatprep.subr.bf16.mxu0 %v1519
    %2838 = vmatpush1.bf16.msra.mxu0 %v1518
    %2839 = vmatprep.subr.bf16.mxu0 %v1522
    %2840 = vmatpush1.bf16.msra.mxu0 %v1521
    %2841 = vmatprep.subr.bf16.mxu0 %v1525
    %2842 = vmatpush1.bf16.msra.mxu0 %v1524
    %2843 = vmatprep.subr.bf16.mxu0 %v1528
    %2844 = vmatpush1.bf16.msra.mxu0 %v1527
    %2845 = vmatprep.subr.bf16.mxu0 %v1531
    %2846 = vmatpush1.bf16.msra.mxu0 %v1530
    %2847 = vmatprep.subr.bf16.mxu0 %v1534
    %2848 = vmatpush1.bf16.msra.mxu0 %v1533
    %2849 = vmatprep.subr.bf16.mxu0 %v1537
    %2850 = vmatpush1.bf16.msra.mxu0 %v1536
    %2851 = vmatprep.subr.bf16.mxu0 %v1540
    %2852 = vmatpush1.bf16.msra.mxu0 %v1539
    %2853 = vmatprep.subr.bf16.mxu0 0
    %2854 = vmatpush1.bf16.msra.mxu0 0
    %2855 = vmatprep.subr.bf16.mxu0 0
    %2856 = vmatpush1.bf16.msra.mxu0 0
    %2857 = vmatprep.subr.bf16.mxu0 0
    %2858 = vmatpush1.bf16.msra.mxu0 0
    %2859 = vmatprep.subr.bf16.mxu0 0
    %2860 = vmatpush1.bf16.msra.mxu0 0
    %2861 = vmatprep.subr.bf16.mxu0 0
    %2862 = vmatpush1.bf16.msra.mxu0 0
    %2863 = vmatprep.subr.bf16.mxu0 0
    %2864 = vmatpush1.bf16.msra.mxu0 0
    %2865 = vmatprep.subr.bf16.mxu0 0
    %2866 = vmatpush1.bf16.msra.mxu0 0
    %2867 = vmatprep.subr.bf16.mxu0 0
    %2868 = vmatpush1.bf16.msra.mxu0 0
    %2869 = vmatprep.mubr.bf16.mxu0 0
    %2870 = vmatmul.mubr.bf16.gmra.mrb[0].mxu0 %v2835
    %v2871 = vpop.f32.mrb[0].mxu0
    %v2872 = vadd.f32 0.0, %v2871
    %v2873 = vpop.f32.mrb[0].mxu0
    %v2874 = vadd.f32 0.0, %v2873
    %v2875 = vpop.f32.mrb[0].mxu0
    %v2876 = vpop.f32.mrb[0].mxu0
    %2877 = vdwg.mxu0
    %2878 = vmatprep.subr.bf16.mxu0 0
    %2879 = vmatpush1.bf16.msra.mxu0 %v1520
    %2880 = vmatprep.subr.bf16.mxu0 0
    %2881 = vmatpush1.bf16.msra.mxu0 %v1523
    %2882 = vmatprep.subr.bf16.mxu0 0
    %2883 = vmatpush1.bf16.msra.mxu0 %v1526
    %2884 = vmatprep.subr.bf16.mxu0 0
    %2885 = vmatpush1.bf16.msra.mxu0 %v1529
    %2886 = vmatprep.subr.bf16.mxu0 0
    %2887 = vmatpush1.bf16.msra.mxu0 %v1532
    %2888 = vmatprep.subr.bf16.mxu0 0
    %2889 = vmatpush1.bf16.msra.mxu0 %v1535
    %2890 = vmatprep.subr.bf16.mxu0 0
    %2891 = vmatpush1.bf16.msra.mxu0 %v1538
    %2892 = vmatprep.subr.bf16.mxu0 0
    %2893 = vmatpush1.bf16.msra.mxu0 %v1541
    %2894 = vmatprep.subr.bf16.mxu0 0
    %2895 = vmatpush1.bf16.msra.mxu0 0
    %2896 = vmatprep.subr.bf16.mxu0 0
    %2897 = vmatpush1.bf16.msra.mxu0 0
    %2898 = vmatprep.subr.bf16.mxu0 0
    %2899 = vmatpush1.bf16.msra.mxu0 0
    %2900 = vmatprep.subr.bf16.mxu0 0
    %2901 = vmatpush1.bf16.msra.mxu0 0
    %2902 = vmatprep.subr.bf16.mxu0 0
    %2903 = vmatpush1.bf16.msra.mxu0 0
    %2904 = vmatprep.subr.bf16.mxu0 0
    %2905 = vmatpush1.bf16.msra.mxu0 0
    %2906 = vmatprep.subr.bf16.mxu0 0
    %2907 = vmatpush1.bf16.msra.mxu0 0
    %2908 = vmatprep.subr.bf16.mxu0 0
    %2909 = vmatpush1.bf16.msra.mxu0 0
    %2910 = vmatprep.mubr.bf16.mxu0 0
    %2911 = vmatmul.mubr.bf16.gmra.mrb[0].mxu0 %v2835
    %v2912 = vpop.f32.mrb[0].mxu0
    %v2913 = vadd.f32 0.0, %v2912
    %v2914 = vpop.f32.mrb[0].mxu0
    %v2915 = vpop.f32.mrb[0].mxu0
    %v2916 = vpop.f32.mrb[0].mxu0
    %2917 = vdwg.mxu0
    %2918 = vmatprep.subr.bf16.mxu0 %v1728
    %2919 = vmatpush1.bf16.msra.mxu0 %v1727
    %2920 = vmatprep.subr.bf16.mxu0 %v1731
    %2921 = vmatpush1.bf16.msra.mxu0 %v1730
    %2922 = vmatprep.subr.bf16.mxu0 %v1734
    %2923 = vmatpush1.bf16.msra.mxu0 %v1733
    %2924 = vmatprep.subr.bf16.mxu0 %v1737
    %2925 = vmatpush1.bf16.msra.mxu0 %v1736
    %2926 = vmatprep.subr.bf16.mxu0 %v1740
    %2927 = vmatpush1.bf16.msra.mxu0 %v1739
    %2928 = vmatprep.subr.bf16.mxu0 %v1743
    %2929 = vmatpush1.bf16.msra.mxu0 %v1742
    %2930 = vmatprep.subr.bf16.mxu0 %v1746
    %2931 = vmatpush1.bf16.msra.mxu0 %v1745
    %2932 = vmatprep.subr.bf16.mxu0 %v1749
    %2933 = vmatpush1.bf16.msra.mxu0 %v1748
    %2934 = vmatprep.subr.bf16.mxu0 0
    %2935 = vmatpush1.bf16.msra.mxu0 0
    %2936 = vmatprep.subr.bf16.mxu0 0
    %2937 = vmatpush1.bf16.msra.mxu0 0
    %2938 = vmatprep.subr.bf16.mxu0 0
    %2939 = vmatpush1.bf16.msra.mxu0 0
    %2940 = vmatprep.subr.bf16.mxu0 0
    %2941 = vmatpush1.bf16.msra.mxu0 0
    %2942 = vmatprep.subr.bf16.mxu0 0
    %2943 = vmatpush1.bf16.msra.mxu0 0
    %2944 = vmatprep.subr.bf16.mxu0 0
    %2945 = vmatpush1.bf16.msra.mxu0 0
    %2946 = vmatprep.subr.bf16.mxu0 0
    %2947 = vmatpush1.bf16.msra.mxu0 0
    %2948 = vmatprep.subr.bf16.mxu0 0
    %2949 = vmatpush1.bf16.msra.mxu0 0
    %2950 = vmatprep.mubr.bf16.mxu0 0
    %2951 = vmatmul.mubr.bf16.gmra.mrb[0].mxu0 %v2835
    %v2952 = vpop.f32.mrb[0].mxu0
    %v2953 = vadd.f32 %v2872, %v2952
    %v2954 = vpop.f32.mrb[0].mxu0
    %v2955 = vadd.f32 %v2874, %v2954
    %v2956 = vpop.f32.mrb[0].mxu0
    %v2957 = vpop.f32.mrb[0].mxu0
    %2958 = vdwg.mxu0
    %2959 = vmatprep.subr.bf16.mxu0 0
    %2960 = vmatpush1.bf16.msra.mxu0 %v1729
    %2961 = vmatprep.subr.bf16.mxu0 0
    %2962 = vmatpush1.bf16.msra.mxu0 %v1732
    %2963 = vmatprep.subr.bf16.mxu0 0
    %2964 = vmatpush1.bf16.msra.mxu0 %v1735
    %2965 = vmatprep.subr.bf16.mxu0 0
    %2966 = vmatpush1.bf16.msra.mxu0 %v1738
    %2967 = vmatprep.subr.bf16.mxu0 0
    %2968 = vmatpush1.bf16.msra.mxu0 %v1741
    %2969 = vmatprep.subr.bf16.mxu0 0
    %2970 = vmatpush1.bf16.msra.mxu0 %v1744
    %2971 = vmatprep.subr.bf16.mxu0 0
    %2972 = vmatpush1.bf16.msra.mxu0 %v1747
    %2973 = vmatprep.subr.bf16.mxu0 0
    %2974 = vmatpush1.bf16.msra.mxu0 %v1750
    %2975 = vmatprep.subr.bf16.mxu0 0
    %2976 = vmatpush1.bf16.msra.mxu0 0
    %2977 = vmatprep.subr.bf16.mxu0 0
    %2978 = vmatpush1.bf16.msra.mxu0 0
    %2979 = vmatprep.subr.bf16.mxu0 0
    %2980 = vmatpush1.bf16.msra.mxu0 0
    %2981 = vmatprep.subr.bf16.mxu0 0
    %2982 = vmatpush1.bf16.msra.mxu0 0
    %2983 = vmatprep.subr.bf16.mxu0 0
    %2984 = vmatpush1.bf16.msra.mxu0 0
    %2985 = vmatprep.subr.bf16.mxu0 0
    %2986 = vmatpush1.bf16.msra.mxu0 0
    %2987 = vmatprep.subr.bf16.mxu0 0
    %2988 = vmatpush1.bf16.msra.mxu0 0
    %2989 = vmatprep.subr.bf16.mxu0 0
    %2990 = vmatpush1.bf16.msra.mxu0 0
    %2991 = vmatprep.mubr.bf16.mxu0 0
    %2992 = vmatmul.mubr.bf16.gmra.mrb[0].mxu0 %v2835
    %v2993 = vpop.f32.mrb[0].mxu0
    %v2994 = vadd.f32 %v2913, %v2993
    %v2995 = vpop.f32.mrb[0].mxu0
    %v2996 = vpop.f32.mrb[0].mxu0
    %v2997 = vpop.f32.mrb[0].mxu0
    %2998 = vdwg.mxu0
    %v3000 = vrot.slane %v2833, 3
    %3002 = vmatprep.subr.bf16.mxu0 %v1728
    %3003 = vmatpush1.bf16.msra.mxu0 %v1727
    %3004 = vmatprep.subr.bf16.mxu0 %v1731
    %3005 = vmatpush1.bf16.msra.mxu0 %v1730
    %3006 = vmatprep.subr.bf16.mxu0 %v1734
    %3007 = vmatpush1.bf16.msra.mxu0 %v1733
    %3008 = vmatprep.subr.bf16.mxu0 %v1737
    %3009 = vmatpush1.bf16.msra.mxu0 %v1736
    %3010 = vmatprep.subr.bf16.mxu0 %v1740
    %3011 = vmatpush1.bf16.msra.mxu0 %v1739
    %3012 = vmatprep.subr.bf16.mxu0 %v1743
    %3013 = vmatpush1.bf16.msra.mxu0 %v1742
    %3014 = vmatprep.subr.bf16.mxu0 %v1746
    %3015 = vmatpush1.bf16.msra.mxu0 %v1745
    %3016 = vmatprep.subr.bf16.mxu0 %v1749
    %3017 = vmatpush1.bf16.msra.mxu0 %v1748
    %3018 = vmatprep.subr.bf16.mxu0 0
    %3019 = vmatpush1.bf16.msra.mxu0 0
    %3020 = vmatprep.subr.bf16.mxu0 0
    %3021 = vmatpush1.bf16.msra.mxu0 0
    %3022 = vmatprep.subr.bf16.mxu0 0
    %3023 = vmatpush1.bf16.msra.mxu0 0
    %3024 = vmatprep.subr.bf16.mxu0 0
    %3025 = vmatpush1.bf16.msra.mxu0 0
    %3026 = vmatprep.subr.bf16.mxu0 0
    %3027 = vmatpush1.bf16.msra.mxu0 0
    %3028 = vmatprep.subr.bf16.mxu0 0
    %3029 = vmatpush1.bf16.msra.mxu0 0
    %3030 = vmatprep.subr.bf16.mxu0 0
    %3031 = vmatpush1.bf16.msra.mxu0 0
    %3032 = vmatprep.subr.bf16.mxu0 0
    %3033 = vmatpush1.bf16.msra.mxu0 0
    %3034 = vmatprep.mubr.bf16.mxu0 0
    %3035 = vmatmul.mubr.bf16.gmra.mrb[0].mxu0 %v3000
    %v3036 = vpop.f32.mrb[0].mxu0
    %v3037 = vadd.f32 0.0, %v3036
    %v3038 = vpop.f32.mrb[0].mxu0
    %v3039 = vadd.f32 0.0, %v3038
    %v3040 = vpop.f32.mrb[0].mxu0
    %v3041 = vpop.f32.mrb[0].mxu0
    %3042 = vdwg.mxu0
    %3043 = vmatprep.subr.bf16.mxu0 0
    %3044 = vmatpush1.bf16.msra.mxu0 %v1729
    %3045 = vmatprep.subr.bf16.mxu0 0
    %3046 = vmatpush1.bf16.msra.mxu0 %v1732
    %3047 = vmatprep.subr.bf16.mxu0 0
    %3048 = vmatpush1.bf16.msra.mxu0 %v1735
    %3049 = vmatprep.subr.bf16.mxu0 0
    %3050 = vmatpush1.bf16.msra.mxu0 %v1738
    %3051 = vmatprep.subr.bf16.mxu0 0
    %3052 = vmatpush1.bf16.msra.mxu0 %v1741
    %3053 = vmatprep.subr.bf16.mxu0 0
    %3054 = vmatpush1.bf16.msra.mxu0 %v1744
    %3055 = vmatprep.subr.bf16.mxu0 0
    %3056 = vmatpush1.bf16.msra.mxu0 %v1747
    %3057 = vmatprep.subr.bf16.mxu0 0
    %3058 = vmatpush1.bf16.msra.mxu0 %v1750
    %3059 = vmatprep.subr.bf16.mxu0 0
    %3060 = vmatpush1.bf16.msra.mxu0 0
    %3061 = vmatprep.subr.bf16.mxu0 0
    %3062 = vmatpush1.bf16.msra.mxu0 0
    %3063 = vmatprep.subr.bf16.mxu0 0
    %3064 = vmatpush1.bf16.msra.mxu0 0
    %3065 = vmatprep.subr.bf16.mxu0 0
    %3066 = vmatpush1.bf16.msra.mxu0 0
    %3067 = vmatprep.subr.bf16.mxu0 0
    %3068 = vmatpush1.bf16.msra.mxu0 0
    %3069 = vmatprep.subr.bf16.mxu0 0
    %3070 = vmatpush1.bf16.msra.mxu0 0
    %3071 = vmatprep.subr.bf16.mxu0 0
    %3072 = vmatpush1.bf16.msra.mxu0 0
    %3073 = vmatprep.subr.bf16.mxu0 0
    %3074 = vmatpush1.bf16.msra.mxu0 0
    %3075 = vmatprep.mubr.bf16.mxu0 0
    %3076 = vmatmul.mubr.bf16.gmra.mrb[0].mxu0 %v3000
    %v3077 = vpop.f32.mrb[0].mxu0
    %v3078 = vadd.f32 0.0, %v3077
    %v3079 = vpop.f32.mrb[0].mxu0
    %v3080 = vpop.f32.mrb[0].mxu0
    %v3081 = vpop.f32.mrb[0].mxu0
    %3082 = vdwg.mxu0
    %v3083 = vadd.f32 %v2953, %v3037
    %v3084 = vadd.f32 %v2955, %v3039
    %v3085 = vadd.f32 %v2994, %v3078
    %v3086 = vadd.f32 %v783, %v3083
    %v3087 = vadd.f32 %v785, %v3084
    %v3088 = vxor.u32 %v3086, 2147483648
    %v3089 = vxor.u32 %v3087, 2147483648
    %v3090 = vmul.f32 %v3088, 1.442695
    %v3091 = vpow.pop %v3090
    %v3092 = vmul.f32 %v3089, 1.442695
    %v3093 = vpow.pop %v3092
    %v3094 = vadd.f32 %v3091, 1.0
    %v3095 = vadd.f32 %v3093, 1.0
    %v3096 = vrcp.pop %v3094
    %v3097 = vmul.f32 1.0, %v3096
    %v3098 = vrcp.pop %v3095
    %v3099 = vmul.f32 1.0, %v3098
    %v3100 = vadd.f32 %v3085, %v1436
    %v3101 = vmul.f32 %v3097, %v3100
    %v3102 = vadd.f32 %v1364, %v3101
    %v3103 = vtanh.pop %v3102
    %v3104 = vsub.f32 1.0, %v3099
    %v3105 = vmul.f32 %v3104, %v3103
    %v3107 = vrot.slane %v2828, 6
    %v3109 = vmul.f32 %v3099, %v3107
    %v3110 = vadd.f32 %v3105, %v3109
    %3111 = vst [vmem:[#allocation2 + $0x8] sm:$0x3] %v3110
    %v3112 = vpack.c.bf16 %v3110, %v3110
    %v3113 = vunpack.c.l.bf16 %v3112
    %v3114 = vsub.f32 %v3110, %v3113
    %v3115 = vpack.c.bf16 %v3114, %v3114
    %3116 = vmatprep.subr.bf16.mxu0 %v1519
    %3117 = vmatpush1.bf16.msra.mxu0 %v1518
    %3118 = vmatprep.subr.bf16.mxu0 %v1522
    %3119 = vmatpush1.bf16.msra.mxu0 %v1521
    %3120 = vmatprep.subr.bf16.mxu0 %v1525
    %3121 = vmatpush1.bf16.msra.mxu0 %v1524
    %3122 = vmatprep.subr.bf16.mxu0 %v1528
    %3123 = vmatpush1.bf16.msra.mxu0 %v1527
    %3124 = vmatprep.subr.bf16.mxu0 %v1531
    %3125 = vmatpush1.bf16.msra.mxu0 %v1530
    %3126 = vmatprep.subr.bf16.mxu0 %v1534
    %3127 = vmatpush1.bf16.msra.mxu0 %v1533
    %3128 = vmatprep.subr.bf16.mxu0 %v1537
    %3129 = vmatpush1.bf16.msra.mxu0 %v1536
    %3130 = vmatprep.subr.bf16.mxu0 %v1540
    %3131 = vmatpush1.bf16.msra.mxu0 %v1539
    %3132 = vmatprep.subr.bf16.mxu0 0
    %3133 = vmatpush1.bf16.msra.mxu0 0
    %3134 = vmatprep.subr.bf16.mxu0 0
    %3135 = vmatpush1.bf16.msra.mxu0 0
    %3136 = vmatprep.subr.bf16.mxu0 0
    %3137 = vmatpush1.bf16.msra.mxu0 0
    %3138 = vmatprep.subr.bf16.mxu0 0
    %3139 = vmatpush1.bf16.msra.mxu0 0
    %3140 = vmatprep.subr.bf16.mxu0 0
    %3141 = vmatpush1.bf16.msra.mxu0 0
    %3142 = vmatprep.subr.bf16.mxu0 0
    %3143 = vmatpush1.bf16.msra.mxu0 0
    %3144 = vmatprep.subr.bf16.mxu0 0
    %3145 = vmatpush1.bf16.msra.mxu0 0
    %3146 = vmatprep.subr.bf16.mxu0 0
    %3147 = vmatpush1.bf16.msra.mxu0 0
    %3148 = vmatprep.mubr.bf16.mxu0 0
    %3149 = vmatmul.mubr.bf16.gmra.mrb[0].mxu0 %v3112
    %v3150 = vpop.f32.mrb[0].mxu0
    %v3151 = vadd.f32 0.0, %v3150
    %v3152 = vpop.f32.mrb[0].mxu0
    %v3153 = vadd.f32 0.0, %v3152
    %v3154 = vpop.f32.mrb[0].mxu0
    %v3155 = vpop.f32.mrb[0].mxu0
    %3156 = vdwg.mxu0
    %3157 = vmatprep.subr.bf16.mxu0 0
    %3158 = vmatpush1.bf16.msra.mxu0 %v1520
    %3159 = vmatprep.subr.bf16.mxu0 0
    %3160 = vmatpush1.bf16.msra.mxu0 %v1523
    %3161 = vmatprep.subr.bf16.mxu0 0
    %3162 = vmatpush1.bf16.msra.mxu0 %v1526
    %3163 = vmatprep.subr.bf16.mxu0 0
    %3164 = vmatpush1.bf16.msra.mxu0 %v1529
    %3165 = vmatprep.subr.bf16.mxu0 0
    %3166 = vmatpush1.bf16.msra.mxu0 %v1532
    %3167 = vmatprep.subr.bf16.mxu0 0
    %3168 = vmatpush1.bf16.msra.mxu0 %v1535
    %3169 = vmatprep.subr.bf16.mxu0 0
    %3170 = vmatpush1.bf16.msra.mxu0 %v1538
    %3171 = vmatprep.subr.bf16.mxu0 0
    %3172 = vmatpush1.bf16.msra.mxu0 %v1541
    %3173 = vmatprep.subr.bf16.mxu0 0
    %3174 = vmatpush1.bf16.msra.mxu0 0
    %3175 = vmatprep.subr.bf16.mxu0 0
    %3176 = vmatpush1.bf16.msra.mxu0 0
    %3177 = vmatprep.subr.bf16.mxu0 0
    %3178 = vmatpush1.bf16.msra.mxu0 0
    %3179 = vmatprep.subr.bf16.mxu0 0
    %3180 = vmatpush1.bf16.msra.mxu0 0
    %3181 = vmatprep.subr.bf16.mxu0 0
    %3182 = vmatpush1.bf16.msra.mxu0 0
    %3183 = vmatprep.subr.bf16.mxu0 0
    %3184 = vmatpush1.bf16.msra.mxu0 0
    %3185 = vmatprep.subr.bf16.mxu0 0
    %3186 = vmatpush1.bf16.msra.mxu0 0
    %3187 = vmatprep.subr.bf16.mxu0 0
    %3188 = vmatpush1.bf16.msra.mxu0 0
    %3189 = vmatprep.mubr.bf16.mxu0 0
    %3190 = vmatmul.mubr.bf16.gmra.mrb[0].mxu0 %v3112
    %v3191 = vpop.f32.mrb[0].mxu0
    %v3192 = vadd.f32 0.0, %v3191
    %v3193 = vpop.f32.mrb[0].mxu0
    %v3194 = vpop.f32.mrb[0].mxu0
    %v3195 = vpop.f32.mrb[0].mxu0
    %3196 = vdwg.mxu0
    %3197 = vmatprep.subr.bf16.mxu0 %v1728
    %3198 = vmatpush1.bf16.msra.mxu0 %v1727
    %3199 = vmatprep.subr.bf16.mxu0 %v1731
    %3200 = vmatpush1.bf16.msra.mxu0 %v1730
    %3201 = vmatprep.subr.bf16.mxu0 %v1734
    %3202 = vmatpush1.bf16.msra.mxu0 %v1733
    %3203 = vmatprep.subr.bf16.mxu0 %v1737
    %3204 = vmatpush1.bf16.msra.mxu0 %v1736
    %3205 = vmatprep.subr.bf16.mxu0 %v1740
    %3206 = vmatpush1.bf16.msra.mxu0 %v1739
    %3207 = vmatprep.subr.bf16.mxu0 %v1743
    %3208 = vmatpush1.bf16.msra.mxu0 %v1742
    %3209 = vmatprep.subr.bf16.mxu0 %v1746
    %3210 = vmatpush1.bf16.msra.mxu0 %v1745
    %3211 = vmatprep.subr.bf16.mxu0 %v1749
    %3212 = vmatpush1.bf16.msra.mxu0 %v1748
    %3213 = vmatprep.subr.bf16.mxu0 0
    %3214 = vmatpush1.bf16.msra.mxu0 0
    %3215 = vmatprep.subr.bf16.mxu0 0
    %3216 = vmatpush1.bf16.msra.mxu0 0
    %3217 = vmatprep.subr.bf16.mxu0 0
    %3218 = vmatpush1.bf16.msra.mxu0 0
    %3219 = vmatprep.subr.bf16.mxu0 0
    %3220 = vmatpush1.bf16.msra.mxu0 0
    %3221 = vmatprep.subr.bf16.mxu0 0
    %3222 = vmatpush1.bf16.msra.mxu0 0
    %3223 = vmatprep.subr.bf16.mxu0 0
    %3224 = vmatpush1.bf16.msra.mxu0 0
    %3225 = vmatprep.subr.bf16.mxu0 0
    %3226 = vmatpush1.bf16.msra.mxu0 0
    %3227 = vmatprep.subr.bf16.mxu0 0
    %3228 = vmatpush1.bf16.msra.mxu0 0
    %3229 = vmatprep.mubr.bf16.mxu0 0
    %3230 = vmatmul.mubr.bf16.gmra.mrb[0].mxu0 %v3112
    %v3231 = vpop.f32.mrb[0].mxu0
    %v3232 = vadd.f32 %v3151, %v3231
    %v3233 = vpop.f32.mrb[0].mxu0
    %v3234 = vadd.f32 %v3153, %v3233
    %v3235 = vpop.f32.mrb[0].mxu0
    %v3236 = vpop.f32.mrb[0].mxu0
    %3237 = vdwg.mxu0
    %3238 = vmatprep.subr.bf16.mxu0 0
    %3239 = vmatpush1.bf16.msra.mxu0 %v1729
    %3240 = vmatprep.subr.bf16.mxu0 0
    %3241 = vmatpush1.bf16.msra.mxu0 %v1732
    %3242 = vmatprep.subr.bf16.mxu0 0
    %3243 = vmatpush1.bf16.msra.mxu0 %v1735
    %3244 = vmatprep.subr.bf16.mxu0 0
    %3245 = vmatpush1.bf16.msra.mxu0 %v1738
    %3246 = vmatprep.subr.bf16.mxu0 0
    %3247 = vmatpush1.bf16.msra.mxu0 %v1741
    %3248 = vmatprep.subr.bf16.mxu0 0
    %3249 = vmatpush1.bf16.msra.mxu0 %v1744
    %3250 = vmatprep.subr.bf16.mxu0 0
    %3251 = vmatpush1.bf16.msra.mxu0 %v1747
    %3252 = vmatprep.subr.bf16.mxu0 0
    %3253 = vmatpush1.bf16.msra.mxu0 %v1750
    %3254 = vmatprep.subr.bf16.mxu0 0
    %3255 = vmatpush1.bf16.msra.mxu0 0
    %3256 = vmatprep.subr.bf16.mxu0 0
    %3257 = vmatpush1.bf16.msra.mxu0 0
    %3258 = vmatprep.subr.bf16.mxu0 0
    %3259 = vmatpush1.bf16.msra.mxu0 0
    %3260 = vmatprep.subr.bf16.mxu0 0
    %3261 = vmatpush1.bf16.msra.mxu0 0
    %3262 = vmatprep.subr.bf16.mxu0 0
    %3263 = vmatpush1.bf16.msra.mxu0 0
    %3264 = vmatprep.subr.bf16.mxu0 0
    %3265 = vmatpush1.bf16.msra.mxu0 0
    %3266 = vmatprep.subr.bf16.mxu0 0
    %3267 = vmatpush1.bf16.msra.mxu0 0
    %3268 = vmatprep.subr.bf16.mxu0 0
    %3269 = vmatpush1.bf16.msra.mxu0 0
    %3270 = vmatprep.mubr.bf16.mxu0 0
    %3271 = vmatmul.mubr.bf16.gmra.mrb[0].mxu0 %v3112
    %v3272 = vpop.f32.mrb[0].mxu0
    %v3273 = vadd.f32 %v3192, %v3272
    %v3274 = vpop.f32.mrb[0].mxu0
    %v3275 = vpop.f32.mrb[0].mxu0
    %v3276 = vpop.f32.mrb[0].mxu0
    %3277 = vdwg.mxu0
    %3278 = vmatprep.subr.bf16.mxu0 %v1728
    %3279 = vmatpush1.bf16.msra.mxu0 %v1727
    %3280 = vmatprep.subr.bf16.mxu0 %v1731
    %3281 = vmatpush1.bf16.msra.mxu0 %v1730
    %3282 = vmatprep.subr.bf16.mxu0 %v1734
    %3283 = vmatpush1.bf16.msra.mxu0 %v1733
    %3284 = vmatprep.subr.bf16.mxu0 %v1737
    %3285 = vmatpush1.bf16.msra.mxu0 %v1736
    %3286 = vmatprep.subr.bf16.mxu0 %v1740
    %3287 = vmatpush1.bf16.msra.mxu0 %v1739
    %3288 = vmatprep.subr.bf16.mxu0 %v1743
    %3289 = vmatpush1.bf16.msra.mxu0 %v1742
    %3290 = vmatprep.subr.bf16.mxu0 %v1746
    %3291 = vmatpush1.bf16.msra.mxu0 %v1745
    %3292 = vmatprep.subr.bf16.mxu0 %v1749
    %3293 = vmatpush1.bf16.msra.mxu0 %v1748
    %3294 = vmatprep.subr.bf16.mxu0 0
    %3295 = vmatpush1.bf16.msra.mxu0 0
    %3296 = vmatprep.subr.bf16.mxu0 0
    %3297 = vmatpush1.bf16.msra.mxu0 0
    %3298 = vmatprep.subr.bf16.mxu0 0
    %3299 = vmatpush1.bf16.msra.mxu0 0
    %3300 = vmatprep.subr.bf16.mxu0 0
    %3301 = vmatpush1.bf16.msra.mxu0 0
    %3302 = vmatprep.subr.bf16.mxu0 0
    %3303 = vmatpush1.bf16.msra.mxu0 0
    %3304 = vmatprep.subr.bf16.mxu0 0
    %3305 = vmatpush1.bf16.msra.mxu0 0
    %3306 = vmatprep.subr.bf16.mxu0 0
    %3307 = vmatpush1.bf16.msra.mxu0 0
    %3308 = vmatprep.subr.bf16.mxu0 0
    %3309 = vmatpush1.bf16.msra.mxu0 0
    %3310 = vmatprep.mubr.bf16.mxu0 0
    %3311 = vmatmul.mubr.bf16.gmra.mrb[0].mxu0 %v3115
    %v3312 = vpop.f32.mrb[0].mxu0
    %v3313 = vadd.f32 0.0, %v3312
    %v3314 = vpop.f32.mrb[0].mxu0
    %v3315 = vadd.f32 0.0, %v3314
    %v3316 = vpop.f32.mrb[0].mxu0
    %v3317 = vpop.f32.mrb[0].mxu0
    %3318 = vdwg.mxu0
    %3319 = vmatprep.subr.bf16.mxu0 0
    %3320 = vmatpush1.bf16.msra.mxu0 %v1729
    %3321 = vmatprep.subr.bf16.mxu0 0
    %3322 = vmatpush1.bf16.msra.mxu0 %v1732
    %3323 = vmatprep.subr.bf16.mxu0 0
    %3324 = vmatpush1.bf16.msra.mxu0 %v1735
    %3325 = vmatprep.subr.bf16.mxu0 0
    %3326 = vmatpush1.bf16.msra.mxu0 %v1738
    %3327 = vmatprep.subr.bf16.mxu0 0
    %3328 = vmatpush1.bf16.msra.mxu0 %v1741
    %3329 = vmatprep.subr.bf16.mxu0 0
    %3330 = vmatpush1.bf16.msra.mxu0 %v1744
    %3331 = vmatprep.subr.bf16.mxu0 0
    %3332 = vmatpush1.bf16.msra.mxu0 %v1747
    %3333 = vmatprep.subr.bf16.mxu0 0
    %3334 = vmatpush1.bf16.msra.mxu0 %v1750
    %3335 = vmatprep.subr.bf16.mxu0 0
    %3336 = vmatpush1.bf16.msra.mxu0 0
    %3337 = vmatprep.subr.bf16.mxu0 0
    %3338 = vmatpush1.bf16.msra.mxu0 0
    %3339 = vmatprep.subr.bf16.mxu0 0
    %3340 = vmatpush1.bf16.msra.mxu0 0
    %3341 = vmatprep.subr.bf16.mxu0 0
    %3342 = vmatpush1.bf16.msra.mxu0 0
    %3343 = vmatprep.subr.bf16.mxu0 0
    %3344 = vmatpush1.bf16.msra.mxu0 0
    %3345 = vmatprep.subr.bf16.mxu0 0
    %3346 = vmatpush1.bf16.msra.mxu0 0
    %3347 = vmatprep.subr.bf16.mxu0 0
    %3348 = vmatpush1.bf16.msra.mxu0 0
    %3349 = vmatprep.subr.bf16.mxu0 0
    %3350 = vmatpush1.bf16.msra.mxu0 0
    %3351 = vmatprep.mubr.bf16.mxu0 0
    %3352 = vmatmul.mubr.bf16.gmra.mrb[0].mxu0 %v3115
    %v3353 = vpop.f32.mrb[0].mxu0
    %v3354 = vadd.f32 0.0, %v3353
    %v3355 = vpop.f32.mrb[0].mxu0
    %v3356 = vpop.f32.mrb[0].mxu0
    %v3357 = vpop.f32.mrb[0].mxu0
    %3358 = vdwg.mxu0
    %v3359 = vadd.f32 %v3232, %v3313
    %v3360 = vadd.f32 %v3234, %v3315
    %v3361 = vadd.f32 %v3273, %v3354
    %v3364 = vrot.slane %v3359, 6
    %v3365 = vrot.slane %v3360, 6
    %v3368 = vadd.f32 %v783, %v3364
    %v3369 = vadd.f32 %v785, %v3365
    %v3370 = vxor.u32 %v3368, 2147483648
    %v3371 = vxor.u32 %v3369, 2147483648
    %v3372 = vmul.f32 %v3370, 1.442695
    %v3373 = vpow.pop %v3372
    %v3374 = vmul.f32 %v3371, 1.442695
    %v3375 = vpow.pop %v3374
    %v3376 = vadd.f32 %v3373, 1.0
    %v3377 = vadd.f32 %v3375, 1.0
    %v3378 = vrcp.pop %v3376
    %v3379 = vmul.f32 1.0, %v3378
    %v3380 = vrcp.pop %v3377
    %v3381 = vmul.f32 1.0, %v3380
    %v3382 = vadd.f32 %v3361, %v1436
    %v3384 = vrot.slane %v3382, 6
    %v3386 = vmul.f32 %v3379, %v3384
    %v3387 = vadd.f32 %v1364, %v3386
    %v3388 = vtanh.pop %v3387
    %v3389 = vsub.f32 1.0, %v3381
    %v3390 = vmul.f32 %v3389, %v3388
    %v3392 = vrot.slane %v3110, 6
    %v3394 = vmul.f32 %v3381, %v3392
    %v3395 = vadd.f32 %v3390, %v3394
    %3396 = vst [vmem:[#allocation2 + $0x8] sm:$0xc] %v3395
    %v3397 = vpack.c.bf16 %v3395, %v3395
    %v3398 = vunpack.c.l.bf16 %v3397
    %v3399 = vsub.f32 %v3395, %v3398
    %v3400 = vpack.c.bf16 %v3399, %v3399
    %v3402 = vrot.slane %v3397, 1
    %3404 = vmatprep.subr.bf16.mxu0 %v1519
    %3405 = vmatpush1.bf16.msra.mxu0 %v1518
    %3406 = vmatprep.subr.bf16.mxu0 %v1522
    %3407 = vmatpush1.bf16.msra.mxu0 %v1521
    %3408 = vmatprep.subr.bf16.mxu0 %v1525
    %3409 = vmatpush1.bf16.msra.mxu0 %v1524
    %3410 = vmatprep.subr.bf16.mxu0 %v1528
    %3411 = vmatpush1.bf16.msra.mxu0 %v1527
    %3412 = vmatprep.subr.bf16.mxu0 %v1531
    %3413 = vmatpush1.bf16.msra.mxu0 %v1530
    %3414 = vmatprep.subr.bf16.mxu0 %v1534
    %3415 = vmatpush1.bf16.msra.mxu0 %v1533
    %3416 = vmatprep.subr.bf16.mxu0 %v1537
    %3417 = vmatpush1.bf16.msra.mxu0 %v1536
    %3418 = vmatprep.subr.bf16.mxu0 %v1540
    %3419 = vmatpush1.bf16.msra.mxu0 %v1539
    %3420 = vmatprep.subr.bf16.mxu0 0
    %3421 = vmatpush1.bf16.msra.mxu0 0
    %3422 = vmatprep.subr.bf16.mxu0 0
    %3423 = vmatpush1.bf16.msra.mxu0 0
    %3424 = vmatprep.subr.bf16.mxu0 0
    %3425 = vmatpush1.bf16.msra.mxu0 0
    %3426 = vmatprep.subr.bf16.mxu0 0
    %3427 = vmatpush1.bf16.msra.mxu0 0
    %3428 = vmatprep.subr.bf16.mxu0 0
    %3429 = vmatpush1.bf16.msra.mxu0 0
    %3430 = vmatprep.subr.bf16.mxu0 0
    %3431 = vmatpush1.bf16.msra.mxu0 0
    %3432 = vmatprep.subr.bf16.mxu0 0
    %3433 = vmatpush1.bf16.msra.mxu0 0
    %3434 = vmatprep.subr.bf16.mxu0 0
    %3435 = vmatpush1.bf16.msra.mxu0 0
    %3436 = vmatprep.mubr.bf16.mxu0 0
    %3437 = vmatmul.mubr.bf16.gmra.mrb[0].mxu0 %v3402
    %v3438 = vpop.f32.mrb[0].mxu0
    %v3439 = vadd.f32 0.0, %v3438
    %v3440 = vpop.f32.mrb[0].mxu0
    %v3441 = vadd.f32 0.0, %v3440
    %v3442 = vpop.f32.mrb[0].mxu0
    %v3443 = vpop.f32.mrb[0].mxu0
    %3444 = vdwg.mxu0
    %3445 = vmatprep.subr.bf16.mxu0 0
    %3446 = vmatpush1.bf16.msra.mxu0 %v1520
    %3447 = vmatprep.subr.bf16.mxu0 0
    %3448 = vmatpush1.bf16.msra.mxu0 %v1523
    %3449 = vmatprep.subr.bf16.mxu0 0
    %3450 = vmatpush1.bf16.msra.mxu0 %v1526
    %3451 = vmatprep.subr.bf16.mxu0 0
    %3452 = vmatpush1.bf16.msra.mxu0 %v1529
    %3453 = vmatprep.subr.bf16.mxu0 0
    %3454 = vmatpush1.bf16.msra.mxu0 %v1532
    %3455 = vmatprep.subr.bf16.mxu0 0
    %3456 = vmatpush1.bf16.msra.mxu0 %v1535
    %3457 = vmatprep.subr.bf16.mxu0 0
    %3458 = vmatpush1.bf16.msra.mxu0 %v1538
    %3459 = vmatprep.subr.bf16.mxu0 0
    %3460 = vmatpush1.bf16.msra.mxu0 %v1541
    %3461 = vmatprep.subr.bf16.mxu0 0
    %3462 = vmatpush1.bf16.msra.mxu0 0
    %3463 = vmatprep.subr.bf16.mxu0 0
    %3464 = vmatpush1.bf16.msra.mxu0 0
    %3465 = vmatprep.subr.bf16.mxu0 0
    %3466 = vmatpush1.bf16.msra.mxu0 0
    %3467 = vmatprep.subr.bf16.mxu0 0
    %3468 = vmatpush1.bf16.msra.mxu0 0
    %3469 = vmatprep.subr.bf16.mxu0 0
    %3470 = vmatpush1.bf16.msra.mxu0 0
    %3471 = vmatprep.subr.bf16.mxu0 0
    %3472 = vmatpush1.bf16.msra.mxu0 0
    %3473 = vmatprep.subr.bf16.mxu0 0
    %3474 = vmatpush1.bf16.msra.mxu0 0
    %3475 = vmatprep.subr.bf16.mxu0 0
    %3476 = vmatpush1.bf16.msra.mxu0 0
    %3477 = vmatprep.mubr.bf16.mxu0 0
    %3478 = vmatmul.mubr.bf16.gmra.mrb[0].mxu0 %v3402
    %v3479 = vpop.f32.mrb[0].mxu0
    %v3480 = vadd.f32 0.0, %v3479
    %v3481 = vpop.f32.mrb[0].mxu0
    %v3482 = vpop.f32.mrb[0].mxu0
    %v3483 = vpop.f32.mrb[0].mxu0
    %3484 = vdwg.mxu0
    %3485 = vmatprep.subr.bf16.mxu0 %v1728
    %3486 = vmatpush1.bf16.msra.mxu0 %v1727
    %3487 = vmatprep.subr.bf16.mxu0 %v1731
    %3488 = vmatpush1.bf16.msra.mxu0 %v1730
    %3489 = vmatprep.subr.bf16.mxu0 %v1734
    %3490 = vmatpush1.bf16.msra.mxu0 %v1733
    %3491 = vmatprep.subr.bf16.mxu0 %v1737
    %3492 = vmatpush1.bf16.msra.mxu0 %v1736
    %3493 = vmatprep.subr.bf16.mxu0 %v1740
    %3494 = vmatpush1.bf16.msra.mxu0 %v1739
    %3495 = vmatprep.subr.bf16.mxu0 %v1743
    %3496 = vmatpush1.bf16.msra.mxu0 %v1742
    %3497 = vmatprep.subr.bf16.mxu0 %v1746
    %3498 = vmatpush1.bf16.msra.mxu0 %v1745
    %3499 = vmatprep.subr.bf16.mxu0 %v1749
    %3500 = vmatpush1.bf16.msra.mxu0 %v1748
    %3501 = vmatprep.subr.bf16.mxu0 0
    %3502 = vmatpush1.bf16.msra.mxu0 0
    %3503 = vmatprep.subr.bf16.mxu0 0
    %3504 = vmatpush1.bf16.msra.mxu0 0
    %3505 = vmatprep.subr.bf16.mxu0 0
    %3506 = vmatpush1.bf16.msra.mxu0 0
    %3507 = vmatprep.subr.bf16.mxu0 0
    %3508 = vmatpush1.bf16.msra.mxu0 0
    %3509 = vmatprep.subr.bf16.mxu0 0
    %3510 = vmatpush1.bf16.msra.mxu0 0
    %3511 = vmatprep.subr.bf16.mxu0 0
    %3512 = vmatpush1.bf16.msra.mxu0 0
    %3513 = vmatprep.subr.bf16.mxu0 0
    %3514 = vmatpush1.bf16.msra.mxu0 0
    %3515 = vmatprep.subr.bf16.mxu0 0
    %3516 = vmatpush1.bf16.msra.mxu0 0
    %3517 = vmatprep.mubr.bf16.mxu0 0
    %3518 = vmatmul.mubr.bf16.gmra.mrb[0].mxu0 %v3402
    %v3519 = vpop.f32.mrb[0].mxu0
    %v3520 = vadd.f32 %v3439, %v3519
    %v3521 = vpop.f32.mrb[0].mxu0
    %v3522 = vadd.f32 %v3441, %v3521
    %v3523 = vpop.f32.mrb[0].mxu0
    %v3524 = vpop.f32.mrb[0].mxu0
    %3525 = vdwg.mxu0
    %3526 = vmatprep.subr.bf16.mxu0 0
    %3527 = vmatpush1.bf16.msra.mxu0 %v1729
    %3528 = vmatprep.subr.bf16.mxu0 0
    %3529 = vmatpush1.bf16.msra.mxu0 %v1732
    %3530 = vmatprep.subr.bf16.mxu0 0
    %3531 = vmatpush1.bf16.msra.mxu0 %v1735
    %3532 = vmatprep.subr.bf16.mxu0 0
    %3533 = vmatpush1.bf16.msra.mxu0 %v1738
    %3534 = vmatprep.subr.bf16.mxu0 0
    %3535 = vmatpush1.bf16.msra.mxu0 %v1741
    %3536 = vmatprep.subr.bf16.mxu0 0
    %3537 = vmatpush1.bf16.msra.mxu0 %v1744
    %3538 = vmatprep.subr.bf16.mxu0 0
    %3539 = vmatpush1.bf16.msra.mxu0 %v1747
    %3540 = vmatprep.subr.bf16.mxu0 0
    %3541 = vmatpush1.bf16.msra.mxu0 %v1750
    %3542 = vmatprep.subr.bf16.mxu0 0
    %3543 = vmatpush1.bf16.msra.mxu0 0
    %3544 = vmatprep.subr.bf16.mxu0 0
    %3545 = vmatpush1.bf16.msra.mxu0 0
    %3546 = vmatprep.subr.bf16.mxu0 0
    %3547 = vmatpush1.bf16.msra.mxu0 0
    %3548 = vmatprep.subr.bf16.mxu0 0
    %3549 = vmatpush1.bf16.msra.mxu0 0
    %3550 = vmatprep.subr.bf16.mxu0 0
    %3551 = vmatpush1.bf16.msra.mxu0 0
    %3552 = vmatprep.subr.bf16.mxu0 0
    %3553 = vmatpush1.bf16.msra.mxu0 0
    %3554 = vmatprep.subr.bf16.mxu0 0
    %3555 = vmatpush1.bf16.msra.mxu0 0
    %3556 = vmatprep.subr.bf16.mxu0 0
    %3557 = vmatpush1.bf16.msra.mxu0 0
    %3558 = vmatprep.mubr.bf16.mxu0 0
    %3559 = vmatmul.mubr.bf16.gmra.mrb[0].mxu0 %v3402
    %v3560 = vpop.f32.mrb[0].mxu0
    %v3561 = vadd.f32 %v3480, %v3560
    %v3562 = vpop.f32.mrb[0].mxu0
    %v3563 = vpop.f32.mrb[0].mxu0
    %v3564 = vpop.f32.mrb[0].mxu0
    %3565 = vdwg.mxu0
    %v3567 = vrot.slane %v3400, 1
    %3569 = vmatprep.subr.bf16.mxu0 %v1728
    %3570 = vmatpush1.bf16.msra.mxu0 %v1727
    %3571 = vmatprep.subr.bf16.mxu0 %v1731
    %3572 = vmatpush1.bf16.msra.mxu0 %v1730
    %3573 = vmatprep.subr.bf16.mxu0 %v1734
    %3574 = vmatpush1.bf16.msra.mxu0 %v1733
    %3575 = vmatprep.subr.bf16.mxu0 %v1737
    %3576 = vmatpush1.bf16.msra.mxu0 %v1736
    %3577 = vmatprep.subr.bf16.mxu0 %v1740
    %3578 = vmatpush1.bf16.msra.mxu0 %v1739
    %3579 = vmatprep.subr.bf16.mxu0 %v1743
    %3580 = vmatpush1.bf16.msra.mxu0 %v1742
    %3581 = vmatprep.subr.bf16.mxu0 %v1746
    %3582 = vmatpush1.bf16.msra.mxu0 %v1745
    %3583 = vmatprep.subr.bf16.mxu0 %v1749
    %3584 = vmatpush1.bf16.msra.mxu0 %v1748
    %3585 = vmatprep.subr.bf16.mxu0 0
    %3586 = vmatpush1.bf16.msra.mxu0 0
    %3587 = vmatprep.subr.bf16.mxu0 0
    %3588 = vmatpush1.bf16.msra.mxu0 0
    %3589 = vmatprep.subr.bf16.mxu0 0
    %3590 = vmatpush1.bf16.msra.mxu0 0
    %3591 = vmatprep.subr.bf16.mxu0 0
    %3592 = vmatpush1.bf16.msra.mxu0 0
    %3593 = vmatprep.subr.bf16.mxu0 0
    %3594 = vmatpush1.bf16.msra.mxu0 0
    %3595 = vmatprep.subr.bf16.mxu0 0
    %3596 = vmatpush1.bf16.msra.mxu0 0
    %3597 = vmatprep.subr.bf16.mxu0 0
    %3598 = vmatpush1.bf16.msra.mxu0 0
    %3599 = vmatprep.subr.bf16.mxu0 0
    %3600 = vmatpush1.bf16.msra.mxu0 0
    %3601 = vmatprep.mubr.bf16.mxu0 0
    %3602 = vmatmul.mubr.bf16.gmra.mrb[0].mxu0 %v3567
    %v3603 = vpop.f32.mrb[0].mxu0
    %v3604 = vadd.f32 0.0, %v3603
    %v3605 = vpop.f32.mrb[0].mxu0
    %v3606 = vadd.f32 0.0, %v3605
    %v3607 = vpop.f32.mrb[0].mxu0
    %v3608 = vpop.f32.mrb[0].mxu0
    %3609 = vdwg.mxu0
    %3610 = vmatprep.subr.bf16.mxu0 0
    %3611 = vmatpush1.bf16.msra.mxu0 %v1729
    %3612 = vmatprep.subr.bf16.mxu0 0
    %3613 = vmatpush1.bf16.msra.mxu0 %v1732
    %3614 = vmatprep.subr.bf16.mxu0 0
    %3615 = vmatpush1.bf16.msra.mxu0 %v1735
    %3616 = vmatprep.subr.bf16.mxu0 0
    %3617 = vmatpush1.bf16.msra.mxu0 %v1738
    %3618 = vmatprep.subr.bf16.mxu0 0
    %3619 = vmatpush1.bf16.msra.mxu0 %v1741
    %3620 = vmatprep.subr.bf16.mxu0 0
    %3621 = vmatpush1.bf16.msra.mxu0 %v1744
    %3622 = vmatprep.subr.bf16.mxu0 0
    %3623 = vmatpush1.bf16.msra.mxu0 %v1747
    %3624 = vmatprep.subr.bf16.mxu0 0
    %3625 = vmatpush1.bf16.msra.mxu0 %v1750
    %3626 = vmatprep.subr.bf16.mxu0 0
    %3627 = vmatpush1.bf16.msra.mxu0 0
    %3628 = vmatprep.subr.bf16.mxu0 0
    %3629 = vmatpush1.bf16.msra.mxu0 0
    %3630 = vmatprep.subr.bf16.mxu0 0
    %3631 = vmatpush1.bf16.msra.mxu0 0
    %3632 = vmatprep.subr.bf16.mxu0 0
    %3633 = vmatpush1.bf16.msra.mxu0 0
    %3634 = vmatprep.subr.bf16.mxu0 0
    %3635 = vmatpush1.bf16.msra.mxu0 0
    %3636 = vmatprep.subr.bf16.mxu0 0
    %3637 = vmatpush1.bf16.msra.mxu0 0
    %3638 = vmatprep.subr.bf16.mxu0 0
    %3639 = vmatpush1.bf16.msra.mxu0 0
    %3640 = vmatprep.subr.bf16.mxu0 0
    %3641 = vmatpush1.bf16.msra.mxu0 0
    %3642 = vmatprep.mubr.bf16.mxu0 0
    %3643 = vmatmul.mubr.bf16.gmra.mrb[0].mxu0 %v3567
    %v3644 = vpop.f32.mrb[0].mxu0
    %v3645 = vadd.f32 0.0, %v3644
    %v3646 = vpop.f32.mrb[0].mxu0
    %v3647 = vpop.f32.mrb[0].mxu0
    %v3648 = vpop.f32.mrb[0].mxu0
    %3649 = vdwg.mxu0
    %v3650 = vadd.f32 %v3520, %v3604
    %v3651 = vadd.f32 %v3522, %v3606
    %v3652 = vadd.f32 %v3561, %v3645
    %v3655 = vrot.slane %v3650, 4
    %v3656 = vrot.slane %v3651, 4
    %v3659 = vadd.f32 %v783, %v3655
    %v3660 = vadd.f32 %v785, %v3656
    %v3661 = vxor.u32 %v3659, 2147483648
    %v3662 = vxor.u32 %v3660, 2147483648
    %v3663 = vmul.f32 %v3661, 1.442695
    %v3664 = vpow.pop %v3663
    %v3665 = vmul.f32 %v3662, 1.442695
    %v3666 = vpow.pop %v3665
    %v3667 = vadd.f32 %v3664, 1.0
    %v3668 = vadd.f32 %v3666, 1.0
    %v3669 = vrcp.pop %v3667
    %v3670 = vmul.f32 1.0, %v3669
    %v3671 = vrcp.pop %v3668
    %v3672 = vmul.f32 1.0, %v3671
    %v3673 = vadd.f32 %v3652, %v1436
    %v3675 = vrot.slane %v3673, 4
    %v3677 = vmul.f32 %v3670, %v3675
    %v3678 = vadd.f32 %v1364, %v3677
    %v3679 = vtanh.pop %v3678
    %v3680 = vsub.f32 1.0, %v3672
    %v3681 = vmul.f32 %v3680, %v3679
    %v3683 = vrot.slane %v3395, 6
    %v3685 = vmul.f32 %v3672, %v3683
    %v3686 = vadd.f32 %v3681, %v3685
    %3687 = vst [vmem:[#allocation2 + $0x8] sm:$0x30] %v3686
    %v3688 = vpack.c.bf16 %v3686, %v3686
    %v3689 = vunpack.c.l.bf16 %v3688
    %v3690 = vsub.f32 %v3686, %v3689
    %v3691 = vpack.c.bf16 %v3690, %v3690
    %v3693 = vrot.slane %v3688, 2
    %3695 = vmatprep.subr.bf16.mxu0 %v1519
    %3696 = vmatpush1.bf16.msra.mxu0 %v1518
    %3697 = vmatprep.subr.bf16.mxu0 %v1522
    %3698 = vmatpush1.bf16.msra.mxu0 %v1521
    %3699 = vmatprep.subr.bf16.mxu0 %v1525
    %3700 = vmatpush1.bf16.msra.mxu0 %v1524
    %3701 = vmatprep.subr.bf16.mxu0 %v1528
    %3702 = vmatpush1.bf16.msra.mxu0 %v1527
    %3703 = vmatprep.subr.bf16.mxu0 %v1531
    %3704 = vmatpush1.bf16.msra.mxu0 %v1530
    %3705 = vmatprep.subr.bf16.mxu0 %v1534
    %3706 = vmatpush1.bf16.msra.mxu0 %v1533
    %3707 = vmatprep.subr.bf16.mxu0 %v1537
    %3708 = vmatpush1.bf16.msra.mxu0 %v1536
    %3709 = vmatprep.subr.bf16.mxu0 %v1540
    %3710 = vmatpush1.bf16.msra.mxu0 %v1539
    %3711 = vmatprep.subr.bf16.mxu0 0
    %3712 = vmatpush1.bf16.msra.mxu0 0
    %3713 = vmatprep.subr.bf16.mxu0 0
    %3714 = vmatpush1.bf16.msra.mxu0 0
    %3715 = vmatprep.subr.bf16.mxu0 0
    %3716 = vmatpush1.bf16.msra.mxu0 0
    %3717 = vmatprep.subr.bf16.mxu0 0
    %3718 = vmatpush1.bf16.msra.mxu0 0
    %3719 = vmatprep.subr.bf16.mxu0 0
    %3720 = vmatpush1.bf16.msra.mxu0 0
    %3721 = vmatprep.subr.bf16.mxu0 0
    %3722 = vmatpush1.bf16.msra.mxu0 0
    %3723 = vmatprep.subr.bf16.mxu0 0
    %3724 = vmatpush1.bf16.msra.mxu0 0
    %3725 = vmatprep.subr.bf16.mxu0 0
    %3726 = vmatpush1.bf16.msra.mxu0 0
    %3727 = vmatprep.mubr.bf16.mxu0 0
    %3728 = vmatmul.mubr.bf16.gmra.mrb[0].mxu0 %v3693
    %v3729 = vpop.f32.mrb[0].mxu0
    %v3730 = vadd.f32 0.0, %v3729
    %v3731 = vpop.f32.mrb[0].mxu0
    %v3732 = vadd.f32 0.0, %v3731
    %v3733 = vpop.f32.mrb[0].mxu0
    %v3734 = vpop.f32.mrb[0].mxu0
    %3735 = vdwg.mxu0
    %3736 = vmatprep.subr.bf16.mxu0 0
    %3737 = vmatpush1.bf16.msra.mxu0 %v1520
    %3738 = vmatprep.subr.bf16.mxu0 0
    %3739 = vmatpush1.bf16.msra.mxu0 %v1523
    %3740 = vmatprep.subr.bf16.mxu0 0
    %3741 = vmatpush1.bf16.msra.mxu0 %v1526
    %3742 = vmatprep.subr.bf16.mxu0 0
    %3743 = vmatpush1.bf16.msra.mxu0 %v1529
    %3744 = vmatprep.subr.bf16.mxu0 0
    %3745 = vmatpush1.bf16.msra.mxu0 %v1532
    %3746 = vmatprep.subr.bf16.mxu0 0
    %3747 = vmatpush1.bf16.msra.mxu0 %v1535
    %3748 = vmatprep.subr.bf16.mxu0 0
    %3749 = vmatpush1.bf16.msra.mxu0 %v1538
    %3750 = vmatprep.subr.bf16.mxu0 0
    %3751 = vmatpush1.bf16.msra.mxu0 %v1541
    %3752 = vmatprep.subr.bf16.mxu0 0
    %3753 = vmatpush1.bf16.msra.mxu0 0
    %3754 = vmatprep.subr.bf16.mxu0 0
    %3755 = vmatpush1.bf16.msra.mxu0 0
    %3756 = vmatprep.subr.bf16.mxu0 0
    %3757 = vmatpush1.bf16.msra.mxu0 0
    %3758 = vmatprep.subr.bf16.mxu0 0
    %3759 = vmatpush1.bf16.msra.mxu0 0
    %3760 = vmatprep.subr.bf16.mxu0 0
    %3761 = vmatpush1.bf16.msra.mxu0 0
    %3762 = vmatprep.subr.bf16.mxu0 0
    %3763 = vmatpush1.bf16.msra.mxu0 0
    %3764 = vmatprep.subr.bf16.mxu0 0
    %3765 = vmatpush1.bf16.msra.mxu0 0
    %3766 = vmatprep.subr.bf16.mxu0 0
    %3767 = vmatpush1.bf16.msra.mxu0 0
    %3768 = vmatprep.mubr.bf16.mxu0 0
    %3769 = vmatmul.mubr.bf16.gmra.mrb[0].mxu0 %v3693
    %v3770 = vpop.f32.mrb[0].mxu0
    %v3771 = vadd.f32 0.0, %v3770
    %v3772 = vpop.f32.mrb[0].mxu0
    %v3773 = vpop.f32.mrb[0].mxu0
    %v3774 = vpop.f32.mrb[0].mxu0
    %3775 = vdwg.mxu0
    %3776 = vmatprep.subr.bf16.mxu0 %v1728
    %3777 = vmatpush1.bf16.msra.mxu0 %v1727
    %3778 = vmatprep.subr.bf16.mxu0 %v1731
    %3779 = vmatpush1.bf16.msra.mxu0 %v1730
    %3780 = vmatprep.subr.bf16.mxu0 %v1734
    %3781 = vmatpush1.bf16.msra.mxu0 %v1733
    %3782 = vmatprep.subr.bf16.mxu0 %v1737
    %3783 = vmatpush1.bf16.msra.mxu0 %v1736
    %3784 = vmatprep.subr.bf16.mxu0 %v1740
    %3785 = vmatpush1.bf16.msra.mxu0 %v1739
    %3786 = vmatprep.subr.bf16.mxu0 %v1743
    %3787 = vmatpush1.bf16.msra.mxu0 %v1742
    %3788 = vmatprep.subr.bf16.mxu0 %v1746
    %3789 = vmatpush1.bf16.msra.mxu0 %v1745
    %3790 = vmatprep.subr.bf16.mxu0 %v1749
    %3791 = vmatpush1.bf16.msra.mxu0 %v1748
    %3792 = vmatprep.subr.bf16.mxu0 0
    %3793 = vmatpush1.bf16.msra.mxu0 0
    %3794 = vmatprep.subr.bf16.mxu0 0
    %3795 = vmatpush1.bf16.msra.mxu0 0
    %3796 = vmatprep.subr.bf16.mxu0 0
    %3797 = vmatpush1.bf16.msra.mxu0 0
    %3798 = vmatprep.subr.bf16.mxu0 0
    %3799 = vmatpush1.bf16.msra.mxu0 0
    %3800 = vmatprep.subr.bf16.mxu0 0
    %3801 = vmatpush1.bf16.msra.mxu0 0
    %3802 = vmatprep.subr.bf16.mxu0 0
    %3803 = vmatpush1.bf16.msra.mxu0 0
    %3804 = vmatprep.subr.bf16.mxu0 0
    %3805 = vmatpush1.bf16.msra.mxu0 0
    %3806 = vmatprep.subr.bf16.mxu0 0
    %3807 = vmatpush1.bf16.msra.mxu0 0
    %3808 = vmatprep.mubr.bf16.mxu0 0
    %3809 = vmatmul.mubr.bf16.gmra.mrb[0].mxu0 %v3693
    %v3810 = vpop.f32.mrb[0].mxu0
    %v3811 = vadd.f32 %v3730, %v3810
    %v3812 = vpop.f32.mrb[0].mxu0
    %v3813 = vadd.f32 %v3732, %v3812
    %v3814 = vpop.f32.mrb[0].mxu0
    %v3815 = vpop.f32.mrb[0].mxu0
    %3816 = vdwg.mxu0
    %3817 = vmatprep.subr.bf16.mxu0 0
    %3818 = vmatpush1.bf16.msra.mxu0 %v1729
    %3819 = vmatprep.subr.bf16.mxu0 0
    %3820 = vmatpush1.bf16.msra.mxu0 %v1732
    %3821 = vmatprep.subr.bf16.mxu0 0
    %3822 = vmatpush1.bf16.msra.mxu0 %v1735
    %3823 = vmatprep.subr.bf16.mxu0 0
    %3824 = vmatpush1.bf16.msra.mxu0 %v1738
    %3825 = vmatprep.subr.bf16.mxu0 0
    %3826 = vmatpush1.bf16.msra.mxu0 %v1741
    %3827 = vmatprep.subr.bf16.mxu0 0
    %3828 = vmatpush1.bf16.msra.mxu0 %v1744
    %3829 = vmatprep.subr.bf16.mxu0 0
    %3830 = vmatpush1.bf16.msra.mxu0 %v1747
    %3831 = vmatprep.subr.bf16.mxu0 0
    %3832 = vmatpush1.bf16.msra.mxu0 %v1750
    %3833 = vmatprep.subr.bf16.mxu0 0
    %3834 = vmatpush1.bf16.msra.mxu0 0
    %3835 = vmatprep.subr.bf16.mxu0 0
    %3836 = vmatpush1.bf16.msra.mxu0 0
    %3837 = vmatprep.subr.bf16.mxu0 0
    %3838 = vmatpush1.bf16.msra.mxu0 0
    %3839 = vmatprep.subr.bf16.mxu0 0
    %3840 = vmatpush1.bf16.msra.mxu0 0
    %3841 = vmatprep.subr.bf16.mxu0 0
    %3842 = vmatpush1.bf16.msra.mxu0 0
    %3843 = vmatprep.subr.bf16.mxu0 0
    %3844 = vmatpush1.bf16.msra.mxu0 0
    %3845 = vmatprep.subr.bf16.mxu0 0
    %3846 = vmatpush1.bf16.msra.mxu0 0
    %3847 = vmatprep.subr.bf16.mxu0 0
    %3848 = vmatpush1.bf16.msra.mxu0 0
    %3849 = vmatprep.mubr.bf16.mxu0 0
    %3850 = vmatmul.mubr.bf16.gmra.mrb[0].mxu0 %v3693
    %v3851 = vpop.f32.mrb[0].mxu0
    %v3852 = vadd.f32 %v3771, %v3851
    %v3853 = vpop.f32.mrb[0].mxu0
    %v3854 = vpop.f32.mrb[0].mxu0
    %v3855 = vpop.f32.mrb[0].mxu0
    %3856 = vdwg.mxu0
    %v3858 = vrot.slane %v3691, 2
    %3860 = vmatprep.subr.bf16.mxu0 %v1728
    %3861 = vmatpush1.bf16.msra.mxu0 %v1727
    %3862 = vmatprep.subr.bf16.mxu0 %v1731
    %3863 = vmatpush1.bf16.msra.mxu0 %v1730
    %3864 = vmatprep.subr.bf16.mxu0 %v1734
    %3865 = vmatpush1.bf16.msra.mxu0 %v1733
    %3866 = vmatprep.subr.bf16.mxu0 %v1737
    %3867 = vmatpush1.bf16.msra.mxu0 %v1736
    %3868 = vmatprep.subr.bf16.mxu0 %v1740
    %3869 = vmatpush1.bf16.msra.mxu0 %v1739
    %3870 = vmatprep.subr.bf16.mxu0 %v1743
    %3871 = vmatpush1.bf16.msra.mxu0 %v1742
    %3872 = vmatprep.subr.bf16.mxu0 %v1746
    %3873 = vmatpush1.bf16.msra.mxu0 %v1745
    %3874 = vmatprep.subr.bf16.mxu0 %v1749
    %3875 = vmatpush1.bf16.msra.mxu0 %v1748
    %3876 = vmatprep.subr.bf16.mxu0 0
    %3877 = vmatpush1.bf16.msra.mxu0 0
    %3878 = vmatprep.subr.bf16.mxu0 0
    %3879 = vmatpush1.bf16.msra.mxu0 0
    %3880 = vmatprep.subr.bf16.mxu0 0
    %3881 = vmatpush1.bf16.msra.mxu0 0
    %3882 = vmatprep.subr.bf16.mxu0 0
    %3883 = vmatpush1.bf16.msra.mxu0 0
    %3884 = vmatprep.subr.bf16.mxu0 0
    %3885 = vmatpush1.bf16.msra.mxu0 0
    %3886 = vmatprep.subr.bf16.mxu0 0
    %3887 = vmatpush1.bf16.msra.mxu0 0
    %3888 = vmatprep.subr.bf16.mxu0 0
    %3889 = vmatpush1.bf16.msra.mxu0 0
    %3890 = vmatprep.subr.bf16.mxu0 0
    %3891 = vmatpush1.bf16.msra.mxu0 0
    %3892 = vmatprep.mubr.bf16.mxu0 0
    %3893 = vmatmul.mubr.bf16.gmra.mrb[0].mxu0 %v3858
    %v3894 = vpop.f32.mrb[0].mxu0
    %v3895 = vadd.f32 0.0, %v3894
    %v3896 = vpop.f32.mrb[0].mxu0
    %v3897 = vadd.f32 0.0, %v3896
    %v3898 = vpop.f32.mrb[0].mxu0
    %v3899 = vpop.f32.mrb[0].mxu0
    %3900 = vdwg.mxu0
    %3901 = vmatprep.subr.bf16.mxu0 0
    %3902 = vmatpush1.bf16.msra.mxu0 %v1729
    %3903 = vmatprep.subr.bf16.mxu0 0
    %3904 = vmatpush1.bf16.msra.mxu0 %v1732
    %3905 = vmatprep.subr.bf16.mxu0 0
    %3906 = vmatpush1.bf16.msra.mxu0 %v1735
    %3907 = vmatprep.subr.bf16.mxu0 0
    %3908 = vmatpush1.bf16.msra.mxu0 %v1738
    %3909 = vmatprep.subr.bf16.mxu0 0
    %3910 = vmatpush1.bf16.msra.mxu0 %v1741
    %3911 = vmatprep.subr.bf16.mxu0 0
    %3912 = vmatpush1.bf16.msra.mxu0 %v1744
    %3913 = vmatprep.subr.bf16.mxu0 0
    %3914 = vmatpush1.bf16.msra.mxu0 %v1747
    %3915 = vmatprep.subr.bf16.mxu0 0
    %3916 = vmatpush1.bf16.msra.mxu0 %v1750
    %3917 = vmatprep.subr.bf16.mxu0 0
    %3918 = vmatpush1.bf16.msra.mxu0 0
    %3919 = vmatprep.subr.bf16.mxu0 0
    %3920 = vmatpush1.bf16.msra.mxu0 0
    %3921 = vmatprep.subr.bf16.mxu0 0
    %3922 = vmatpush1.bf16.msra.mxu0 0
    %3923 = vmatprep.subr.bf16.mxu0 0
    %3924 = vmatpush1.bf16.msra.mxu0 0
    %3925 = vmatprep.subr.bf16.mxu0 0
    %3926 = vmatpush1.bf16.msra.mxu0 0
    %3927 = vmatprep.subr.bf16.mxu0 0
    %3928 = vmatpush1.bf16.msra.mxu0 0
    %3929 = vmatprep.subr.bf16.mxu0 0
    %3930 = vmatpush1.bf16.msra.mxu0 0
    %3931 = vmatprep.subr.bf16.mxu0 0
    %3932 = vmatpush1.bf16.msra.mxu0 0
    %3933 = vmatprep.mubr.bf16.mxu0 0
    %3934 = vmatmul.mubr.bf16.gmra.mrb[0].mxu0 %v3858
    %v3935 = vpop.f32.mrb[0].mxu0
    %v3936 = vadd.f32 0.0, %v3935
    %v3937 = vpop.f32.mrb[0].mxu0
    %v3938 = vpop.f32.mrb[0].mxu0
    %v3939 = vpop.f32.mrb[0].mxu0
    %3940 = vdwg.mxu0
    %v3941 = vadd.f32 %v3811, %v3895
    %v3942 = vadd.f32 %v3813, %v3897
    %v3943 = vadd.f32 %v3852, %v3936
    %v3946 = vrot.slane %v3941, 2
    %v3947 = vrot.slane %v3942, 2
    %v3950 = vadd.f32 %v783, %v3946
    %v3951 = vadd.f32 %v785, %v3947
    %v3952 = vxor.u32 %v3950, 2147483648
    %v3953 = vxor.u32 %v3951, 2147483648
    %v3954 = vmul.f32 %v3952, 1.442695
    %v3955 = vpow.pop %v3954
    %v3956 = vmul.f32 %v3953, 1.442695
    %v3957 = vpow.pop %v3956
    %v3958 = vadd.f32 %v3955, 1.0
    %v3959 = vadd.f32 %v3957, 1.0
    %v3960 = vrcp.pop %v3958
    %v3961 = vmul.f32 1.0, %v3960
    %v3962 = vrcp.pop %v3959
    %v3963 = vmul.f32 1.0, %v3962
    %v3964 = vadd.f32 %v3943, %v1436
    %v3966 = vrot.slane %v3964, 2
    %v3968 = vmul.f32 %v3961, %v3966
    %v3969 = vadd.f32 %v1364, %v3968
    %v3970 = vtanh.pop %v3969
    %v3971 = vsub.f32 1.0, %v3963
    %v3972 = vmul.f32 %v3971, %v3970
    %v3974 = vrot.slane %v3686, 6
    %v3976 = vmul.f32 %v3963, %v3974
    %v3977 = vadd.f32 %v3972, %v3976
    %3978 = vst [vmem:[#allocation2 + $0x8] sm:$0xc0] %v3977
    %v3979 = vld [vmem:[#allocation2] sm:$0xff]
    %v3980 = vld [vmem:[#allocation2 + $0x8] sm:$0xff]
    %v3981 = vld [vmem:[%s6] sm:$0x7]
    %3984 = vrot.lane.b32.xlu0 %v3979, 32
    %v3985 = vpop.permute.xlu0 %3984
    %3986 = vrot.lane.b32.xlu0 %v3980, 32
    %v3987 = vpop.permute.xlu0 %3986
    %v3990 = vsub.f32 %v3979, %v3985
    %v3991 = vsub.f32 %v3980, %v3987
    %3992 = vrot.lane.b32.xlu0 %v3979, 96
    %v3993 = vpop.permute.xlu0 %3992
    %3994 = vrot.lane.b32.xlu0 %v3980, 96
    %v3995 = vpop.permute.xlu0 %3994
    %v3998 = vadd.f32 %v3979, %v3993
    %v3999 = vadd.f32 %v3980, %v3995
    %vm4000 = vcmask 261120
    %v4001 = vsel %vm4000, %v3990, 0.0
    %v4002 = vsel %vm4000, %v3991, 0.0
    %v4003 = vadd.f32 %v4001, %v4002
    %v4004 = vrot.slane %v4003, 4
    %v4005 = vadd.f32 %v4003, %v4004
    %v4006 = vrot.slane %v4005, 2
    %v4007 = vadd.f32 %v4005, %v4006
    %v4008 = vrot.slane %v4007, 1
    %v4009 = vadd.f32 %v4007, %v4008
    %v4010 = vmul.f32 %v4009, 0.0625
    %v4011 = vmul.f32 %v3990, %v3990
    %v4012 = vmul.f32 %v3991, %v3991
    %v4013 = vsel %vm4000, %v4011, 0.0
    %v4014 = vsel %vm4000, %v4012, 0.0
    %v4015 = vadd.f32 %v4013, %v4014
    %v4016 = vrot.slane %v4015, 4
    %v4017 = vadd.f32 %v4015, %v4016
    %v4018 = vrot.slane %v4017, 2
    %v4019 = vadd.f32 %v4017, %v4018
    %v4020 = vrot.slane %v4019, 1
    %v4021 = vadd.f32 %v4019, %v4020
    %v4022 = vmul.f32 %v4021, 0.0625
    %v4023 = vmul.f32 %v4010, %v4010
    %v4024 = vsub.f32 %v4022, %v4023
    %v4025 = vadd.f32 %v4024, 1e-05
    %v4026 = vrsqrt.pop %v4025
    %v4027 = vmul.f32 %v3981, %v4026
    %v4028 = vmul.f32 %v4010, %v4027
    %v4030 = vrot.slane %v4028, 7
    %v4032 = vsub.f32 %v3981, %v4030
    %v4033 = vlaneseq
    %v4034 = vshrl.u32 %v4033, 7
    %v4035 = vsub.s32 0, %v4034
    %v4036 = vrot.slane %v4027, %v4035
    %v4037 = vmul.f32 %v3990, %v4036
    %v4038 = vmul.f32 %v3991, %v4036
    %v4039 = vlaneseq
    %v4040 = vshrl.u32 %v4039, 7
    %v4041 = vsub.s32 1, %v4040
    %v4042 = vrot.slane %v4032, %v4041
    %v4043 = vadd.f32 %v4037, %v4042
    %v4044 = vadd.f32 %v4038, %v4042
    %vm4045 = vcmp.ge.f32.partialorder %v4043, 0.0
    %vm4046 = vcmp.ge.f32.partialorder %v4044, 0.0
    %v4047 = vlaneseq
    %v4048 = vshrl.u32 %v4047, 7
    %v4049 = vsub.s32 2, %v4048
    %v4050 = vrot.slane %v3981, %v4049
    %v4051 = vmul.f32 %v4050, %v4043
    %v4052 = vmul.f32 %v4050, %v4044
    %v4053 = vsel %vm4045, %v4043, %v4051
    %v4054 = vsel %vm4046, %v4044, %v4052
    %4055 = vst.msk [vmem:[%s7] sm:$0xff] %vm4000, %v4053
    %4056 = vst.msk [vmem:[%s7 + $0x8] sm:$0xff] %vm4000, %v4054
    %vm4057 = vcmask 523520
    %v4058 = vsel %vm4057, %v3998, 0.0
    %v4059 = vsel %vm4057, %v3999, 0.0
    %v4060 = vadd.f32 %v4058, %v4059
    %v4061 = vrot.slane %v4060, 4
    %v4062 = vadd.f32 %v4060, %v4061
    %v4063 = vrot.slane %v4062, 2
    %v4064 = vadd.f32 %v4062, %v4063
    %v4065 = vrot.slane %v4064, 1
    %v4066 = vadd.f32 %v4064, %v4065
    %v4067 = vmul.f32 %v4066, 0.0625
    %v4068 = vmul.f32 %v3998, %v3998
    %v4069 = vmul.f32 %v3999, %v3999
    %v4070 = vsel %vm4057, %v4068, 0.0
    %v4071 = vsel %vm4057, %v4069, 0.0
    %v4072 = vadd.f32 %v4070, %v4071
    %v4073 = vrot.slane %v4072, 4
    %v4074 = vadd.f32 %v4072, %v4073
    %v4075 = vrot.slane %v4074, 2
    %v4076 = vadd.f32 %v4074, %v4075
    %v4077 = vrot.slane %v4076, 1
    %v4078 = vadd.f32 %v4076, %v4077
    %v4079 = vmul.f32 %v4078, 0.0625
    %v4080 = vmul.f32 %v4067, %v4067
    %v4081 = vsub.f32 %v4079, %v4080
    %v4082 = vadd.f32 %v4081, 1e-05
    %v4083 = vrsqrt.pop %v4082
    %v4084 = vmul.f32 %v3981, %v4083
    %v4085 = vmul.f32 %v4067, %v4084
    %v4087 = vrot.slane %v4085, 7
    %v4089 = vsub.f32 %v3981, %v4087
    %v4090 = vlaneseq
    %v4091 = vshrl.u32 %v4090, 7
    %v4092 = vsub.s32 0, %v4091
    %v4093 = vrot.slane %v4084, %v4092
    %v4094 = vmul.f32 %v3998, %v4093
    %v4095 = vmul.f32 %v3999, %v4093
    %v4096 = vlaneseq
    %v4097 = vshrl.u32 %v4096, 7
    %v4098 = vsub.s32 1, %v4097
    %v4099 = vrot.slane %v4089, %v4098
    %v4100 = vadd.f32 %v4094, %v4099
    %v4101 = vadd.f32 %v4095, %v4099
    %vm4102 = vcmp.ge.f32.partialorder %v4100, 0.0
    %vm4103 = vcmp.ge.f32.partialorder %v4101, 0.0
    %v4104 = vmul.f32 %v4050, %v4100
    %v4105 = vmul.f32 %v4050, %v4101
    %v4106 = vsel %vm4102, %v4100, %v4104
    %v4107 = vsel %vm4103, %v4101, %v4105
    %4108 = vst.msk [vmem:[%s7] sm:$0xff] %vm4057, %v4106
    %4109 = vst.msk [vmem:[%s7 + $0x8] sm:$0xff] %vm4057, %v4107
    // Predicated region
    $region34: #{crnn_forward.1} parent=1 // pred_check
      _
    $region35: #{crnn_forward.1} parent=1 // pred_check_branch
      %4111 = sbr.rel (0) target = $region37
    $region36: #{crnn_forward.1} parent=1 // pred_region
      _
    $region37: #{crnn_forward.1} parent=1 // pred_fallthru
      _
    // Predicated region
    $region38: #{crnn_forward.1} parent=1 // pred_check
      _
    $region39: #{crnn_forward.1} parent=1 // pred_check_branch
      %4113 = sbr.rel (0) target = $region41
    $region40: #{crnn_forward.1} parent=1 // pred_region
      _
    $region41: #{crnn_forward.1} parent=1 // pred_fallthru
      _
    %4114 = vsyncpa [#allocation4], 1

</llo_original>
